<compile_context>
chip_gen: v5e
topology: v5e:2x2
jax: 0.10.0
libtpu: 0.0.40
codegen_flags: <defaults>
</compile_context>

<pallas_src>
import math

import numpy as np
import jax
import jax.numpy as jnp
from jax.experimental import pallas as pl
from jax.experimental.pallas import tpu as pltpu

# ----------------------------- configuration --------------------------------
D_MODEL = 32
N_HEADS = 4
HEAD_DIM = D_MODEL // N_HEADS
D_FFN = 64
N_LEVELS = 2
N_POINTS = 2
SPATIAL_SHAPES = ((8, 8), (4, 4))                 # (H, W) per level
LEVEL_START = (0, 64)
LEN_IN = sum(h * w for h, w in SPATIAL_SHAPES)    # 80
LEN_PAD = 128                                     # lane-padded memory length
B = 2
LQ = 8
EPS = 1e-5
HLP = N_HEADS * N_LEVELS * N_POINTS               # 16
LP = N_LEVELS * N_POINTS                          # 4


def _layer_norm(x, gamma, beta):
    mu = jnp.mean(x, axis=-1, keepdims=True)
    var = jnp.mean((x - mu) ** 2, axis=-1, keepdims=True)
    return (x - mu) * jax.lax.rsqrt(var + EPS) * gamma + beta


# ------------------------- trace-time constant tables -------------------------
def _build_constant_tables():
    # E expands the (LQ, 2*L) reference points to all 2*HLP sampling columns,
    # already scaled by the level width/height (xp = ref*W + off - 0.5).
    E = np.zeros((2 * N_LEVELS, 2 * HLP), np.float32)
    for h in range(N_HEADS):
        for l, (Hl, Wl) in enumerate(SPATIAL_SHAPES):
            for p in range(N_POINTS):
                base = ((h * N_LEVELS + l) * N_POINTS + p) * 2
                E[2 * l + 0, base + 0] = float(Wl)   # x column
                E[2 * l + 1, base + 1] = float(Hl)   # y column
    # S: block-ones matrix used to broadcast the per-head softmax denominator.
    S = np.zeros((HLP, HLP), np.float32)
    for h in range(N_HEADS):
        S[h * LP:(h + 1) * LP, h * LP:(h + 1) * LP] = 1.0
    # Per-level lane coordinate tables (x / y of each flattened memory slot);
    # lanes outside the level (and the pad lanes) get a large sentinel so the
    # triangle kernel evaluates to exactly 0 there.
    MX = np.full((N_LEVELS, LEN_PAD), -1e4, np.float32)
    MY = np.full((N_LEVELS, LEN_PAD), -1e4, np.float32)
    for l, (Hl, Wl) in enumerate(SPATIAL_SHAPES):
        st = LEVEL_START[l]
        for yy in range(Hl):
            for xx in range(Wl):
                MX[l, st + yy * Wl + xx] = float(xx)
                MY[l, st + yy * Wl + xx] = float(yy)
    return jnp.asarray(E), jnp.asarray(S), jnp.asarray(MX), jnp.asarray(MY)


_EMAT_NP, _SMAT_NP, _MX_NP, _MY_NP = _build_constant_tables()


# ------------------------------ fused Pallas kernel ---------------------------
def _fused_layer_kernel(
    # data (per-batch blocks)
    tgt_ref, pos_ref, src_ref, keep_ref, refp_ref,
    # constant tables
    emat_ref, smat_ref, mx_ref, my_ref,
    # self-attention params
    wqk_ref, bqk_ref, wv_sa_ref, bv_sa_ref, wo_sa_ref, bo_sa_ref, g2_ref, b2_ref,
    # deformable cross-attention params
    woffaw_ref, boffaw_ref, wv_ca_ref, bv_ca_ref, wo_ca_ref, bo_ca_ref, g1_ref, b1_ref,
    # FFN params
    w1_ref, bb1_ref, w2_ref, bb2_ref, g3_ref, b3_ref,
    # output + scratch
    out_ref, head_acc,
):
    f32 = jnp.float32
    x = tgt_ref[0].astype(f32)                       # (LQ, D)
    pos = pos_ref[0].astype(f32)

    # ------------------- stage 1: MHSA + residual + LayerNorm -----------------
    qk_in = x + pos
    qk = jnp.dot(qk_in, wqk_ref[...], preferred_element_type=f32) + bqk_ref[...]
    q = qk[:, :D_MODEL] * (1.0 / math.sqrt(HEAD_DIM))   # scale hoisted out of loop
    k = qk[:, D_MODEL:]
    v = jnp.dot(x, wv_sa_ref[...], preferred_element_type=f32) + bv_sa_ref[...]

    for h in range(N_HEADS):
        sl = slice(h * HEAD_DIM, (h + 1) * HEAD_DIM)
        s = jnp.dot(q[:, sl], k[:, sl].T, preferred_element_type=f32)     # (LQ, LQ)
        s = s - jnp.max(s, axis=-1, keepdims=True)
        e = jnp.exp(s)
        p = e * pl.reciprocal(jnp.sum(e, axis=-1, keepdims=True), approx=True)
        head_acc[:, sl] = jnp.dot(p, v[:, sl], preferred_element_type=f32)
    tgt2 = jnp.dot(head_acc[...], wo_sa_ref[...], preferred_element_type=f32) + bo_sa_ref[...]
    t1 = _layer_norm(x + tgt2, g2_ref[...], b2_ref[...])

    # --------------- stage 2: MSDeformAttn + residual + LayerNorm -------------
    qq = t1 + pos
    src = src_ref[0].astype(f32)                     # (LEN_PAD, D)
    keep = keep_ref[0].astype(f32)                   # (1, LEN_PAD) 1=valid, 0=padded/masked
    refp = refp_ref[0].astype(f32)                   # (LQ, 2*L)

    value = jnp.dot(src, wv_ca_ref[...], preferred_element_type=f32) + bv_ca_ref[...]

    # fused sampling-offset | attention-weight projection: (LQ, 2*HLP + HLP)
    offaw = jnp.dot(qq, woffaw_ref[...], preferred_element_type=f32) + boffaw_ref[...]
    off = offaw[:, :2 * HLP]
    awl = offaw[:, 2 * HLP:]

    # per-head softmax over (levels*points), lane-dense: the group-sum is a tiny
    # block-ones matmul, the divide goes to the EUP.
    awl = awl - jnp.max(awl, axis=-1, keepdims=True)
    e_aw = jnp.exp(awl)
    denom = jnp.dot(e_aw, smat_ref[...], preferred_element_type=f32)
    a_all = e_aw * pl.reciprocal(denom, approx=True)          # (LQ, HLP)

    # pixel-space sampling coordinates for ALL points in one shot:
    # xp = ref_x*W + off_x - 0.5, yp = ref_y*H + off_y - 0.5 (interleaved cols).
    xy = jnp.dot(refp, emat_ref[...], preferred_element_type=f32) + off - 0.5

    mxc = mx_ref[...].astype(f32)                    # (L, LEN_PAD)
    myc = my_ref[...].astype(f32)

    for h in range(N_HEADS):
        wmat = jnp.zeros((LQ, LEN_PAD), f32)
        for l in range(N_LEVELS):
            mx_l = mxc[l:l + 1, :]                   # (1, LEN_PAD)
            my_l = myc[l:l + 1, :]
            for pnt in range(N_POINTS):
                t_idx = (h * N_LEVELS + l) * N_POINTS + pnt
                xp = xy[:, 2 * t_idx:2 * t_idx + 1]              # (LQ, 1)
                yp = xy[:, 2 * t_idx + 1:2 * t_idx + 2]
                ap = a_all[:, t_idx:t_idx + 1]
                # bilinear "triangle" kernel == grid_sample(zeros padding):
                wx = jnp.maximum(1.0 - jnp.abs(xp - mx_l), 0.0)  # (LQ, LEN_PAD)
                wy = jnp.maximum(1.0 - jnp.abs(yp - my_l), 0.0)
                wmat = wmat + ap * wx * wy
        # key-padding mask (and pad lanes): zeroing wmat columns == zeroing value rows
        wmat = wmat * keep
        head_acc[:, h * HEAD_DIM:(h + 1) * HEAD_DIM] = jnp.dot(
            wmat, value[:, h * HEAD_DIM:(h + 1) * HEAD_DIM],
            preferred_element_type=f32)
    tgt2 = jnp.dot(head_acc[...], wo_ca_ref[...], preferred_element_type=f32) + bo_ca_ref[...]
    t2 = _layer_norm(t1 + tgt2, g1_ref[...], b1_ref[...])

    # ---------------------- stage 3: FFN + residual + LayerNorm ---------------
    hid = jnp.maximum(
        jnp.dot(t2, w1_ref[...], preferred_element_type=f32) + bb1_ref[...], 0.0)
    t3 = jnp.dot(hid, w2_ref[...], preferred_element_type=f32) + bb2_ref[...]
    out_ref[0] = _layer_norm(t2 + t3, g3_ref[...], b3_ref[...]).astype(out_ref.dtype)


# ------------------------------ pallas_call glue ------------------------------
def _const2d(shape):
    return pl.BlockSpec(shape, lambda b: (0, 0))


def deformable_decoder_layer_forward(tgt, query_pos, reference_points, src,
                                     src_padding_mask, params):
    p = params
    # fuse projection weights once (wrapper-side weight prep, not input prep)
    wqk = jnp.concatenate([p["wq"], p["wk"]], axis=1)
    bqk = jnp.concatenate([p["bq"], p["bk"]], axis=1)
    woffaw = jnp.concatenate([p["w_off"], p["w_aw"]], axis=1)
    boffaw = jnp.concatenate([p["b_off"], p["b_aw"]], axis=1)

    # lane-pad the flattened multi-level memory and build a lane-major keep mask
    src_pad = jnp.pad(src, ((0, 0), (0, LEN_PAD - LEN_IN), (0, 0)))
    keep = 1.0 - src_padding_mask.astype(jnp.float32)
    keep = jnp.pad(keep, ((0, 0), (0, LEN_PAD - LEN_IN)))[:, None, :]   # (B,1,LEN_PAD)

    refp_flat = reference_points.reshape(B, LQ, 2 * N_LEVELS)

    seq_spec = pl.BlockSpec((1, LQ, D_MODEL), lambda b: (b, 0, 0))
    in_specs = [
        seq_spec, seq_spec,
        pl.BlockSpec((1, LEN_PAD, D_MODEL), lambda b: (b, 0, 0)),
        pl.BlockSpec((1, 1, LEN_PAD), lambda b: (b, 0, 0)),
        pl.BlockSpec((1, LQ, 2 * N_LEVELS), lambda b: (b, 0, 0)),
        _const2d((2 * N_LEVELS, 2 * HLP)), _const2d((HLP, HLP)),
        _const2d((N_LEVELS, LEN_PAD)), _const2d((N_LEVELS, LEN_PAD)),
        # self-attention params
        _const2d((D_MODEL, 2 * D_MODEL)), _const2d((1, 2 * D_MODEL)),
        _const2d((D_MODEL, D_MODEL)), _const2d((1, D_MODEL)),
        _const2d((D_MODEL, D_MODEL)), _const2d((1, D_MODEL)),
        _const2d((1, D_MODEL)), _const2d((1, D_MODEL)),
        # deformable cross-attention params
        _const2d((D_MODEL, 3 * HLP)), _const2d((1, 3 * HLP)),
        _const2d((D_MODEL, D_MODEL)), _const2d((1, D_MODEL)),
        _const2d((D_MODEL, D_MODEL)), _const2d((1, D_MODEL)),
        _const2d((1, D_MODEL)), _const2d((1, D_MODEL)),
        # FFN params
        _const2d((D_MODEL, D_FFN)), _const2d((1, D_FFN)),
        _const2d((D_FFN, D_MODEL)), _const2d((1, D_MODEL)),
        _const2d((1, D_MODEL)), _const2d((1, D_MODEL)),
    ]

    return pl.pallas_call(
        _fused_layer_kernel,
        out_shape=jax.ShapeDtypeStruct((B, LQ, D_MODEL), jnp.float32),
        grid=(B,),
        in_specs=in_specs,
        out_specs=seq_spec,
        scratch_shapes=[pltpu.VMEM((LQ, D_MODEL), jnp.float32)],
        # "parallel": the B=2 batch rows shard across the two TensorCores on
        # v7x; on single-TC v5e/v6e it degenerates to a 2-step serial loop whose
        # per-step overhead is negligible after fusing the whole layer.
        compiler_params=pltpu.CompilerParams(dimension_semantics=("parallel",)),
    )(tgt, query_pos, src_pad, keep, refp_flat,
      _EMAT_NP, _SMAT_NP, _MX_NP, _MY_NP,
      wqk, bqk, p["wv_sa"], p["bv_sa"], p["wo_sa"], p["bo_sa"], p["ln2_g"], p["ln2_b"],
      woffaw, boffaw, p["wv_ca"], p["bv_ca"], p["wo_ca"], p["bo_ca"], p["ln1_g"], p["ln1_b"],
      p["w1"], p["b1"], p["w2"], p["b2"], p["ln3_g"], p["ln3_b"])


# ------------------------------ pure-JAX reference ----------------------------
def reference_forward(tgt, query_pos, reference_points, src, src_padding_mask, p):
    # self-attention
    qk = tgt + query_pos
    q = qk @ p["wq"] + p["bq"]
    k = qk @ p["wk"] + p["bk"]
    v = tgt @ p["wv_sa"] + p["bv_sa"]
    qh = q.reshape(B, LQ, N_HEADS, HEAD_DIM).transpose(0, 2, 1, 3)
    kh = k.reshape(B, LQ, N_HEADS, HEAD_DIM).transpose(0, 2, 1, 3)
    vh = v.reshape(B, LQ, N_HEADS, HEAD_DIM).transpose(0, 2, 1, 3)
    s = jnp.einsum("bhqd,bhkd->bhqk", qh, kh) / math.sqrt(HEAD_DIM)
    a = jax.nn.softmax(s, axis=-1)
    o = jnp.einsum("bhqk,bhkd->bhqd", a, vh).transpose(0, 2, 1, 3).reshape(B, LQ, D_MODEL)
    t = _layer_norm(tgt + (o @ p["wo_sa"] + p["bo_sa"]), p["ln2_g"], p["ln2_b"])

    # deformable cross-attention
    qc = t + query_pos
    value = src @ p["wv_ca"] + p["bv_ca"]
    value = value * (1.0 - src_padding_mask.astype(jnp.float32)[..., None])
    value = value.reshape(B, LEN_IN, N_HEADS, HEAD_DIM)
    off = (qc @ p["w_off"] + p["b_off"]).reshape(B, LQ, N_HEADS, N_LEVELS, N_POINTS, 2)
    aw = (qc @ p["w_aw"] + p["b_aw"]).reshape(B, LQ, N_HEADS, LP)
    aw = jax.nn.softmax(aw, axis=-1).reshape(B, LQ, N_HEADS, N_LEVELS, N_POINTS)
    normalizer = jnp.array([[w, h] for (h, w) in SPATIAL_SHAPES], jnp.float32)
    loc = reference_points[:, :, None, :, None, :] + off / normalizer[None, None, None, :, None, :]

    sampled = jnp.zeros((B, N_HEADS, LQ, HEAD_DIM), jnp.float32)
    for l, (Hl, Wl) in enumerate(SPATIAL_SHAPES):
        st = LEVEL_START[l]
        vl = value[:, st:st + Hl * Wl].transpose(0, 2, 1, 3)          # (B,H,Hl*Wl,hd)
        lx = loc[:, :, :, l, :, 0] * Wl - 0.5                         # (B,LQ,H,P)
        ly = loc[:, :, :, l, :, 1] * Hl - 0.5
        x0 = jnp.floor(lx); y0 = jnp.floor(ly)
        fx = lx - x0; fy = ly - y0
        x0 = x0.astype(jnp.int32); y0 = y0.astype(jnp.int32)
        a_l = aw[:, :, :, l, :]
        for dx, dy, cw in ((0, 0, (1 - fx) * (1 - fy)), (1, 0, fx * (1 - fy)),
                           (0, 1, (1 - fx) * fy), (1, 1, fx * fy)):
            xi = x0 + dx; yi = y0 + dy
            valid = ((xi >= 0) & (xi < Wl) & (yi >= 0) & (yi < Hl)).astype(jnp.float32)
            idx = (jnp.clip(yi, 0, Hl - 1) * Wl + jnp.clip(xi, 0, Wl - 1)).transpose(0, 2, 1, 3)
            gathered = jax.vmap(jax.vmap(lambda vv, ii: vv[ii]))(vl, idx)  # (B,H,LQ,P,hd)
            wgt = (a_l * cw * valid).transpose(0, 2, 1, 3)
            sampled = sampled + (gathered * wgt[..., None]).sum(axis=3)
    sampled = sampled.transpose(0, 2, 1, 3).reshape(B, LQ, D_MODEL)
    t = _layer_norm(t + (sampled @ p["wo_ca"] + p["bo_ca"]), p["ln1_g"], p["ln1_b"])

    # FFN
    h = jax.nn.relu(t @ p["w1"] + p["b1"])
    t = _layer_norm(t + (h @ p["w2"] + p["b2"]), p["ln3_g"], p["ln3_b"])
    return t


# ------------------------------ params & main --------------------------------
def init_params(key):
    ks = jax.random.split(key, 24)

    def w(k, shape, scale=0.05):
        return jax.random.normal(k, shape, jnp.float32) * scale

    ones = jnp.ones((1, D_MODEL), jnp.float32)
    zeros = jnp.zeros((1, D_MODEL), jnp.float32)
    return dict(
        wq=w(ks[0], (D_MODEL, D_MODEL)), bq=w(ks[1], (1, D_MODEL), 0.02),
        wk=w(ks[2], (D_MODEL, D_MODEL)), bk=w(ks[3], (1, D_MODEL), 0.02),
        wv_sa=w(ks[4], (D_MODEL, D_MODEL)), bv_sa=w(ks[5], (1, D_MODEL), 0.02),
        wo_sa=w(ks[6], (D_MODEL, D_MODEL)), bo_sa=w(ks[7], (1, D_MODEL), 0.02),
        ln2_g=ones, ln2_b=zeros,
        w_off=w(ks[8], (D_MODEL, 2 * HLP), 0.1), b_off=w(ks[9], (1, 2 * HLP), 0.3),
        w_aw=w(ks[10], (D_MODEL, HLP)), b_aw=w(ks[11], (1, HLP), 0.02),
        wv_ca=w(ks[12], (D_MODEL, D_MODEL)), bv_ca=w(ks[13], (1, D_MODEL), 0.02),
        wo_ca=w(ks[14], (D_MODEL, D_MODEL)), bo_ca=w(ks[15], (1, D_MODEL), 0.02),
        ln1_g=ones, ln1_b=zeros,
        w1=w(ks[16], (D_MODEL, D_FFN)), b1=w(ks[17], (1, D_FFN), 0.02),
        w2=w(ks[18], (D_FFN, D_MODEL)), b2=w(ks[19], (1, D_MODEL), 0.02),
        ln3_g=ones, ln3_b=zeros,
    )


if __name__ == "__main__":
    key = jax.random.PRNGKey(0)
    kp, k1, k2, k3, k4 = jax.random.split(key, 5)
    params = init_params(kp)

    tgt = jax.random.normal(k1, (B, LQ, D_MODEL), jnp.float32)
    query_pos = jax.random.normal(k2, (B, LQ, D_MODEL), jnp.float32) * 0.5
    src = jax.random.normal(k3, (B, LEN_IN, D_MODEL), jnp.float32)
    reference_points = jax.random.uniform(k4, (B, LQ, N_LEVELS, 2), jnp.float32,
                                          0.05, 0.95)
    # mark the last 6 memory positions of batch 1 as padding
    src_padding_mask = jnp.zeros((B, LEN_IN), jnp.float32).at[1, LEN_IN - 6:].set(1.0)

    out = deformable_decoder_layer_forward(tgt, query_pos, reference_points, src,
                                           src_padding_mask, params)
    out = jax.block_until_ready(out)

    ref = jax.block_until_ready(
        reference_forward(tgt, query_pos, reference_points, src,
                          src_padding_mask, params))

    assert out.shape == (B, LQ, D_MODEL)
    max_err = float(jnp.max(jnp.abs(out - ref)))
    # small slack for the EUP approximate-reciprocal softmax denominators
    assert max_err < 5e-3, f"mismatch vs reference: {max_err}"
    print("KERNEL_OK")
</pallas_src>

<mosaic_0001>
module attributes {stable_mosaic.version = 11 : i64} {
  func.func @_fused_layer_kernel(%arg0: i32, %arg1: memref<1x8x32xf32, #tpu.memory_space<vmem>>, %arg2: memref<1x8x32xf32, #tpu.memory_space<vmem>>, %arg3: memref<1x128x32xf32, #tpu.memory_space<vmem>>, %arg4: memref<1x1x128xf32, #tpu.memory_space<vmem>>, %arg5: memref<1x8x4xf32, #tpu.memory_space<vmem>>, %arg6: memref<4x32xf32, #tpu.memory_space<vmem>>, %arg7: memref<16x16xf32, #tpu.memory_space<vmem>>, %arg8: memref<2x128xf32, #tpu.memory_space<vmem>>, %arg9: memref<2x128xf32, #tpu.memory_space<vmem>>, %arg10: memref<32x64xf32, #tpu.memory_space<vmem>>, %arg11: memref<1x64xf32, #tpu.memory_space<vmem>>, %arg12: memref<32x32xf32, #tpu.memory_space<vmem>>, %arg13: memref<1x32xf32, #tpu.memory_space<vmem>>, %arg14: memref<32x32xf32, #tpu.memory_space<vmem>>, %arg15: memref<1x32xf32, #tpu.memory_space<vmem>>, %arg16: memref<1x32xf32, #tpu.memory_space<vmem>>, %arg17: memref<1x32xf32, #tpu.memory_space<vmem>>, %arg18: memref<32x48xf32, #tpu.memory_space<vmem>>, %arg19: memref<1x48xf32, #tpu.memory_space<vmem>>, %arg20: memref<32x32xf32, #tpu.memory_space<vmem>>, %arg21: memref<1x32xf32, #tpu.memory_space<vmem>>, %arg22: memref<32x32xf32, #tpu.memory_space<vmem>>, %arg23: memref<1x32xf32, #tpu.memory_space<vmem>>, %arg24: memref<1x32xf32, #tpu.memory_space<vmem>>, %arg25: memref<1x32xf32, #tpu.memory_space<vmem>>, %arg26: memref<32x64xf32, #tpu.memory_space<vmem>>, %arg27: memref<1x64xf32, #tpu.memory_space<vmem>>, %arg28: memref<64x32xf32, #tpu.memory_space<vmem>>, %arg29: memref<1x32xf32, #tpu.memory_space<vmem>>, %arg30: memref<1x32xf32, #tpu.memory_space<vmem>>, %arg31: memref<1x32xf32, #tpu.memory_space<vmem>>, %arg32: memref<1x8x32xf32, #tpu.memory_space<vmem>>, %arg33: memref<8x32xf32, #tpu.memory_space<vmem>>) attributes {dimension_semantics = [#tpu.dimension_semantics<parallel>], iteration_bounds = array<i64: 2>, scalar_prefetch = 0 : i64, scratch_operands = 1 : i64, tpu.core_type = #tpu.core_type<tc>, window_params = [{transform_indices = @transform_0, window_bounds = array<i64: 1, 8, 32>}, {transform_indices = @transform_1, window_bounds = array<i64: 1, 8, 32>}, {transform_indices = @transform_2, window_bounds = array<i64: 1, 128, 32>}, {transform_indices = @transform_3, window_bounds = array<i64: 1, 1, 128>}, {transform_indices = @transform_4, window_bounds = array<i64: 1, 8, 4>}, {pipeline_mode = #tpu.pipeline_mode<synchronous>, transform_indices = @transform_5, window_bounds = array<i64: 4, 32>}, {pipeline_mode = #tpu.pipeline_mode<synchronous>, transform_indices = @transform_6, window_bounds = array<i64: 16, 16>}, {pipeline_mode = #tpu.pipeline_mode<synchronous>, transform_indices = @transform_7, window_bounds = array<i64: 2, 128>}, {pipeline_mode = #tpu.pipeline_mode<synchronous>, transform_indices = @transform_8, window_bounds = array<i64: 2, 128>}, {pipeline_mode = #tpu.pipeline_mode<synchronous>, transform_indices = @transform_9, window_bounds = array<i64: 32, 64>}, {pipeline_mode = #tpu.pipeline_mode<synchronous>, transform_indices = @transform_10, window_bounds = array<i64: 1, 64>}, {pipeline_mode = #tpu.pipeline_mode<synchronous>, transform_indices = @transform_11, window_bounds = array<i64: 32, 32>}, {pipeline_mode = #tpu.pipeline_mode<synchronous>, transform_indices = @transform_12, window_bounds = array<i64: 1, 32>}, {pipeline_mode = #tpu.pipeline_mode<synchronous>, transform_indices = @transform_13, window_bounds = array<i64: 32, 32>}, {pipeline_mode = #tpu.pipeline_mode<synchronous>, transform_indices = @transform_14, window_bounds = array<i64: 1, 32>}, {pipeline_mode = #tpu.pipeline_mode<synchronous>, transform_indices = @transform_15, window_bounds = array<i64: 1, 32>}, {pipeline_mode = #tpu.pipeline_mode<synchronous>, transform_indices = @transform_16, window_bounds = array<i64: 1, 32>}, {pipeline_mode = #tpu.pipeline_mode<synchronous>, transform_indices = @transform_17, window_bounds = array<i64: 32, 48>}, {pipeline_mode = #tpu.pipeline_mode<synchronous>, transform_indices = @transform_18, window_bounds = array<i64: 1, 48>}, {pipeline_mode = #tpu.pipeline_mode<synchronous>, transform_indices = @transform_19, window_bounds = array<i64: 32, 32>}, {pipeline_mode = #tpu.pipeline_mode<synchronous>, transform_indices = @transform_20, window_bounds = array<i64: 1, 32>}, {pipeline_mode = #tpu.pipeline_mode<synchronous>, transform_indices = @transform_21, window_bounds = array<i64: 32, 32>}, {pipeline_mode = #tpu.pipeline_mode<synchronous>, transform_indices = @transform_22, window_bounds = array<i64: 1, 32>}, {pipeline_mode = #tpu.pipeline_mode<synchronous>, transform_indices = @transform_23, window_bounds = array<i64: 1, 32>}, {pipeline_mode = #tpu.pipeline_mode<synchronous>, transform_indices = @transform_24, window_bounds = array<i64: 1, 32>}, {pipeline_mode = #tpu.pipeline_mode<synchronous>, transform_indices = @transform_25, window_bounds = array<i64: 32, 64>}, {pipeline_mode = #tpu.pipeline_mode<synchronous>, transform_indices = @transform_26, window_bounds = array<i64: 1, 64>}, {pipeline_mode = #tpu.pipeline_mode<synchronous>, transform_indices = @transform_27, window_bounds = array<i64: 64, 32>}, {pipeline_mode = #tpu.pipeline_mode<synchronous>, transform_indices = @transform_28, window_bounds = array<i64: 1, 32>}, {pipeline_mode = #tpu.pipeline_mode<synchronous>, transform_indices = @transform_29, window_bounds = array<i64: 1, 32>}, {pipeline_mode = #tpu.pipeline_mode<synchronous>, transform_indices = @transform_30, window_bounds = array<i64: 1, 32>}, {transform_indices = @transform_31, window_bounds = array<i64: 1, 8, 32>}]} {
    %c0 = arith.constant 0 : index
    %c0_0 = arith.constant 0 : index
    %c0_1 = arith.constant 0 : index
    %0 = vector.load %arg1[%c0, %c0_0, %c0_1] : memref<1x8x32xf32, #tpu.memory_space<vmem>>, vector<1x8x32xf32>
    %1 = vector.shape_cast %0 : vector<1x8x32xf32> to vector<8x32xf32>
    %c0_2 = arith.constant 0 : index
    %c0_3 = arith.constant 0 : index
    %c0_4 = arith.constant 0 : index
    %2 = vector.load %arg2[%c0_2, %c0_3, %c0_4] : memref<1x8x32xf32, #tpu.memory_space<vmem>>, vector<1x8x32xf32>
    %3 = vector.shape_cast %2 : vector<1x8x32xf32> to vector<8x32xf32>
    %4 = arith.addf %1, %3 : vector<8x32xf32>
    %c0_5 = arith.constant 0 : index
    %c0_6 = arith.constant 0 : index
    %5 = vector.load %arg10[%c0_5, %c0_6] : memref<32x64xf32, #tpu.memory_space<vmem>>, vector<32x64xf32>
    %cst = arith.constant dense<0.000000e+00> : vector<8x64xf32>
    %6 = tpu.matmul %4, %5, %cst {dimension_numbers = #tpu.dot_dimension_numbers<[1], [0], [0], [1], [0, 0, 1, 1], [], []>} : vector<8x32xf32>, vector<32x64xf32>, vector<8x64xf32> -> vector<8x64xf32>
    %c0_7 = arith.constant 0 : index
    %c0_8 = arith.constant 0 : index
    %7 = vector.load %arg11[%c0_7, %c0_8] : memref<1x64xf32, #tpu.memory_space<vmem>>, vector<1x64xf32>
    %8 = vector.broadcast %7 : vector<1x64xf32> to vector<8x64xf32>
    %9 = arith.addf %6, %8 : vector<8x64xf32>
    %10 = vector.extract_strided_slice %9 {offsets = [0, 0], sizes = [8, 32], strides = [1, 1]} : vector<8x64xf32> to vector<8x32xf32>
    %cst_9 = arith.constant 0.353553385 : f32
    %11 = vector.broadcast %cst_9 : f32 to vector<8x32xf32>
    %12 = arith.mulf %10, %11 : vector<8x32xf32>
    %13 = vector.extract_strided_slice %9 {offsets = [0, 32], sizes = [8, 32], strides = [1, 1]} : vector<8x64xf32> to vector<8x32xf32>
    %c0_10 = arith.constant 0 : index
    %c0_11 = arith.constant 0 : index
    %14 = vector.load %arg12[%c0_10, %c0_11] : memref<32x32xf32, #tpu.memory_space<vmem>>, vector<32x32xf32>
    %cst_12 = arith.constant dense<0.000000e+00> : vector<8x32xf32>
    %15 = tpu.matmul %1, %14, %cst_12 {dimension_numbers = #tpu.dot_dimension_numbers<[1], [0], [0], [1], [0, 0, 1, 1], [], []>} : vector<8x32xf32>, vector<32x32xf32>, vector<8x32xf32> -> vector<8x32xf32>
    %c0_13 = arith.constant 0 : index
    %c0_14 = arith.constant 0 : index
    %16 = vector.load %arg13[%c0_13, %c0_14] : memref<1x32xf32, #tpu.memory_space<vmem>>, vector<1x32xf32>
    %17 = vector.broadcast %16 : vector<1x32xf32> to vector<8x32xf32>
    %18 = arith.addf %15, %17 : vector<8x32xf32>
    %19 = vector.extract_strided_slice %12 {offsets = [0, 0], sizes = [8, 8], strides = [1, 1]} : vector<8x32xf32> to vector<8x8xf32>
    %20 = vector.extract_strided_slice %13 {offsets = [0, 0], sizes = [8, 8], strides = [1, 1]} : vector<8x32xf32> to vector<8x8xf32>
    %21 = tpu.transpose %20, [1, 0] : vector<8x8xf32> -> vector<8x8xf32>
    %cst_15 = arith.constant dense<0.000000e+00> : vector<8x8xf32>
    %22 = tpu.matmul %19, %21, %cst_15 {dimension_numbers = #tpu.dot_dimension_numbers<[1], [0], [0], [1], [0, 0, 1, 1], [], []>} : vector<8x8xf32>, vector<8x8xf32>, vector<8x8xf32> -> vector<8x8xf32>
    %cst_16 = arith.constant dense<0xFF800000> : vector<8xf32>
    %23 = vector.multi_reduction <maximumf>, %22, %cst_16 [1] : vector<8x8xf32> to vector<8xf32>
    %24 = vector.shape_cast %23 : vector<8xf32> to vector<8x1xf32>
    %25 = vector.broadcast %24 : vector<8x1xf32> to vector<8x8xf32>
    %26 = arith.subf %22, %25 : vector<8x8xf32>
    %27 = math.exp %26 : vector<8x8xf32>
    %cst_17 = arith.constant dense<0.000000e+00> : vector<8xf32>
    %28 = vector.multi_reduction <add>, %27, %cst_17 [1] : vector<8x8xf32> to vector<8xf32>
    %29 = vector.shape_cast %28 : vector<8xf32> to vector<8x1xf32>
    %30 = tpu.reciprocal %29 {approx = true} : vector<8x1xf32> -> vector<8x1xf32>
    %31 = vector.broadcast %30 : vector<8x1xf32> to vector<8x8xf32>
    %32 = arith.mulf %27, %31 : vector<8x8xf32>
    %33 = vector.extract_strided_slice %18 {offsets = [0, 0], sizes = [8, 8], strides = [1, 1]} : vector<8x32xf32> to vector<8x8xf32>
    %cst_18 = arith.constant dense<0.000000e+00> : vector<8x8xf32>
    %34 = tpu.matmul %32, %33, %cst_18 {dimension_numbers = #tpu.dot_dimension_numbers<[1], [0], [0], [1], [0, 0, 1, 1], [], []>} : vector<8x8xf32>, vector<8x8xf32>, vector<8x8xf32> -> vector<8x8xf32>
    %c0_19 = arith.constant 0 : index
    %c0_20 = arith.constant 0 : index
    %35 = vector.load %arg33[%c0_19, %c0_20] : memref<8x32xf32, #tpu.memory_space<vmem>>, vector<8x8xf32>
    tpu.vector_store %arg33[%c0_19, %c0_20], %34 {strides = array<i32>} : memref<8x32xf32, #tpu.memory_space<vmem>>, vector<8x8xf32>,
    %36 = vector.extract_strided_slice %12 {offsets = [0, 8], sizes = [8, 8], strides = [1, 1]} : vector<8x32xf32> to vector<8x8xf32>
    %37 = vector.extract_strided_slice %13 {offsets = [0, 8], sizes = [8, 8], strides = [1, 1]} : vector<8x32xf32> to vector<8x8xf32>
    %38 = tpu.transpose %37, [1, 0] : vector<8x8xf32> -> vector<8x8xf32>
    %cst_21 = arith.constant dense<0.000000e+00> : vector<8x8xf32>
    %39 = tpu.matmul %36, %38, %cst_21 {dimension_numbers = #tpu.dot_dimension_numbers<[1], [0], [0], [1], [0, 0, 1, 1], [], []>} : vector<8x8xf32>, vector<8x8xf32>, vector<8x8xf32> -> vector<8x8xf32>
    %cst_22 = arith.constant dense<0xFF800000> : vector<8xf32>
    %40 = vector.multi_reduction <maximumf>, %39, %cst_22 [1] : vector<8x8xf32> to vector<8xf32>
    %41 = vector.shape_cast %40 : vector<8xf32> to vector<8x1xf32>
    %42 = vector.broadcast %41 : vector<8x1xf32> to vector<8x8xf32>
    %43 = arith.subf %39, %42 : vector<8x8xf32>
    %44 = math.exp %43 : vector<8x8xf32>
    %cst_23 = arith.constant dense<0.000000e+00> : vector<8xf32>
    %45 = vector.multi_reduction <add>, %44, %cst_23 [1] : vector<8x8xf32> to vector<8xf32>
    %46 = vector.shape_cast %45 : vector<8xf32> to vector<8x1xf32>
    %47 = tpu.reciprocal %46 {approx = true} : vector<8x1xf32> -> vector<8x1xf32>
    %48 = vector.broadcast %47 : vector<8x1xf32> to vector<8x8xf32>
    %49 = arith.mulf %44, %48 : vector<8x8xf32>
    %50 = vector.extract_strided_slice %18 {offsets = [0, 8], sizes = [8, 8], strides = [1, 1]} : vector<8x32xf32> to vector<8x8xf32>
    %cst_24 = arith.constant dense<0.000000e+00> : vector<8x8xf32>
    %51 = tpu.matmul %49, %50, %cst_24 {dimension_numbers = #tpu.dot_dimension_numbers<[1], [0], [0], [1], [0, 0, 1, 1], [], []>} : vector<8x8xf32>, vector<8x8xf32>, vector<8x8xf32> -> vector<8x8xf32>
    %c0_25 = arith.constant 0 : index
    %c8 = arith.constant 8 : index
    %52 = vector.load %arg33[%c0_25, %c8] : memref<8x32xf32, #tpu.memory_space<vmem>>, vector<8x8xf32>
    tpu.vector_store %arg33[%c0_25, %c8], %51 {strides = array<i32>} : memref<8x32xf32, #tpu.memory_space<vmem>>, vector<8x8xf32>,
    %53 = vector.extract_strided_slice %12 {offsets = [0, 16], sizes = [8, 8], strides = [1, 1]} : vector<8x32xf32> to vector<8x8xf32>
    %54 = vector.extract_strided_slice %13 {offsets = [0, 16], sizes = [8, 8], strides = [1, 1]} : vector<8x32xf32> to vector<8x8xf32>
    %55 = tpu.transpose %54, [1, 0] : vector<8x8xf32> -> vector<8x8xf32>
    %cst_26 = arith.constant dense<0.000000e+00> : vector<8x8xf32>
    %56 = tpu.matmul %53, %55, %cst_26 {dimension_numbers = #tpu.dot_dimension_numbers<[1], [0], [0], [1], [0, 0, 1, 1], [], []>} : vector<8x8xf32>, vector<8x8xf32>, vector<8x8xf32> -> vector<8x8xf32>
    %cst_27 = arith.constant dense<0xFF800000> : vector<8xf32>
    %57 = vector.multi_reduction <maximumf>, %56, %cst_27 [1] : vector<8x8xf32> to vector<8xf32>
    %58 = vector.shape_cast %57 : vector<8xf32> to vector<8x1xf32>
    %59 = vector.broadcast %58 : vector<8x1xf32> to vector<8x8xf32>
    %60 = arith.subf %56, %59 : vector<8x8xf32>
    %61 = math.exp %60 : vector<8x8xf32>
    %cst_28 = arith.constant dense<0.000000e+00> : vector<8xf32>
    %62 = vector.multi_reduction <add>, %61, %cst_28 [1] : vector<8x8xf32> to vector<8xf32>
    %63 = vector.shape_cast %62 : vector<8xf32> to vector<8x1xf32>
    %64 = tpu.reciprocal %63 {approx = true} : vector<8x1xf32> -> vector<8x1xf32>
    %65 = vector.broadcast %64 : vector<8x1xf32> to vector<8x8xf32>
    %66 = arith.mulf %61, %65 : vector<8x8xf32>
    %67 = vector.extract_strided_slice %18 {offsets = [0, 16], sizes = [8, 8], strides = [1, 1]} : vector<8x32xf32> to vector<8x8xf32>
    %cst_29 = arith.constant dense<0.000000e+00> : vector<8x8xf32>
    %68 = tpu.matmul %66, %67, %cst_29 {dimension_numbers = #tpu.dot_dimension_numbers<[1], [0], [0], [1], [0, 0, 1, 1], [], []>} : vector<8x8xf32>, vector<8x8xf32>, vector<8x8xf32> -> vector<8x8xf32>
    %c0_30 = arith.constant 0 : index
    %c16 = arith.constant 16 : index
    %69 = vector.load %arg33[%c0_30, %c16] : memref<8x32xf32, #tpu.memory_space<vmem>>, vector<8x8xf32>
    tpu.vector_store %arg33[%c0_30, %c16], %68 {strides = array<i32>} : memref<8x32xf32, #tpu.memory_space<vmem>>, vector<8x8xf32>,
    %70 = vector.extract_strided_slice %12 {offsets = [0, 24], sizes = [8, 8], strides = [1, 1]} : vector<8x32xf32> to vector<8x8xf32>
    %71 = vector.extract_strided_slice %13 {offsets = [0, 24], sizes = [8, 8], strides = [1, 1]} : vector<8x32xf32> to vector<8x8xf32>
    %72 = tpu.transpose %71, [1, 0] : vector<8x8xf32> -> vector<8x8xf32>
    %cst_31 = arith.constant dense<0.000000e+00> : vector<8x8xf32>
    %73 = tpu.matmul %70, %72, %cst_31 {dimension_numbers = #tpu.dot_dimension_numbers<[1], [0], [0], [1], [0, 0, 1, 1], [], []>} : vector<8x8xf32>, vector<8x8xf32>, vector<8x8xf32> -> vector<8x8xf32>
    %cst_32 = arith.constant dense<0xFF800000> : vector<8xf32>
    %74 = vector.multi_reduction <maximumf>, %73, %cst_32 [1] : vector<8x8xf32> to vector<8xf32>
    %75 = vector.shape_cast %74 : vector<8xf32> to vector<8x1xf32>
    %76 = vector.broadcast %75 : vector<8x1xf32> to vector<8x8xf32>
    %77 = arith.subf %73, %76 : vector<8x8xf32>
    %78 = math.exp %77 : vector<8x8xf32>
    %cst_33 = arith.constant dense<0.000000e+00> : vector<8xf32>
    %79 = vector.multi_reduction <add>, %78, %cst_33 [1] : vector<8x8xf32> to vector<8xf32>
    %80 = vector.shape_cast %79 : vector<8xf32> to vector<8x1xf32>
    %81 = tpu.reciprocal %80 {approx = true} : vector<8x1xf32> -> vector<8x1xf32>
    %82 = vector.broadcast %81 : vector<8x1xf32> to vector<8x8xf32>
    %83 = arith.mulf %78, %82 : vector<8x8xf32>
    %84 = vector.extract_strided_slice %18 {offsets = [0, 24], sizes = [8, 8], strides = [1, 1]} : vector<8x32xf32> to vector<8x8xf32>
    %cst_34 = arith.constant dense<0.000000e+00> : vector<8x8xf32>
    %85 = tpu.matmul %83, %84, %cst_34 {dimension_numbers = #tpu.dot_dimension_numbers<[1], [0], [0], [1], [0, 0, 1, 1], [], []>} : vector<8x8xf32>, vector<8x8xf32>, vector<8x8xf32> -> vector<8x8xf32>
    %c0_35 = arith.constant 0 : index
    %c24 = arith.constant 24 : index
    %86 = vector.load %arg33[%c0_35, %c24] : memref<8x32xf32, #tpu.memory_space<vmem>>, vector<8x8xf32>
    tpu.vector_store %arg33[%c0_35, %c24], %85 {strides = array<i32>} : memref<8x32xf32, #tpu.memory_space<vmem>>, vector<8x8xf32>,
    %c0_36 = arith.constant 0 : index
    %c0_37 = arith.constant 0 : index
    %87 = vector.load %arg33[%c0_36, %c0_37] : memref<8x32xf32, #tpu.memory_space<vmem>>, vector<8x32xf32>
    %c0_38 = arith.constant 0 : index
    %c0_39 = arith.constant 0 : index
    %88 = vector.load %arg14[%c0_38, %c0_39] : memref<32x32xf32, #tpu.memory_space<vmem>>, vector<32x32xf32>
    %cst_40 = arith.constant dense<0.000000e+00> : vector<8x32xf32>
    %89 = tpu.matmul %87, %88, %cst_40 {dimension_numbers = #tpu.dot_dimension_numbers<[1], [0], [0], [1], [0, 0, 1, 1], [], []>} : vector<8x32xf32>, vector<32x32xf32>, vector<8x32xf32> -> vector<8x32xf32>
    %c0_41 = arith.constant 0 : index
    %c0_42 = arith.constant 0 : index
    %90 = vector.load %arg15[%c0_41, %c0_42] : memref<1x32xf32, #tpu.memory_space<vmem>>, vector<1x32xf32>
    %91 = vector.broadcast %90 : vector<1x32xf32> to vector<8x32xf32>
    %92 = arith.addf %89, %91 : vector<8x32xf32>
    %93 = arith.addf %1, %92 : vector<8x32xf32>
    %c0_43 = arith.constant 0 : index
    %c0_44 = arith.constant 0 : index
    %94 = vector.load %arg16[%c0_43, %c0_44] : memref<1x32xf32, #tpu.memory_space<vmem>>, vector<1x32xf32>
    %c0_45 = arith.constant 0 : index
    %c0_46 = arith.constant 0 : index
    %95 = vector.load %arg17[%c0_45, %c0_46] : memref<1x32xf32, #tpu.memory_space<vmem>>, vector<1x32xf32>
    %cst_47 = arith.constant dense<0.000000e+00> : vector<8xf32>
    %96 = vector.multi_reduction <add>, %93, %cst_47 [1] : vector<8x32xf32> to vector<8xf32>
    %97 = vector.shape_cast %96 : vector<8xf32> to vector<8x1xf32>
    %cst_48 = arith.constant 3.200000e+01 : f32
    %98 = vector.broadcast %cst_48 : f32 to vector<8x1xf32>
    %99 = arith.divf %97, %98 : vector<8x1xf32>
    %100 = vector.broadcast %99 : vector<8x1xf32> to vector<8x32xf32>
    %101 = arith.subf %93, %100 : vector<8x32xf32>
    %102 = arith.mulf %101, %101 : vector<8x32xf32>
    %cst_49 = arith.constant dense<0.000000e+00> : vector<8xf32>
    %103 = vector.multi_reduction <add>, %102, %cst_49 [1] : vector<8x32xf32> to vector<8xf32>
    %104 = vector.shape_cast %103 : vector<8xf32> to vector<8x1xf32>
    %cst_50 = arith.constant 3.200000e+01 : f32
    %105 = vector.broadcast %cst_50 : f32 to vector<8x1xf32>
    %106 = arith.divf %104, %105 : vector<8x1xf32>
    %107 = vector.broadcast %99 : vector<8x1xf32> to vector<8x32xf32>
    %108 = arith.subf %93, %107 : vector<8x32xf32>
    %cst_51 = arith.constant 9.99999974E-6 : f32
    %109 = vector.broadcast %cst_51 : f32 to vector<8x1xf32>
    %110 = arith.addf %106, %109 : vector<8x1xf32>
    %111 = math.rsqrt %110 : vector<8x1xf32>
    %112 = vector.broadcast %111 : vector<8x1xf32> to vector<8x32xf32>
    %113 = arith.mulf %108, %112 : vector<8x32xf32>
    %114 = vector.broadcast %94 : vector<1x32xf32> to vector<8x32xf32>
    %115 = arith.mulf %113, %114 : vector<8x32xf32>
    %116 = vector.broadcast %95 : vector<1x32xf32> to vector<8x32xf32>
    %117 = arith.addf %115, %116 : vector<8x32xf32>
    %118 = arith.addf %117, %3 : vector<8x32xf32>
    %c0_52 = arith.constant 0 : index
    %c0_53 = arith.constant 0 : index
    %c0_54 = arith.constant 0 : index
    %119 = vector.load %arg3[%c0_52, %c0_53, %c0_54] : memref<1x128x32xf32, #tpu.memory_space<vmem>>, vector<1x128x32xf32>
    %120 = vector.shape_cast %119 : vector<1x128x32xf32> to vector<128x32xf32>
    %c0_55 = arith.constant 0 : index
    %c0_56 = arith.constant 0 : index
    %c0_57 = arith.constant 0 : index
    %121 = vector.load %arg4[%c0_55, %c0_56, %c0_57] : memref<1x1x128xf32, #tpu.memory_space<vmem>>, vector<1x1x128xf32>
    %122 = vector.shape_cast %121 : vector<1x1x128xf32> to vector<1x128xf32>
    %c0_58 = arith.constant 0 : index
    %c0_59 = arith.constant 0 : index
    %c0_60 = arith.constant 0 : index
    %123 = vector.load %arg5[%c0_58, %c0_59, %c0_60] : memref<1x8x4xf32, #tpu.memory_space<vmem>>, vector<1x8x4xf32>
    %124 = vector.shape_cast %123 : vector<1x8x4xf32> to vector<8x4xf32>
    %c0_61 = arith.constant 0 : index
    %c0_62 = arith.constant 0 : index
    %125 = vector.load %arg20[%c0_61, %c0_62] : memref<32x32xf32, #tpu.memory_space<vmem>>, vector<32x32xf32>
    %cst_63 = arith.constant dense<0.000000e+00> : vector<128x32xf32>
    %126 = tpu.matmul %120, %125, %cst_63 {dimension_numbers = #tpu.dot_dimension_numbers<[1], [0], [0], [1], [0, 0, 1, 1], [], []>} : vector<128x32xf32>, vector<32x32xf32>, vector<128x32xf32> -> vector<128x32xf32>
    %c0_64 = arith.constant 0 : index
    %c0_65 = arith.constant 0 : index
    %127 = vector.load %arg21[%c0_64, %c0_65] : memref<1x32xf32, #tpu.memory_space<vmem>>, vector<1x32xf32>
    %128 = vector.broadcast %127 : vector<1x32xf32> to vector<128x32xf32>
    %129 = arith.addf %126, %128 : vector<128x32xf32>
    %c0_66 = arith.constant 0 : index
    %c0_67 = arith.constant 0 : index
    %130 = vector.load %arg18[%c0_66, %c0_67] : memref<32x48xf32, #tpu.memory_space<vmem>>, vector<32x48xf32>
    %cst_68 = arith.constant dense<0.000000e+00> : vector<8x48xf32>
    %131 = tpu.matmul %118, %130, %cst_68 {dimension_numbers = #tpu.dot_dimension_numbers<[1], [0], [0], [1], [0, 0, 1, 1], [], []>} : vector<8x32xf32>, vector<32x48xf32>, vector<8x48xf32> -> vector<8x48xf32>
    %c0_69 = arith.constant 0 : index
    %c0_70 = arith.constant 0 : index
    %132 = vector.load %arg19[%c0_69, %c0_70] : memref<1x48xf32, #tpu.memory_space<vmem>>, vector<1x48xf32>
    %133 = vector.broadcast %132 : vector<1x48xf32> to vector<8x48xf32>
    %134 = arith.addf %131, %133 : vector<8x48xf32>
    %135 = vector.extract_strided_slice %134 {offsets = [0, 0], sizes = [8, 32], strides = [1, 1]} : vector<8x48xf32> to vector<8x32xf32>
    %136 = vector.extract_strided_slice %134 {offsets = [0, 32], sizes = [8, 16], strides = [1, 1]} : vector<8x48xf32> to vector<8x16xf32>
    %cst_71 = arith.constant dense<0xFF800000> : vector<8xf32>
    %137 = vector.multi_reduction <maximumf>, %136, %cst_71 [1] : vector<8x16xf32> to vector<8xf32>
    %138 = vector.shape_cast %137 : vector<8xf32> to vector<8x1xf32>
    %139 = vector.broadcast %138 : vector<8x1xf32> to vector<8x16xf32>
    %140 = arith.subf %136, %139 : vector<8x16xf32>
    %141 = math.exp %140 : vector<8x16xf32>
    %c0_72 = arith.constant 0 : index
    %c0_73 = arith.constant 0 : index
    %142 = vector.load %arg7[%c0_72, %c0_73] : memref<16x16xf32, #tpu.memory_space<vmem>>, vector<16x16xf32>
    %cst_74 = arith.constant dense<0.000000e+00> : vector<8x16xf32>
    %143 = tpu.matmul %141, %142, %cst_74 {dimension_numbers = #tpu.dot_dimension_numbers<[1], [0], [0], [1], [0, 0, 1, 1], [], []>} : vector<8x16xf32>, vector<16x16xf32>, vector<8x16xf32> -> vector<8x16xf32>
    %144 = tpu.reciprocal %143 {approx = true} : vector<8x16xf32> -> vector<8x16xf32>
    %145 = arith.mulf %141, %144 : vector<8x16xf32>
    %c0_75 = arith.constant 0 : index
    %c0_76 = arith.constant 0 : index
    %146 = vector.load %arg6[%c0_75, %c0_76] : memref<4x32xf32, #tpu.memory_space<vmem>>, vector<4x32xf32>
    %cst_77 = arith.constant dense<0.000000e+00> : vector<8x32xf32>
    %147 = tpu.matmul %124, %146, %cst_77 {dimension_numbers = #tpu.dot_dimension_numbers<[1], [0], [0], [1], [0, 0, 1, 1], [], []>} : vector<8x4xf32>, vector<4x32xf32>, vector<8x32xf32> -> vector<8x32xf32>
    %148 = arith.addf %147, %135 : vector<8x32xf32>
    %cst_78 = arith.constant 5.000000e-01 : f32
    %149 = vector.broadcast %cst_78 : f32 to vector<8x32xf32>
    %150 = arith.subf %148, %149 : vector<8x32xf32>
    %c0_79 = arith.constant 0 : index
    %c0_80 = arith.constant 0 : index
    %151 = vector.load %arg8[%c0_79, %c0_80] : memref<2x128xf32, #tpu.memory_space<vmem>>, vector<2x128xf32>
    %c0_81 = arith.constant 0 : index
    %c0_82 = arith.constant 0 : index
    %152 = vector.load %arg9[%c0_81, %c0_82] : memref<2x128xf32, #tpu.memory_space<vmem>>, vector<2x128xf32>
    %cst_83 = arith.constant 0.000000e+00 : f32
    %153 = vector.broadcast %cst_83 : f32 to vector<8x128xf32>
    %154 = vector.extract_strided_slice %151 {offsets = [0, 0], sizes = [1, 128], strides = [1, 1]} : vector<2x128xf32> to vector<1x128xf32>
    %155 = vector.extract_strided_slice %152 {offsets = [0, 0], sizes = [1, 128], strides = [1, 1]} : vector<2x128xf32> to vector<1x128xf32>
    %156 = vector.extract_strided_slice %150 {offsets = [0, 0], sizes = [8, 1], strides = [1, 1]} : vector<8x32xf32> to vector<8x1xf32>
    %157 = vector.extract_strided_slice %150 {offsets = [0, 1], sizes = [8, 1], strides = [1, 1]} : vector<8x32xf32> to vector<8x1xf32>
    %158 = vector.extract_strided_slice %145 {offsets = [0, 0], sizes = [8, 1], strides = [1, 1]} : vector<8x16xf32> to vector<8x1xf32>
    %159 = vector.broadcast %156 : vector<8x1xf32> to vector<8x128xf32>
    %160 = vector.broadcast %154 : vector<1x128xf32> to vector<8x128xf32>
    %161 = arith.subf %159, %160 : vector<8x128xf32>
    %162 = math.absf %161 : vector<8x128xf32>
    %cst_84 = arith.constant 1.000000e+00 : f32
    %163 = vector.broadcast %cst_84 : f32 to vector<8x128xf32>
    %164 = arith.subf %163, %162 : vector<8x128xf32>
    %cst_85 = arith.constant 0.000000e+00 : f32
    %165 = vector.broadcast %cst_85 : f32 to vector<8x128xf32>
    %166 = arith.maximumf %164, %165 : vector<8x128xf32>
    %167 = vector.broadcast %157 : vector<8x1xf32> to vector<8x128xf32>
    %168 = vector.broadcast %155 : vector<1x128xf32> to vector<8x128xf32>
    %169 = arith.subf %167, %168 : vector<8x128xf32>
    %170 = math.absf %169 : vector<8x128xf32>
    %cst_86 = arith.constant 1.000000e+00 : f32
    %171 = vector.broadcast %cst_86 : f32 to vector<8x128xf32>
    %172 = arith.subf %171, %170 : vector<8x128xf32>
    %cst_87 = arith.constant 0.000000e+00 : f32
    %173 = vector.broadcast %cst_87 : f32 to vector<8x128xf32>
    %174 = arith.maximumf %172, %173 : vector<8x128xf32>
    %175 = vector.broadcast %158 : vector<8x1xf32> to vector<8x128xf32>
    %176 = arith.mulf %175, %166 : vector<8x128xf32>
    %177 = arith.mulf %176, %174 : vector<8x128xf32>
    %178 = arith.addf %153, %177 : vector<8x128xf32>
    %179 = vector.extract_strided_slice %150 {offsets = [0, 2], sizes = [8, 1], strides = [1, 1]} : vector<8x32xf32> to vector<8x1xf32>
    %180 = vector.extract_strided_slice %150 {offsets = [0, 3], sizes = [8, 1], strides = [1, 1]} : vector<8x32xf32> to vector<8x1xf32>
    %181 = vector.extract_strided_slice %145 {offsets = [0, 1], sizes = [8, 1], strides = [1, 1]} : vector<8x16xf32> to vector<8x1xf32>
    %182 = vector.broadcast %179 : vector<8x1xf32> to vector<8x128xf32>
    %183 = vector.broadcast %154 : vector<1x128xf32> to vector<8x128xf32>
    %184 = arith.subf %182, %183 : vector<8x128xf32>
    %185 = math.absf %184 : vector<8x128xf32>
    %cst_88 = arith.constant 1.000000e+00 : f32
    %186 = vector.broadcast %cst_88 : f32 to vector<8x128xf32>
    %187 = arith.subf %186, %185 : vector<8x128xf32>
    %cst_89 = arith.constant 0.000000e+00 : f32
    %188 = vector.broadcast %cst_89 : f32 to vector<8x128xf32>
    %189 = arith.maximumf %187, %188 : vector<8x128xf32>
    %190 = vector.broadcast %180 : vector<8x1xf32> to vector<8x128xf32>
    %191 = vector.broadcast %155 : vector<1x128xf32> to vector<8x128xf32>
    %192 = arith.subf %190, %191 : vector<8x128xf32>
    %193 = math.absf %192 : vector<8x128xf32>
    %cst_90 = arith.constant 1.000000e+00 : f32
    %194 = vector.broadcast %cst_90 : f32 to vector<8x128xf32>
    %195 = arith.subf %194, %193 : vector<8x128xf32>
    %cst_91 = arith.constant 0.000000e+00 : f32
    %196 = vector.broadcast %cst_91 : f32 to vector<8x128xf32>
    %197 = arith.maximumf %195, %196 : vector<8x128xf32>
    %198 = vector.broadcast %181 : vector<8x1xf32> to vector<8x128xf32>
    %199 = arith.mulf %198, %189 : vector<8x128xf32>
    %200 = arith.mulf %199, %197 : vector<8x128xf32>
    %201 = arith.addf %178, %200 : vector<8x128xf32>
    %202 = vector.extract_strided_slice %151 {offsets = [1, 0], sizes = [1, 128], strides = [1, 1]} : vector<2x128xf32> to vector<1x128xf32>
    %203 = vector.extract_strided_slice %152 {offsets = [1, 0], sizes = [1, 128], strides = [1, 1]} : vector<2x128xf32> to vector<1x128xf32>
    %204 = vector.extract_strided_slice %150 {offsets = [0, 4], sizes = [8, 1], strides = [1, 1]} : vector<8x32xf32> to vector<8x1xf32>
    %205 = vector.extract_strided_slice %150 {offsets = [0, 5], sizes = [8, 1], strides = [1, 1]} : vector<8x32xf32> to vector<8x1xf32>
    %206 = vector.extract_strided_slice %145 {offsets = [0, 2], sizes = [8, 1], strides = [1, 1]} : vector<8x16xf32> to vector<8x1xf32>
    %207 = vector.broadcast %204 : vector<8x1xf32> to vector<8x128xf32>
    %208 = vector.broadcast %202 : vector<1x128xf32> to vector<8x128xf32>
    %209 = arith.subf %207, %208 : vector<8x128xf32>
    %210 = math.absf %209 : vector<8x128xf32>
    %cst_92 = arith.constant 1.000000e+00 : f32
    %211 = vector.broadcast %cst_92 : f32 to vector<8x128xf32>
    %212 = arith.subf %211, %210 : vector<8x128xf32>
    %cst_93 = arith.constant 0.000000e+00 : f32
    %213 = vector.broadcast %cst_93 : f32 to vector<8x128xf32>
    %214 = arith.maximumf %212, %213 : vector<8x128xf32>
    %215 = vector.broadcast %205 : vector<8x1xf32> to vector<8x128xf32>
    %216 = vector.broadcast %203 : vector<1x128xf32> to vector<8x128xf32>
    %217 = arith.subf %215, %216 : vector<8x128xf32>
    %218 = math.absf %217 : vector<8x128xf32>
    %cst_94 = arith.constant 1.000000e+00 : f32
    %219 = vector.broadcast %cst_94 : f32 to vector<8x128xf32>
    %220 = arith.subf %219, %218 : vector<8x128xf32>
    %cst_95 = arith.constant 0.000000e+00 : f32
    %221 = vector.broadcast %cst_95 : f32 to vector<8x128xf32>
    %222 = arith.maximumf %220, %221 : vector<8x128xf32>
    %223 = vector.broadcast %206 : vector<8x1xf32> to vector<8x128xf32>
    %224 = arith.mulf %223, %214 : vector<8x128xf32>
    %225 = arith.mulf %224, %222 : vector<8x128xf32>
    %226 = arith.addf %201, %225 : vector<8x128xf32>
    %227 = vector.extract_strided_slice %150 {offsets = [0, 6], sizes = [8, 1], strides = [1, 1]} : vector<8x32xf32> to vector<8x1xf32>
    %228 = vector.extract_strided_slice %150 {offsets = [0, 7], sizes = [8, 1], strides = [1, 1]} : vector<8x32xf32> to vector<8x1xf32>
    %229 = vector.extract_strided_slice %145 {offsets = [0, 3], sizes = [8, 1], strides = [1, 1]} : vector<8x16xf32> to vector<8x1xf32>
    %230 = vector.broadcast %227 : vector<8x1xf32> to vector<8x128xf32>
    %231 = vector.broadcast %202 : vector<1x128xf32> to vector<8x128xf32>
    %232 = arith.subf %230, %231 : vector<8x128xf32>
    %233 = math.absf %232 : vector<8x128xf32>
    %cst_96 = arith.constant 1.000000e+00 : f32
    %234 = vector.broadcast %cst_96 : f32 to vector<8x128xf32>
    %235 = arith.subf %234, %233 : vector<8x128xf32>
    %cst_97 = arith.constant 0.000000e+00 : f32
    %236 = vector.broadcast %cst_97 : f32 to vector<8x128xf32>
    %237 = arith.maximumf %235, %236 : vector<8x128xf32>
    %238 = vector.broadcast %228 : vector<8x1xf32> to vector<8x128xf32>
    %239 = vector.broadcast %203 : vector<1x128xf32> to vector<8x128xf32>
    %240 = arith.subf %238, %239 : vector<8x128xf32>
    %241 = math.absf %240 : vector<8x128xf32>
    %cst_98 = arith.constant 1.000000e+00 : f32
    %242 = vector.broadcast %cst_98 : f32 to vector<8x128xf32>
    %243 = arith.subf %242, %241 : vector<8x128xf32>
    %cst_99 = arith.constant 0.000000e+00 : f32
    %244 = vector.broadcast %cst_99 : f32 to vector<8x128xf32>
    %245 = arith.maximumf %243, %244 : vector<8x128xf32>
    %246 = vector.broadcast %229 : vector<8x1xf32> to vector<8x128xf32>
    %247 = arith.mulf %246, %237 : vector<8x128xf32>
    %248 = arith.mulf %247, %245 : vector<8x128xf32>
    %249 = arith.addf %226, %248 : vector<8x128xf32>
    %250 = vector.broadcast %122 : vector<1x128xf32> to vector<8x128xf32>
    %251 = arith.mulf %249, %250 : vector<8x128xf32>
    %252 = vector.extract_strided_slice %129 {offsets = [0, 0], sizes = [128, 8], strides = [1, 1]} : vector<128x32xf32> to vector<128x8xf32>
    %cst_100 = arith.constant dense<0.000000e+00> : vector<8x8xf32>
    %253 = tpu.matmul %251, %252, %cst_100 {dimension_numbers = #tpu.dot_dimension_numbers<[1], [0], [0], [1], [0, 0, 1, 1], [], []>} : vector<8x128xf32>, vector<128x8xf32>, vector<8x8xf32> -> vector<8x8xf32>
    %c0_101 = arith.constant 0 : index
    %c0_102 = arith.constant 0 : index
    %254 = vector.load %arg33[%c0_101, %c0_102] : memref<8x32xf32, #tpu.memory_space<vmem>>, vector<8x8xf32>
    tpu.vector_store %arg33[%c0_101, %c0_102], %253 {strides = array<i32>} : memref<8x32xf32, #tpu.memory_space<vmem>>, vector<8x8xf32>,
    %cst_103 = arith.constant 0.000000e+00 : f32
    %255 = vector.broadcast %cst_103 : f32 to vector<8x128xf32>
    %256 = vector.extract_strided_slice %151 {offsets = [0, 0], sizes = [1, 128], strides = [1, 1]} : vector<2x128xf32> to vector<1x128xf32>
    %257 = vector.extract_strided_slice %152 {offsets = [0, 0], sizes = [1, 128], strides = [1, 1]} : vector<2x128xf32> to vector<1x128xf32>
    %258 = vector.extract_strided_slice %150 {offsets = [0, 8], sizes = [8, 1], strides = [1, 1]} : vector<8x32xf32> to vector<8x1xf32>
    %259 = vector.extract_strided_slice %150 {offsets = [0, 9], sizes = [8, 1], strides = [1, 1]} : vector<8x32xf32> to vector<8x1xf32>
    %260 = vector.extract_strided_slice %145 {offsets = [0, 4], sizes = [8, 1], strides = [1, 1]} : vector<8x16xf32> to vector<8x1xf32>
    %261 = vector.broadcast %258 : vector<8x1xf32> to vector<8x128xf32>
    %262 = vector.broadcast %256 : vector<1x128xf32> to vector<8x128xf32>
    %263 = arith.subf %261, %262 : vector<8x128xf32>
    %264 = math.absf %263 : vector<8x128xf32>
    %cst_104 = arith.constant 1.000000e+00 : f32
    %265 = vector.broadcast %cst_104 : f32 to vector<8x128xf32>
    %266 = arith.subf %265, %264 : vector<8x128xf32>
    %cst_105 = arith.constant 0.000000e+00 : f32
    %267 = vector.broadcast %cst_105 : f32 to vector<8x128xf32>
    %268 = arith.maximumf %266, %267 : vector<8x128xf32>
    %269 = vector.broadcast %259 : vector<8x1xf32> to vector<8x128xf32>
    %270 = vector.broadcast %257 : vector<1x128xf32> to vector<8x128xf32>
    %271 = arith.subf %269, %270 : vector<8x128xf32>
    %272 = math.absf %271 : vector<8x128xf32>
    %cst_106 = arith.constant 1.000000e+00 : f32
    %273 = vector.broadcast %cst_106 : f32 to vector<8x128xf32>
    %274 = arith.subf %273, %272 : vector<8x128xf32>
    %cst_107 = arith.constant 0.000000e+00 : f32
    %275 = vector.broadcast %cst_107 : f32 to vector<8x128xf32>
    %276 = arith.maximumf %274, %275 : vector<8x128xf32>
    %277 = vector.broadcast %260 : vector<8x1xf32> to vector<8x128xf32>
    %278 = arith.mulf %277, %268 : vector<8x128xf32>
    %279 = arith.mulf %278, %276 : vector<8x128xf32>
    %280 = arith.addf %255, %279 : vector<8x128xf32>
    %281 = vector.extract_strided_slice %150 {offsets = [0, 10], sizes = [8, 1], strides = [1, 1]} : vector<8x32xf32> to vector<8x1xf32>
    %282 = vector.extract_strided_slice %150 {offsets = [0, 11], sizes = [8, 1], strides = [1, 1]} : vector<8x32xf32> to vector<8x1xf32>
    %283 = vector.extract_strided_slice %145 {offsets = [0, 5], sizes = [8, 1], strides = [1, 1]} : vector<8x16xf32> to vector<8x1xf32>
    %284 = vector.broadcast %281 : vector<8x1xf32> to vector<8x128xf32>
    %285 = vector.broadcast %256 : vector<1x128xf32> to vector<8x128xf32>
    %286 = arith.subf %284, %285 : vector<8x128xf32>
    %287 = math.absf %286 : vector<8x128xf32>
    %cst_108 = arith.constant 1.000000e+00 : f32
    %288 = vector.broadcast %cst_108 : f32 to vector<8x128xf32>
    %289 = arith.subf %288, %287 : vector<8x128xf32>
    %cst_109 = arith.constant 0.000000e+00 : f32
    %290 = vector.broadcast %cst_109 : f32 to vector<8x128xf32>
    %291 = arith.maximumf %289, %290 : vector<8x128xf32>
    %292 = vector.broadcast %282 : vector<8x1xf32> to vector<8x128xf32>
    %293 = vector.broadcast %257 : vector<1x128xf32> to vector<8x128xf32>
    %294 = arith.subf %292, %293 : vector<8x128xf32>
    %295 = math.absf %294 : vector<8x128xf32>
    %cst_110 = arith.constant 1.000000e+00 : f32
    %296 = vector.broadcast %cst_110 : f32 to vector<8x128xf32>
    %297 = arith.subf %296, %295 : vector<8x128xf32>
    %cst_111 = arith.constant 0.000000e+00 : f32
    %298 = vector.broadcast %cst_111 : f32 to vector<8x128xf32>
    %299 = arith.maximumf %297, %298 : vector<8x128xf32>
    %300 = vector.broadcast %283 : vector<8x1xf32> to vector<8x128xf32>
    %301 = arith.mulf %300, %291 : vector<8x128xf32>
    %302 = arith.mulf %301, %299 : vector<8x128xf32>
    %303 = arith.addf %280, %302 : vector<8x128xf32>
    %304 = vector.extract_strided_slice %151 {offsets = [1, 0], sizes = [1, 128], strides = [1, 1]} : vector<2x128xf32> to vector<1x128xf32>
    %305 = vector.extract_strided_slice %152 {offsets = [1, 0], sizes = [1, 128], strides = [1, 1]} : vector<2x128xf32> to vector<1x128xf32>
    %306 = vector.extract_strided_slice %150 {offsets = [0, 12], sizes = [8, 1], strides = [1, 1]} : vector<8x32xf32> to vector<8x1xf32>
    %307 = vector.extract_strided_slice %150 {offsets = [0, 13], sizes = [8, 1], strides = [1, 1]} : vector<8x32xf32> to vector<8x1xf32>
    %308 = vector.extract_strided_slice %145 {offsets = [0, 6], sizes = [8, 1], strides = [1, 1]} : vector<8x16xf32> to vector<8x1xf32>
    %309 = vector.broadcast %306 : vector<8x1xf32> to vector<8x128xf32>
    %310 = vector.broadcast %304 : vector<1x128xf32> to vector<8x128xf32>
    %311 = arith.subf %309, %310 : vector<8x128xf32>
    %312 = math.absf %311 : vector<8x128xf32>
    %cst_112 = arith.constant 1.000000e+00 : f32
    %313 = vector.broadcast %cst_112 : f32 to vector<8x128xf32>
    %314 = arith.subf %313, %312 : vector<8x128xf32>
    %cst_113 = arith.constant 0.000000e+00 : f32
    %315 = vector.broadcast %cst_113 : f32 to vector<8x128xf32>
    %316 = arith.maximumf %314, %315 : vector<8x128xf32>
    %317 = vector.broadcast %307 : vector<8x1xf32> to vector<8x128xf32>
    %318 = vector.broadcast %305 : vector<1x128xf32> to vector<8x128xf32>
    %319 = arith.subf %317, %318 : vector<8x128xf32>
    %320 = math.absf %319 : vector<8x128xf32>
    %cst_114 = arith.constant 1.000000e+00 : f32
    %321 = vector.broadcast %cst_114 : f32 to vector<8x128xf32>
    %322 = arith.subf %321, %320 : vector<8x128xf32>
    %cst_115 = arith.constant 0.000000e+00 : f32
    %323 = vector.broadcast %cst_115 : f32 to vector<8x128xf32>
    %324 = arith.maximumf %322, %323 : vector<8x128xf32>
    %325 = vector.broadcast %308 : vector<8x1xf32> to vector<8x128xf32>
    %326 = arith.mulf %325, %316 : vector<8x128xf32>
    %327 = arith.mulf %326, %324 : vector<8x128xf32>
    %328 = arith.addf %303, %327 : vector<8x128xf32>
    %329 = vector.extract_strided_slice %150 {offsets = [0, 14], sizes = [8, 1], strides = [1, 1]} : vector<8x32xf32> to vector<8x1xf32>
    %330 = vector.extract_strided_slice %150 {offsets = [0, 15], sizes = [8, 1], strides = [1, 1]} : vector<8x32xf32> to vector<8x1xf32>
    %331 = vector.extract_strided_slice %145 {offsets = [0, 7], sizes = [8, 1], strides = [1, 1]} : vector<8x16xf32> to vector<8x1xf32>
    %332 = vector.broadcast %329 : vector<8x1xf32> to vector<8x128xf32>
    %333 = vector.broadcast %304 : vector<1x128xf32> to vector<8x128xf32>
    %334 = arith.subf %332, %333 : vector<8x128xf32>
    %335 = math.absf %334 : vector<8x128xf32>
    %cst_116 = arith.constant 1.000000e+00 : f32
    %336 = vector.broadcast %cst_116 : f32 to vector<8x128xf32>
    %337 = arith.subf %336, %335 : vector<8x128xf32>
    %cst_117 = arith.constant 0.000000e+00 : f32
    %338 = vector.broadcast %cst_117 : f32 to vector<8x128xf32>
    %339 = arith.maximumf %337, %338 : vector<8x128xf32>
    %340 = vector.broadcast %330 : vector<8x1xf32> to vector<8x128xf32>
    %341 = vector.broadcast %305 : vector<1x128xf32> to vector<8x128xf32>
    %342 = arith.subf %340, %341 : vector<8x128xf32>
    %343 = math.absf %342 : vector<8x128xf32>
    %cst_118 = arith.constant 1.000000e+00 : f32
    %344 = vector.broadcast %cst_118 : f32 to vector<8x128xf32>
    %345 = arith.subf %344, %343 : vector<8x128xf32>
    %cst_119 = arith.constant 0.000000e+00 : f32
    %346 = vector.broadcast %cst_119 : f32 to vector<8x128xf32>
    %347 = arith.maximumf %345, %346 : vector<8x128xf32>
    %348 = vector.broadcast %331 : vector<8x1xf32> to vector<8x128xf32>
    %349 = arith.mulf %348, %339 : vector<8x128xf32>
    %350 = arith.mulf %349, %347 : vector<8x128xf32>
    %351 = arith.addf %328, %350 : vector<8x128xf32>
    %352 = vector.broadcast %122 : vector<1x128xf32> to vector<8x128xf32>
    %353 = arith.mulf %351, %352 : vector<8x128xf32>
    %354 = vector.extract_strided_slice %129 {offsets = [0, 8], sizes = [128, 8], strides = [1, 1]} : vector<128x32xf32> to vector<128x8xf32>
    %cst_120 = arith.constant dense<0.000000e+00> : vector<8x8xf32>
    %355 = tpu.matmul %353, %354, %cst_120 {dimension_numbers = #tpu.dot_dimension_numbers<[1], [0], [0], [1], [0, 0, 1, 1], [], []>} : vector<8x128xf32>, vector<128x8xf32>, vector<8x8xf32> -> vector<8x8xf32>
    %c0_121 = arith.constant 0 : index
    %c8_122 = arith.constant 8 : index
    %356 = vector.load %arg33[%c0_121, %c8_122] : memref<8x32xf32, #tpu.memory_space<vmem>>, vector<8x8xf32>
    tpu.vector_store %arg33[%c0_121, %c8_122], %355 {strides = array<i32>} : memref<8x32xf32, #tpu.memory_space<vmem>>, vector<8x8xf32>,
    %cst_123 = arith.constant 0.000000e+00 : f32
    %357 = vector.broadcast %cst_123 : f32 to vector<8x128xf32>
    %358 = vector.extract_strided_slice %151 {offsets = [0, 0], sizes = [1, 128], strides = [1, 1]} : vector<2x128xf32> to vector<1x128xf32>
    %359 = vector.extract_strided_slice %152 {offsets = [0, 0], sizes = [1, 128], strides = [1, 1]} : vector<2x128xf32> to vector<1x128xf32>
    %360 = vector.extract_strided_slice %150 {offsets = [0, 16], sizes = [8, 1], strides = [1, 1]} : vector<8x32xf32> to vector<8x1xf32>
    %361 = vector.extract_strided_slice %150 {offsets = [0, 17], sizes = [8, 1], strides = [1, 1]} : vector<8x32xf32> to vector<8x1xf32>
    %362 = vector.extract_strided_slice %145 {offsets = [0, 8], sizes = [8, 1], strides = [1, 1]} : vector<8x16xf32> to vector<8x1xf32>
    %363 = vector.broadcast %360 : vector<8x1xf32> to vector<8x128xf32>
    %364 = vector.broadcast %358 : vector<1x128xf32> to vector<8x128xf32>
    %365 = arith.subf %363, %364 : vector<8x128xf32>
    %366 = math.absf %365 : vector<8x128xf32>
    %cst_124 = arith.constant 1.000000e+00 : f32
    %367 = vector.broadcast %cst_124 : f32 to vector<8x128xf32>
    %368 = arith.subf %367, %366 : vector<8x128xf32>
    %cst_125 = arith.constant 0.000000e+00 : f32
    %369 = vector.broadcast %cst_125 : f32 to vector<8x128xf32>
    %370 = arith.maximumf %368, %369 : vector<8x128xf32>
    %371 = vector.broadcast %361 : vector<8x1xf32> to vector<8x128xf32>
    %372 = vector.broadcast %359 : vector<1x128xf32> to vector<8x128xf32>
    %373 = arith.subf %371, %372 : vector<8x128xf32>
    %374 = math.absf %373 : vector<8x128xf32>
    %cst_126 = arith.constant 1.000000e+00 : f32
    %375 = vector.broadcast %cst_126 : f32 to vector<8x128xf32>
    %376 = arith.subf %375, %374 : vector<8x128xf32>
    %cst_127 = arith.constant 0.000000e+00 : f32
    %377 = vector.broadcast %cst_127 : f32 to vector<8x128xf32>
    %378 = arith.maximumf %376, %377 : vector<8x128xf32>
    %379 = vector.broadcast %362 : vector<8x1xf32> to vector<8x128xf32>
    %380 = arith.mulf %379, %370 : vector<8x128xf32>
    %381 = arith.mulf %380, %378 : vector<8x128xf32>
    %382 = arith.addf %357, %381 : vector<8x128xf32>
    %383 = vector.extract_strided_slice %150 {offsets = [0, 18], sizes = [8, 1], strides = [1, 1]} : vector<8x32xf32> to vector<8x1xf32>
    %384 = vector.extract_strided_slice %150 {offsets = [0, 19], sizes = [8, 1], strides = [1, 1]} : vector<8x32xf32> to vector<8x1xf32>
    %385 = vector.extract_strided_slice %145 {offsets = [0, 9], sizes = [8, 1], strides = [1, 1]} : vector<8x16xf32> to vector<8x1xf32>
    %386 = vector.broadcast %383 : vector<8x1xf32> to vector<8x128xf32>
    %387 = vector.broadcast %358 : vector<1x128xf32> to vector<8x128xf32>
    %388 = arith.subf %386, %387 : vector<8x128xf32>
    %389 = math.absf %388 : vector<8x128xf32>
    %cst_128 = arith.constant 1.000000e+00 : f32
    %390 = vector.broadcast %cst_128 : f32 to vector<8x128xf32>
    %391 = arith.subf %390, %389 : vector<8x128xf32>
    %cst_129 = arith.constant 0.000000e+00 : f32
    %392 = vector.broadcast %cst_129 : f32 to vector<8x128xf32>
    %393 = arith.maximumf %391, %392 : vector<8x128xf32>
    %394 = vector.broadcast %384 : vector<8x1xf32> to vector<8x128xf32>
    %395 = vector.broadcast %359 : vector<1x128xf32> to vector<8x128xf32>
    %396 = arith.subf %394, %395 : vector<8x128xf32>
    %397 = math.absf %396 : vector<8x128xf32>
    %cst_130 = arith.constant 1.000000e+00 : f32
    %398 = vector.broadcast %cst_130 : f32 to vector<8x128xf32>
    %399 = arith.subf %398, %397 : vector<8x128xf32>
    %cst_131 = arith.constant 0.000000e+00 : f32
    %400 = vector.broadcast %cst_131 : f32 to vector<8x128xf32>
    %401 = arith.maximumf %399, %400 : vector<8x128xf32>
    %402 = vector.broadcast %385 : vector<8x1xf32> to vector<8x128xf32>
    %403 = arith.mulf %402, %393 : vector<8x128xf32>
    %404 = arith.mulf %403, %401 : vector<8x128xf32>
    %405 = arith.addf %382, %404 : vector<8x128xf32>
    %406 = vector.extract_strided_slice %151 {offsets = [1, 0], sizes = [1, 128], strides = [1, 1]} : vector<2x128xf32> to vector<1x128xf32>
    %407 = vector.extract_strided_slice %152 {offsets = [1, 0], sizes = [1, 128], strides = [1, 1]} : vector<2x128xf32> to vector<1x128xf32>
    %408 = vector.extract_strided_slice %150 {offsets = [0, 20], sizes = [8, 1], strides = [1, 1]} : vector<8x32xf32> to vector<8x1xf32>
    %409 = vector.extract_strided_slice %150 {offsets = [0, 21], sizes = [8, 1], strides = [1, 1]} : vector<8x32xf32> to vector<8x1xf32>
    %410 = vector.extract_strided_slice %145 {offsets = [0, 10], sizes = [8, 1], strides = [1, 1]} : vector<8x16xf32> to vector<8x1xf32>
    %411 = vector.broadcast %408 : vector<8x1xf32> to vector<8x128xf32>
    %412 = vector.broadcast %406 : vector<1x128xf32> to vector<8x128xf32>
    %413 = arith.subf %411, %412 : vector<8x128xf32>
    %414 = math.absf %413 : vector<8x128xf32>
    %cst_132 = arith.constant 1.000000e+00 : f32
    %415 = vector.broadcast %cst_132 : f32 to vector<8x128xf32>
    %416 = arith.subf %415, %414 : vector<8x128xf32>
    %cst_133 = arith.constant 0.000000e+00 : f32
    %417 = vector.broadcast %cst_133 : f32 to vector<8x128xf32>
    %418 = arith.maximumf %416, %417 : vector<8x128xf32>
    %419 = vector.broadcast %409 : vector<8x1xf32> to vector<8x128xf32>
    %420 = vector.broadcast %407 : vector<1x128xf32> to vector<8x128xf32>
    %421 = arith.subf %419, %420 : vector<8x128xf32>
    %422 = math.absf %421 : vector<8x128xf32>
    %cst_134 = arith.constant 1.000000e+00 : f32
    %423 = vector.broadcast %cst_134 : f32 to vector<8x128xf32>
    %424 = arith.subf %423, %422 : vector<8x128xf32>
    %cst_135 = arith.constant 0.000000e+00 : f32
    %425 = vector.broadcast %cst_135 : f32 to vector<8x128xf32>
    %426 = arith.maximumf %424, %425 : vector<8x128xf32>
    %427 = vector.broadcast %410 : vector<8x1xf32> to vector<8x128xf32>
    %428 = arith.mulf %427, %418 : vector<8x128xf32>
    %429 = arith.mulf %428, %426 : vector<8x128xf32>
    %430 = arith.addf %405, %429 : vector<8x128xf32>
    %431 = vector.extract_strided_slice %150 {offsets = [0, 22], sizes = [8, 1], strides = [1, 1]} : vector<8x32xf32> to vector<8x1xf32>
    %432 = vector.extract_strided_slice %150 {offsets = [0, 23], sizes = [8, 1], strides = [1, 1]} : vector<8x32xf32> to vector<8x1xf32>
    %433 = vector.extract_strided_slice %145 {offsets = [0, 11], sizes = [8, 1], strides = [1, 1]} : vector<8x16xf32> to vector<8x1xf32>
    %434 = vector.broadcast %431 : vector<8x1xf32> to vector<8x128xf32>
    %435 = vector.broadcast %406 : vector<1x128xf32> to vector<8x128xf32>
    %436 = arith.subf %434, %435 : vector<8x128xf32>
    %437 = math.absf %436 : vector<8x128xf32>
    %cst_136 = arith.constant 1.000000e+00 : f32
    %438 = vector.broadcast %cst_136 : f32 to vector<8x128xf32>
    %439 = arith.subf %438, %437 : vector<8x128xf32>
    %cst_137 = arith.constant 0.000000e+00 : f32
    %440 = vector.broadcast %cst_137 : f32 to vector<8x128xf32>
    %441 = arith.maximumf %439, %440 : vector<8x128xf32>
    %442 = vector.broadcast %432 : vector<8x1xf32> to vector<8x128xf32>
    %443 = vector.broadcast %407 : vector<1x128xf32> to vector<8x128xf32>
    %444 = arith.subf %442, %443 : vector<8x128xf32>
    %445 = math.absf %444 : vector<8x128xf32>
    %cst_138 = arith.constant 1.000000e+00 : f32
    %446 = vector.broadcast %cst_138 : f32 to vector<8x128xf32>
    %447 = arith.subf %446, %445 : vector<8x128xf32>
    %cst_139 = arith.constant 0.000000e+00 : f32
    %448 = vector.broadcast %cst_139 : f32 to vector<8x128xf32>
    %449 = arith.maximumf %447, %448 : vector<8x128xf32>
    %450 = vector.broadcast %433 : vector<8x1xf32> to vector<8x128xf32>
    %451 = arith.mulf %450, %441 : vector<8x128xf32>
    %452 = arith.mulf %451, %449 : vector<8x128xf32>
    %453 = arith.addf %430, %452 : vector<8x128xf32>
    %454 = vector.broadcast %122 : vector<1x128xf32> to vector<8x128xf32>
    %455 = arith.mulf %453, %454 : vector<8x128xf32>
    %456 = vector.extract_strided_slice %129 {offsets = [0, 16], sizes = [128, 8], strides = [1, 1]} : vector<128x32xf32> to vector<128x8xf32>
    %cst_140 = arith.constant dense<0.000000e+00> : vector<8x8xf32>
    %457 = tpu.matmul %455, %456, %cst_140 {dimension_numbers = #tpu.dot_dimension_numbers<[1], [0], [0], [1], [0, 0, 1, 1], [], []>} : vector<8x128xf32>, vector<128x8xf32>, vector<8x8xf32> -> vector<8x8xf32>
    %c0_141 = arith.constant 0 : index
    %c16_142 = arith.constant 16 : index
    %458 = vector.load %arg33[%c0_141, %c16_142] : memref<8x32xf32, #tpu.memory_space<vmem>>, vector<8x8xf32>
    tpu.vector_store %arg33[%c0_141, %c16_142], %457 {strides = array<i32>} : memref<8x32xf32, #tpu.memory_space<vmem>>, vector<8x8xf32>,
    %cst_143 = arith.constant 0.000000e+00 : f32
    %459 = vector.broadcast %cst_143 : f32 to vector<8x128xf32>
    %460 = vector.extract_strided_slice %151 {offsets = [0, 0], sizes = [1, 128], strides = [1, 1]} : vector<2x128xf32> to vector<1x128xf32>
    %461 = vector.extract_strided_slice %152 {offsets = [0, 0], sizes = [1, 128], strides = [1, 1]} : vector<2x128xf32> to vector<1x128xf32>
    %462 = vector.extract_strided_slice %150 {offsets = [0, 24], sizes = [8, 1], strides = [1, 1]} : vector<8x32xf32> to vector<8x1xf32>
    %463 = vector.extract_strided_slice %150 {offsets = [0, 25], sizes = [8, 1], strides = [1, 1]} : vector<8x32xf32> to vector<8x1xf32>
    %464 = vector.extract_strided_slice %145 {offsets = [0, 12], sizes = [8, 1], strides = [1, 1]} : vector<8x16xf32> to vector<8x1xf32>
    %465 = vector.broadcast %462 : vector<8x1xf32> to vector<8x128xf32>
    %466 = vector.broadcast %460 : vector<1x128xf32> to vector<8x128xf32>
    %467 = arith.subf %465, %466 : vector<8x128xf32>
    %468 = math.absf %467 : vector<8x128xf32>
    %cst_144 = arith.constant 1.000000e+00 : f32
    %469 = vector.broadcast %cst_144 : f32 to vector<8x128xf32>
    %470 = arith.subf %469, %468 : vector<8x128xf32>
    %cst_145 = arith.constant 0.000000e+00 : f32
    %471 = vector.broadcast %cst_145 : f32 to vector<8x128xf32>
    %472 = arith.maximumf %470, %471 : vector<8x128xf32>
    %473 = vector.broadcast %463 : vector<8x1xf32> to vector<8x128xf32>
    %474 = vector.broadcast %461 : vector<1x128xf32> to vector<8x128xf32>
    %475 = arith.subf %473, %474 : vector<8x128xf32>
    %476 = math.absf %475 : vector<8x128xf32>
    %cst_146 = arith.constant 1.000000e+00 : f32
    %477 = vector.broadcast %cst_146 : f32 to vector<8x128xf32>
    %478 = arith.subf %477, %476 : vector<8x128xf32>
    %cst_147 = arith.constant 0.000000e+00 : f32
    %479 = vector.broadcast %cst_147 : f32 to vector<8x128xf32>
    %480 = arith.maximumf %478, %479 : vector<8x128xf32>
    %481 = vector.broadcast %464 : vector<8x1xf32> to vector<8x128xf32>
    %482 = arith.mulf %481, %472 : vector<8x128xf32>
    %483 = arith.mulf %482, %480 : vector<8x128xf32>
    %484 = arith.addf %459, %483 : vector<8x128xf32>
    %485 = vector.extract_strided_slice %150 {offsets = [0, 26], sizes = [8, 1], strides = [1, 1]} : vector<8x32xf32> to vector<8x1xf32>
    %486 = vector.extract_strided_slice %150 {offsets = [0, 27], sizes = [8, 1], strides = [1, 1]} : vector<8x32xf32> to vector<8x1xf32>
    %487 = vector.extract_strided_slice %145 {offsets = [0, 13], sizes = [8, 1], strides = [1, 1]} : vector<8x16xf32> to vector<8x1xf32>
    %488 = vector.broadcast %485 : vector<8x1xf32> to vector<8x128xf32>
    %489 = vector.broadcast %460 : vector<1x128xf32> to vector<8x128xf32>
    %490 = arith.subf %488, %489 : vector<8x128xf32>
    %491 = math.absf %490 : vector<8x128xf32>
    %cst_148 = arith.constant 1.000000e+00 : f32
    %492 = vector.broadcast %cst_148 : f32 to vector<8x128xf32>
    %493 = arith.subf %492, %491 : vector<8x128xf32>
    %cst_149 = arith.constant 0.000000e+00 : f32
    %494 = vector.broadcast %cst_149 : f32 to vector<8x128xf32>
    %495 = arith.maximumf %493, %494 : vector<8x128xf32>
    %496 = vector.broadcast %486 : vector<8x1xf32> to vector<8x128xf32>
    %497 = vector.broadcast %461 : vector<1x128xf32> to vector<8x128xf32>
    %498 = arith.subf %496, %497 : vector<8x128xf32>
    %499 = math.absf %498 : vector<8x128xf32>
    %cst_150 = arith.constant 1.000000e+00 : f32
    %500 = vector.broadcast %cst_150 : f32 to vector<8x128xf32>
    %501 = arith.subf %500, %499 : vector<8x128xf32>
    %cst_151 = arith.constant 0.000000e+00 : f32
    %502 = vector.broadcast %cst_151 : f32 to vector<8x128xf32>
    %503 = arith.maximumf %501, %502 : vector<8x128xf32>
    %504 = vector.broadcast %487 : vector<8x1xf32> to vector<8x128xf32>
    %505 = arith.mulf %504, %495 : vector<8x128xf32>
    %506 = arith.mulf %505, %503 : vector<8x128xf32>
    %507 = arith.addf %484, %506 : vector<8x128xf32>
    %508 = vector.extract_strided_slice %151 {offsets = [1, 0], sizes = [1, 128], strides = [1, 1]} : vector<2x128xf32> to vector<1x128xf32>
    %509 = vector.extract_strided_slice %152 {offsets = [1, 0], sizes = [1, 128], strides = [1, 1]} : vector<2x128xf32> to vector<1x128xf32>
    %510 = vector.extract_strided_slice %150 {offsets = [0, 28], sizes = [8, 1], strides = [1, 1]} : vector<8x32xf32> to vector<8x1xf32>
    %511 = vector.extract_strided_slice %150 {offsets = [0, 29], sizes = [8, 1], strides = [1, 1]} : vector<8x32xf32> to vector<8x1xf32>
    %512 = vector.extract_strided_slice %145 {offsets = [0, 14], sizes = [8, 1], strides = [1, 1]} : vector<8x16xf32> to vector<8x1xf32>
    %513 = vector.broadcast %510 : vector<8x1xf32> to vector<8x128xf32>
    %514 = vector.broadcast %508 : vector<1x128xf32> to vector<8x128xf32>
    %515 = arith.subf %513, %514 : vector<8x128xf32>
    %516 = math.absf %515 : vector<8x128xf32>
    %cst_152 = arith.constant 1.000000e+00 : f32
    %517 = vector.broadcast %cst_152 : f32 to vector<8x128xf32>
    %518 = arith.subf %517, %516 : vector<8x128xf32>
    %cst_153 = arith.constant 0.000000e+00 : f32
    %519 = vector.broadcast %cst_153 : f32 to vector<8x128xf32>
    %520 = arith.maximumf %518, %519 : vector<8x128xf32>
    %521 = vector.broadcast %511 : vector<8x1xf32> to vector<8x128xf32>
    %522 = vector.broadcast %509 : vector<1x128xf32> to vector<8x128xf32>
    %523 = arith.subf %521, %522 : vector<8x128xf32>
    %524 = math.absf %523 : vector<8x128xf32>
    %cst_154 = arith.constant 1.000000e+00 : f32
    %525 = vector.broadcast %cst_154 : f32 to vector<8x128xf32>
    %526 = arith.subf %525, %524 : vector<8x128xf32>
    %cst_155 = arith.constant 0.000000e+00 : f32
    %527 = vector.broadcast %cst_155 : f32 to vector<8x128xf32>
    %528 = arith.maximumf %526, %527 : vector<8x128xf32>
    %529 = vector.broadcast %512 : vector<8x1xf32> to vector<8x128xf32>
    %530 = arith.mulf %529, %520 : vector<8x128xf32>
    %531 = arith.mulf %530, %528 : vector<8x128xf32>
    %532 = arith.addf %507, %531 : vector<8x128xf32>
    %533 = vector.extract_strided_slice %150 {offsets = [0, 30], sizes = [8, 1], strides = [1, 1]} : vector<8x32xf32> to vector<8x1xf32>
    %534 = vector.extract_strided_slice %150 {offsets = [0, 31], sizes = [8, 1], strides = [1, 1]} : vector<8x32xf32> to vector<8x1xf32>
    %535 = vector.extract_strided_slice %145 {offsets = [0, 15], sizes = [8, 1], strides = [1, 1]} : vector<8x16xf32> to vector<8x1xf32>
    %536 = vector.broadcast %533 : vector<8x1xf32> to vector<8x128xf32>
    %537 = vector.broadcast %508 : vector<1x128xf32> to vector<8x128xf32>
    %538 = arith.subf %536, %537 : vector<8x128xf32>
    %539 = math.absf %538 : vector<8x128xf32>
    %cst_156 = arith.constant 1.000000e+00 : f32
    %540 = vector.broadcast %cst_156 : f32 to vector<8x128xf32>
    %541 = arith.subf %540, %539 : vector<8x128xf32>
    %cst_157 = arith.constant 0.000000e+00 : f32
    %542 = vector.broadcast %cst_157 : f32 to vector<8x128xf32>
    %543 = arith.maximumf %541, %542 : vector<8x128xf32>
    %544 = vector.broadcast %534 : vector<8x1xf32> to vector<8x128xf32>
    %545 = vector.broadcast %509 : vector<1x128xf32> to vector<8x128xf32>
    %546 = arith.subf %544, %545 : vector<8x128xf32>
    %547 = math.absf %546 : vector<8x128xf32>
    %cst_158 = arith.constant 1.000000e+00 : f32
    %548 = vector.broadcast %cst_158 : f32 to vector<8x128xf32>
    %549 = arith.subf %548, %547 : vector<8x128xf32>
    %cst_159 = arith.constant 0.000000e+00 : f32
    %550 = vector.broadcast %cst_159 : f32 to vector<8x128xf32>
    %551 = arith.maximumf %549, %550 : vector<8x128xf32>
    %552 = vector.broadcast %535 : vector<8x1xf32> to vector<8x128xf32>
    %553 = arith.mulf %552, %543 : vector<8x128xf32>
    %554 = arith.mulf %553, %551 : vector<8x128xf32>
    %555 = arith.addf %532, %554 : vector<8x128xf32>
    %556 = vector.broadcast %122 : vector<1x128xf32> to vector<8x128xf32>
    %557 = arith.mulf %555, %556 : vector<8x128xf32>
    %558 = vector.extract_strided_slice %129 {offsets = [0, 24], sizes = [128, 8], strides = [1, 1]} : vector<128x32xf32> to vector<128x8xf32>
    %cst_160 = arith.constant dense<0.000000e+00> : vector<8x8xf32>
    %559 = tpu.matmul %557, %558, %cst_160 {dimension_numbers = #tpu.dot_dimension_numbers<[1], [0], [0], [1], [0, 0, 1, 1], [], []>} : vector<8x128xf32>, vector<128x8xf32>, vector<8x8xf32> -> vector<8x8xf32>
    %c0_161 = arith.constant 0 : index
    %c24_162 = arith.constant 24 : index
    %560 = vector.load %arg33[%c0_161, %c24_162] : memref<8x32xf32, #tpu.memory_space<vmem>>, vector<8x8xf32>
    tpu.vector_store %arg33[%c0_161, %c24_162], %559 {strides = array<i32>} : memref<8x32xf32, #tpu.memory_space<vmem>>, vector<8x8xf32>,
    %c0_163 = arith.constant 0 : index
    %c0_164 = arith.constant 0 : index
    %561 = vector.load %arg33[%c0_163, %c0_164] : memref<8x32xf32, #tpu.memory_space<vmem>>, vector<8x32xf32>
    %c0_165 = arith.constant 0 : index
    %c0_166 = arith.constant 0 : index
    %562 = vector.load %arg22[%c0_165, %c0_166] : memref<32x32xf32, #tpu.memory_space<vmem>>, vector<32x32xf32>
    %cst_167 = arith.constant dense<0.000000e+00> : vector<8x32xf32>
    %563 = tpu.matmul %561, %562, %cst_167 {dimension_numbers = #tpu.dot_dimension_numbers<[1], [0], [0], [1], [0, 0, 1, 1], [], []>} : vector<8x32xf32>, vector<32x32xf32>, vector<8x32xf32> -> vector<8x32xf32>
    %c0_168 = arith.constant 0 : index
    %c0_169 = arith.constant 0 : index
    %564 = vector.load %arg23[%c0_168, %c0_169] : memref<1x32xf32, #tpu.memory_space<vmem>>, vector<1x32xf32>
    %565 = vector.broadcast %564 : vector<1x32xf32> to vector<8x32xf32>
    %566 = arith.addf %563, %565 : vector<8x32xf32>
    %567 = arith.addf %117, %566 : vector<8x32xf32>
    %c0_170 = arith.constant 0 : index
    %c0_171 = arith.constant 0 : index
    %568 = vector.load %arg24[%c0_170, %c0_171] : memref<1x32xf32, #tpu.memory_space<vmem>>, vector<1x32xf32>
    %c0_172 = arith.constant 0 : index
    %c0_173 = arith.constant 0 : index
    %569 = vector.load %arg25[%c0_172, %c0_173] : memref<1x32xf32, #tpu.memory_space<vmem>>, vector<1x32xf32>
    %cst_174 = arith.constant dense<0.000000e+00> : vector<8xf32>
    %570 = vector.multi_reduction <add>, %567, %cst_174 [1] : vector<8x32xf32> to vector<8xf32>
    %571 = vector.shape_cast %570 : vector<8xf32> to vector<8x1xf32>
    %cst_175 = arith.constant 3.200000e+01 : f32
    %572 = vector.broadcast %cst_175 : f32 to vector<8x1xf32>
    %573 = arith.divf %571, %572 : vector<8x1xf32>
    %574 = vector.broadcast %573 : vector<8x1xf32> to vector<8x32xf32>
    %575 = arith.subf %567, %574 : vector<8x32xf32>
    %576 = arith.mulf %575, %575 : vector<8x32xf32>
    %cst_176 = arith.constant dense<0.000000e+00> : vector<8xf32>
    %577 = vector.multi_reduction <add>, %576, %cst_176 [1] : vector<8x32xf32> to vector<8xf32>
    %578 = vector.shape_cast %577 : vector<8xf32> to vector<8x1xf32>
    %cst_177 = arith.constant 3.200000e+01 : f32
    %579 = vector.broadcast %cst_177 : f32 to vector<8x1xf32>
    %580 = arith.divf %578, %579 : vector<8x1xf32>
    %581 = vector.broadcast %573 : vector<8x1xf32> to vector<8x32xf32>
    %582 = arith.subf %567, %581 : vector<8x32xf32>
    %cst_178 = arith.constant 9.99999974E-6 : f32
    %583 = vector.broadcast %cst_178 : f32 to vector<8x1xf32>
    %584 = arith.addf %580, %583 : vector<8x1xf32>
    %585 = math.rsqrt %584 : vector<8x1xf32>
    %586 = vector.broadcast %585 : vector<8x1xf32> to vector<8x32xf32>
    %587 = arith.mulf %582, %586 : vector<8x32xf32>
    %588 = vector.broadcast %568 : vector<1x32xf32> to vector<8x32xf32>
    %589 = arith.mulf %587, %588 : vector<8x32xf32>
    %590 = vector.broadcast %569 : vector<1x32xf32> to vector<8x32xf32>
    %591 = arith.addf %589, %590 : vector<8x32xf32>
    %c0_179 = arith.constant 0 : index
    %c0_180 = arith.constant 0 : index
    %592 = vector.load %arg26[%c0_179, %c0_180] : memref<32x64xf32, #tpu.memory_space<vmem>>, vector<32x64xf32>
    %cst_181 = arith.constant dense<0.000000e+00> : vector<8x64xf32>
    %593 = tpu.matmul %591, %592, %cst_181 {dimension_numbers = #tpu.dot_dimension_numbers<[1], [0], [0], [1], [0, 0, 1, 1], [], []>} : vector<8x32xf32>, vector<32x64xf32>, vector<8x64xf32> -> vector<8x64xf32>
    %c0_182 = arith.constant 0 : index
    %c0_183 = arith.constant 0 : index
    %594 = vector.load %arg27[%c0_182, %c0_183] : memref<1x64xf32, #tpu.memory_space<vmem>>, vector<1x64xf32>
    %595 = vector.broadcast %594 : vector<1x64xf32> to vector<8x64xf32>
    %596 = arith.addf %593, %595 : vector<8x64xf32>
    %cst_184 = arith.constant 0.000000e+00 : f32
    %597 = vector.broadcast %cst_184 : f32 to vector<8x64xf32>
    %598 = arith.maximumf %596, %597 : vector<8x64xf32>
    %c0_185 = arith.constant 0 : index
    %c0_186 = arith.constant 0 : index
    %599 = vector.load %arg28[%c0_185, %c0_186] : memref<64x32xf32, #tpu.memory_space<vmem>>, vector<64x32xf32>
    %cst_187 = arith.constant dense<0.000000e+00> : vector<8x32xf32>
    %600 = tpu.matmul %598, %599, %cst_187 {dimension_numbers = #tpu.dot_dimension_numbers<[1], [0], [0], [1], [0, 0, 1, 1], [], []>} : vector<8x64xf32>, vector<64x32xf32>, vector<8x32xf32> -> vector<8x32xf32>
    %c0_188 = arith.constant 0 : index
    %c0_189 = arith.constant 0 : index
    %601 = vector.load %arg29[%c0_188, %c0_189] : memref<1x32xf32, #tpu.memory_space<vmem>>, vector<1x32xf32>
    %602 = vector.broadcast %601 : vector<1x32xf32> to vector<8x32xf32>
    %603 = arith.addf %600, %602 : vector<8x32xf32>
    %604 = arith.addf %591, %603 : vector<8x32xf32>
    %c0_190 = arith.constant 0 : index
    %c0_191 = arith.constant 0 : index
    %605 = vector.load %arg30[%c0_190, %c0_191] : memref<1x32xf32, #tpu.memory_space<vmem>>, vector<1x32xf32>
    %c0_192 = arith.constant 0 : index
    %c0_193 = arith.constant 0 : index
    %606 = vector.load %arg31[%c0_192, %c0_193] : memref<1x32xf32, #tpu.memory_space<vmem>>, vector<1x32xf32>
    %cst_194 = arith.constant dense<0.000000e+00> : vector<8xf32>
    %607 = vector.multi_reduction <add>, %604, %cst_194 [1] : vector<8x32xf32> to vector<8xf32>
    %608 = vector.shape_cast %607 : vector<8xf32> to vector<8x1xf32>
    %cst_195 = arith.constant 3.200000e+01 : f32
    %609 = vector.broadcast %cst_195 : f32 to vector<8x1xf32>
    %610 = arith.divf %608, %609 : vector<8x1xf32>
    %611 = vector.broadcast %610 : vector<8x1xf32> to vector<8x32xf32>
    %612 = arith.subf %604, %611 : vector<8x32xf32>
    %613 = arith.mulf %612, %612 : vector<8x32xf32>
    %cst_196 = arith.constant dense<0.000000e+00> : vector<8xf32>
    %614 = vector.multi_reduction <add>, %613, %cst_196 [1] : vector<8x32xf32> to vector<8xf32>
    %615 = vector.shape_cast %614 : vector<8xf32> to vector<8x1xf32>
    %cst_197 = arith.constant 3.200000e+01 : f32
    %616 = vector.broadcast %cst_197 : f32 to vector<8x1xf32>
    %617 = arith.divf %615, %616 : vector<8x1xf32>
    %618 = vector.broadcast %610 : vector<8x1xf32> to vector<8x32xf32>
    %619 = arith.subf %604, %618 : vector<8x32xf32>
    %cst_198 = arith.constant 9.99999974E-6 : f32
    %620 = vector.broadcast %cst_198 : f32 to vector<8x1xf32>
    %621 = arith.addf %617, %620 : vector<8x1xf32>
    %622 = math.rsqrt %621 : vector<8x1xf32>
    %623 = vector.broadcast %622 : vector<8x1xf32> to vector<8x32xf32>
    %624 = arith.mulf %619, %623 : vector<8x32xf32>
    %625 = vector.broadcast %605 : vector<1x32xf32> to vector<8x32xf32>
    %626 = arith.mulf %624, %625 : vector<8x32xf32>
    %627 = vector.broadcast %606 : vector<1x32xf32> to vector<8x32xf32>
    %628 = arith.addf %626, %627 : vector<8x32xf32>
    %c0_199 = arith.constant 0 : index
    %c0_200 = arith.constant 0 : index
    %c0_201 = arith.constant 0 : index
    %629 = vector.load %arg32[%c0_199, %c0_200, %c0_201] : memref<1x8x32xf32, #tpu.memory_space<vmem>>, vector<1x8x32xf32>
    %630 = vector.shape_cast %629 : vector<1x8x32xf32> to vector<8x32xf32>
    %631 = vector.shape_cast %628 : vector<8x32xf32> to vector<1x8x32xf32>
    tpu.vector_store %arg32[%c0_199, %c0_200, %c0_201], %631 {strides = array<i32>} : memref<1x8x32xf32, #tpu.memory_space<vmem>>, vector<1x8x32xf32>,
    return
  }
  func.func @transform_0(%arg0: i32) -> (i32, i32, i32) {
    %c0_i32 = arith.constant 0 : i32
    %c0_i32_0 = arith.constant 0 : i32
    %c0_i32_1 = arith.constant 0 : i32
    return %arg0, %c0_i32, %c0_i32_0 : i32, i32, i32
  }
  func.func @transform_1(%arg0: i32) -> (i32, i32, i32) {
    %c0_i32 = arith.constant 0 : i32
    %c0_i32_0 = arith.constant 0 : i32
    %c0_i32_1 = arith.constant 0 : i32
    return %arg0, %c0_i32, %c0_i32_0 : i32, i32, i32
  }
  func.func @transform_2(%arg0: i32) -> (i32, i32, i32) {
    %c0_i32 = arith.constant 0 : i32
    %c0_i32_0 = arith.constant 0 : i32
    %c0_i32_1 = arith.constant 0 : i32
    return %arg0, %c0_i32, %c0_i32_0 : i32, i32, i32
  }
  func.func @transform_3(%arg0: i32) -> (i32, i32, i32) {
    %c0_i32 = arith.constant 0 : i32
    %c0_i32_0 = arith.constant 0 : i32
    %c0_i32_1 = arith.constant 0 : i32
    return %arg0, %c0_i32, %c0_i32_0 : i32, i32, i32
  }
  func.func @transform_4(%arg0: i32) -> (i32, i32, i32) {
    %c0_i32 = arith.constant 0 : i32
    %c0_i32_0 = arith.constant 0 : i32
    %c0_i32_1 = arith.constant 0 : i32
    return %arg0, %c0_i32, %c0_i32_0 : i32, i32, i32
  }
  func.func @transform_5(%arg0: i32) -> (i32, i32) {
    %c0_i32 = arith.constant 0 : i32
    %c0_i32_0 = arith.constant 0 : i32
    %c0_i32_1 = arith.constant 0 : i32
    return %c0_i32, %c0_i32_0 : i32, i32
  }
  func.func @transform_6(%arg0: i32) -> (i32, i32) {
    %c0_i32 = arith.constant 0 : i32
    %c0_i32_0 = arith.constant 0 : i32
    %c0_i32_1 = arith.constant 0 : i32
    return %c0_i32, %c0_i32_0 : i32, i32
  }
  func.func @transform_7(%arg0: i32) -> (i32, i32) {
    %c0_i32 = arith.constant 0 : i32
    %c0_i32_0 = arith.constant 0 : i32
    %c0_i32_1 = arith.constant 0 : i32
    return %c0_i32, %c0_i32_0 : i32, i32
  }
  func.func @transform_8(%arg0: i32) -> (i32, i32) {
    %c0_i32 = arith.constant 0 : i32
    %c0_i32_0 = arith.constant 0 : i32
    %c0_i32_1 = arith.constant 0 : i32
    return %c0_i32, %c0_i32_0 : i32, i32
  }
  func.func @transform_9(%arg0: i32) -> (i32, i32) {
    %c0_i32 = arith.constant 0 : i32
    %c0_i32_0 = arith.constant 0 : i32
    %c0_i32_1 = arith.constant 0 : i32
    return %c0_i32, %c0_i32_0 : i32, i32
  }
  func.func @transform_10(%arg0: i32) -> (i32, i32) {
    %c0_i32 = arith.constant 0 : i32
    %c0_i32_0 = arith.constant 0 : i32
    %c0_i32_1 = arith.constant 0 : i32
    return %c0_i32, %c0_i32_0 : i32, i32
  }
  func.func @transform_11(%arg0: i32) -> (i32, i32) {
    %c0_i32 = arith.constant 0 : i32
    %c0_i32_0 = arith.constant 0 : i32
    %c0_i32_1 = arith.constant 0 : i32
    return %c0_i32, %c0_i32_0 : i32, i32
  }
  func.func @transform_12(%arg0: i32) -> (i32, i32) {
    %c0_i32 = arith.constant 0 : i32
    %c0_i32_0 = arith.constant 0 : i32
    %c0_i32_1 = arith.constant 0 : i32
    return %c0_i32, %c0_i32_0 : i32, i32
  }
  func.func @transform_13(%arg0: i32) -> (i32, i32) {
    %c0_i32 = arith.constant 0 : i32
    %c0_i32_0 = arith.constant 0 : i32
    %c0_i32_1 = arith.constant 0 : i32
    return %c0_i32, %c0_i32_0 : i32, i32
  }
  func.func @transform_14(%arg0: i32) -> (i32, i32) {
    %c0_i32 = arith.constant 0 : i32
    %c0_i32_0 = arith.constant 0 : i32
    %c0_i32_1 = arith.constant 0 : i32
    return %c0_i32, %c0_i32_0 : i32, i32
  }
  func.func @transform_15(%arg0: i32) -> (i32, i32) {
    %c0_i32 = arith.constant 0 : i32
    %c0_i32_0 = arith.constant 0 : i32
    %c0_i32_1 = arith.constant 0 : i32
    return %c0_i32, %c0_i32_0 : i32, i32
  }
  func.func @transform_16(%arg0: i32) -> (i32, i32) {
    %c0_i32 = arith.constant 0 : i32
    %c0_i32_0 = arith.constant 0 : i32
    %c0_i32_1 = arith.constant 0 : i32
    return %c0_i32, %c0_i32_0 : i32, i32
  }
  func.func @transform_17(%arg0: i32) -> (i32, i32) {
    %c0_i32 = arith.constant 0 : i32
    %c0_i32_0 = arith.constant 0 : i32
    %c0_i32_1 = arith.constant 0 : i32
    return %c0_i32, %c0_i32_0 : i32, i32
  }
  func.func @transform_18(%arg0: i32) -> (i32, i32) {
    %c0_i32 = arith.constant 0 : i32
    %c0_i32_0 = arith.constant 0 : i32
    %c0_i32_1 = arith.constant 0 : i32
    return %c0_i32, %c0_i32_0 : i32, i32
  }
  func.func @transform_19(%arg0: i32) -> (i32, i32) {
    %c0_i32 = arith.constant 0 : i32
    %c0_i32_0 = arith.constant 0 : i32
    %c0_i32_1 = arith.constant 0 : i32
    return %c0_i32, %c0_i32_0 : i32, i32
  }
  func.func @transform_20(%arg0: i32) -> (i32, i32) {
    %c0_i32 = arith.constant 0 : i32
    %c0_i32_0 = arith.constant 0 : i32
    %c0_i32_1 = arith.constant 0 : i32
    return %c0_i32, %c0_i32_0 : i32, i32
  }
  func.func @transform_21(%arg0: i32) -> (i32, i32) {
    %c0_i32 = arith.constant 0 : i32
    %c0_i32_0 = arith.constant 0 : i32
    %c0_i32_1 = arith.constant 0 : i32
    return %c0_i32, %c0_i32_0 : i32, i32
  }
  func.func @transform_22(%arg0: i32) -> (i32, i32) {
    %c0_i32 = arith.constant 0 : i32
    %c0_i32_0 = arith.constant 0 : i32
    %c0_i32_1 = arith.constant 0 : i32
    return %c0_i32, %c0_i32_0 : i32, i32
  }
  func.func @transform_23(%arg0: i32) -> (i32, i32) {
    %c0_i32 = arith.constant 0 : i32
    %c0_i32_0 = arith.constant 0 : i32
    %c0_i32_1 = arith.constant 0 : i32
    return %c0_i32, %c0_i32_0 : i32, i32
  }
  func.func @transform_24(%arg0: i32) -> (i32, i32) {
    %c0_i32 = arith.constant 0 : i32
    %c0_i32_0 = arith.constant 0 : i32
    %c0_i32_1 = arith.constant 0 : i32
    return %c0_i32, %c0_i32_0 : i32, i32
  }
  func.func @transform_25(%arg0: i32) -> (i32, i32) {
    %c0_i32 = arith.constant 0 : i32
    %c0_i32_0 = arith.constant 0 : i32
    %c0_i32_1 = arith.constant 0 : i32
    return %c0_i32, %c0_i32_0 : i32, i32
  }
  func.func @transform_26(%arg0: i32) -> (i32, i32) {
    %c0_i32 = arith.constant 0 : i32
    %c0_i32_0 = arith.constant 0 : i32
    %c0_i32_1 = arith.constant 0 : i32
    return %c0_i32, %c0_i32_0 : i32, i32
  }
  func.func @transform_27(%arg0: i32) -> (i32, i32) {
    %c0_i32 = arith.constant 0 : i32
    %c0_i32_0 = arith.constant 0 : i32
    %c0_i32_1 = arith.constant 0 : i32
    return %c0_i32, %c0_i32_0 : i32, i32
  }
  func.func @transform_28(%arg0: i32) -> (i32, i32) {
    %c0_i32 = arith.constant 0 : i32
    %c0_i32_0 = arith.constant 0 : i32
    %c0_i32_1 = arith.constant 0 : i32
    return %c0_i32, %c0_i32_0 : i32, i32
  }
  func.func @transform_29(%arg0: i32) -> (i32, i32) {
    %c0_i32 = arith.constant 0 : i32
    %c0_i32_0 = arith.constant 0 : i32
    %c0_i32_1 = arith.constant 0 : i32
    return %c0_i32, %c0_i32_0 : i32, i32
  }
  func.func @transform_30(%arg0: i32) -> (i32, i32) {
    %c0_i32 = arith.constant 0 : i32
    %c0_i32_0 = arith.constant 0 : i32
    %c0_i32_1 = arith.constant 0 : i32
    return %c0_i32, %c0_i32_0 : i32, i32
  }
  func.func @transform_31(%arg0: i32) -> (i32, i32, i32) {
    %c0_i32 = arith.constant 0 : i32
    %c0_i32_0 = arith.constant 0 : i32
    %c0_i32_1 = arith.constant 0 : i32
    return %arg0, %c0_i32, %c0_i32_0 : i32, i32, i32
  }
}

</mosaic_0001>

<llo_original>
// kernel: tpu_custom_call.1
$region0: #{tpu_custom_call.1}
  #allocation0 [shape = 'u32[]', space=smem, size = 0x4, offset = 0x4, fixed_abs, tag = 'smem constant byte address 0x4 - core index']
  #allocation1 [shape = 'u32[72,128]{1,0:T(1,128)}', space=vmem, size = 0x9000, scoped, tag = 'internal scratch']
  #allocation2 [shape = 'f32[8,32]{1,0:T(8,128)}', space=vmem, size = 0x1000, scoped, tag = 'scratch operand']
  %s0 = inlined_call_operand.smem [shape: u32[32], index: -1, kind: input, shape index: {}]
  %s1 = sld [smem:[%s0]]
  %s2 = scalar_lea.smem %s0, 1
  %s3 = sld [smem:[%s2]]
  %s4 = scalar_lea.smem %s0, 2
  %s5 = sld [smem:[%s4]]
  %s6 = scalar_lea.smem %s0, 3
  %s7 = sld [smem:[%s6]]
  %s8 = scalar_lea.smem %s0, 4
  %s9 = sld [smem:[%s8]]
  %s10 = scalar_lea.smem %s0, 5
  %s11 = sld [smem:[%s10]]
  %s12 = scalar_lea.smem %s0, 6
  %s13 = sld [smem:[%s12]]
  %s14 = scalar_lea.smem %s0, 7
  %s15 = sld [smem:[%s14]]
  %s16 = scalar_lea.smem %s0, 8
  %s17 = sld [smem:[%s16]]
  %s18 = scalar_lea.smem %s0, 9
  %s19 = sld [smem:[%s18]]
  %s20 = scalar_lea.smem %s0, 10
  %s21 = sld [smem:[%s20]]
  %s22 = scalar_lea.smem %s0, 11
  %s23 = sld [smem:[%s22]]
  %s24 = scalar_lea.smem %s0, 12
  %s25 = sld [smem:[%s24]]
  %s26 = scalar_lea.smem %s0, 13
  %s27 = sld [smem:[%s26]]
  %s28 = scalar_lea.smem %s0, 14
  %s29 = sld [smem:[%s28]]
  %s30 = scalar_lea.smem %s0, 15
  %s31 = sld [smem:[%s30]]
  %s32 = scalar_lea.smem %s0, 16
  %s33 = sld [smem:[%s32]]
  %s34 = scalar_lea.smem %s0, 17
  %s35 = sld [smem:[%s34]]
  %s36 = scalar_lea.smem %s0, 18
  %s37 = sld [smem:[%s36]]
  %s38 = scalar_lea.smem %s0, 19
  %s39 = sld [smem:[%s38]]
  %s40 = scalar_lea.smem %s0, 20
  %s41 = sld [smem:[%s40]]
  %s42 = scalar_lea.smem %s0, 21
  %s43 = sld [smem:[%s42]]
  %s44 = scalar_lea.smem %s0, 22
  %s45 = sld [smem:[%s44]]
  %s46 = scalar_lea.smem %s0, 23
  %s47 = sld [smem:[%s46]]
  %s48 = scalar_lea.smem %s0, 24
  %s49 = sld [smem:[%s48]]
  %s50 = scalar_lea.smem %s0, 25
  %s51 = sld [smem:[%s50]]
  %s52 = scalar_lea.smem %s0, 26
  %s53 = sld [smem:[%s52]]
  %s54 = scalar_lea.smem %s0, 27
  %s55 = sld [smem:[%s54]]
  %s56 = scalar_lea.smem %s0, 28
  %s57 = sld [smem:[%s56]]
  %s58 = scalar_lea.smem %s0, 29
  %s59 = sld [smem:[%s58]]
  %s60 = scalar_lea.smem %s0, 30
  %s61 = sld [smem:[%s60]]
  %s62 = scalar_lea.smem %s0, 31
  %s63 = sld [smem:[%s62]]
  %s64 = sld [smem:[#allocation0]]
  $region157: #{tpu_custom_call.1} parent=0
    _
  %s66 = ssub.s32 1, %s64
  %s67 = scalar_select 0, %s66, %s64
  $region1: #{tpu_custom_call.1} parent=0
    #allocation3 [shape = 'u8[8192]{0}', space=vmem, size = 0x2000, scoped, tag = 'output window, operand 0']
    #allocation4 [shape = 's32[2]{0}', space=sflag, size = 0x8, scoped, tag = 'scoped memory for tpu_custom_call.1']
    %68 = vsyncpa [#allocation4], 0
    %s69 = scalar_lea.sflag [#allocation4], 1
    %70 = vsyncpa %s69, 0
    loop: start=0, step=1, limit=4
    $region2: #{tpu_custom_call.1} parent=1 // loop_pre_header
      _
    $region3: #{tpu_custom_call.1} parent=1 // loop_header
      %s72 = sphi 0, %s76
      %p73 = scmp.ge.s32.totalorder %s72, 4
      %s82 = sphi 0, %s84
      %s85 = sphi 0, %s82
      %s86 = sphi 0, %s85
      %s102 = sphi 0, %s86
      %s108 = sphi 0, %s110
      %s111 = sphi 0, %s108
      %s112 = sphi 0, %s111
      %s128 = sphi 0, %s112
      %s134 = sphi 0, %s136
      %s137 = sphi 0, %s134
      %s138 = sphi 0, %s137
      %s154 = sphi 0, %s138
      %s160 = sphi 0, %s162
      %s163 = sphi 0, %s160
      %s164 = sphi 0, %s163
      %s180 = sphi 0, %s164
      %s186 = sphi 0, %s188
      %s189 = sphi 0, %s186
      %s190 = sphi 0, %s189
      %s206 = sphi 0, %s190
      %s210 = sphi 0, %s210
      %s212 = sphi 0, %s210
      %s213 = sphi 0, %s212
      %s227 = sphi 0, %s213
      %s231 = sphi 0, %s231
      %s233 = sphi 0, %s231
      %s234 = sphi 0, %s233
      %s248 = sphi 0, %s234
      %s252 = sphi 0, %s252
      %s254 = sphi 0, %s252
      %s255 = sphi 0, %s254
      %s269 = sphi 0, %s255
      %s273 = sphi 0, %s273
      %s275 = sphi 0, %s273
      %s276 = sphi 0, %s275
      %s290 = sphi 0, %s276
      %s294 = sphi 0, %s294
      %s296 = sphi 0, %s294
      %s297 = sphi 0, %s296
      %s311 = sphi 0, %s297
      %s315 = sphi 0, %s315
      %s317 = sphi 0, %s315
      %s318 = sphi 0, %s317
      %s332 = sphi 0, %s318
      %s336 = sphi 0, %s336
      %s338 = sphi 0, %s336
      %s339 = sphi 0, %s338
      %s353 = sphi 0, %s339
      %s357 = sphi 0, %s357
      %s359 = sphi 0, %s357
      %s360 = sphi 0, %s359
      %s374 = sphi 0, %s360
      %s378 = sphi 0, %s378
      %s380 = sphi 0, %s378
      %s381 = sphi 0, %s380
      %s395 = sphi 0, %s381
      %s399 = sphi 0, %s399
      %s401 = sphi 0, %s399
      %s402 = sphi 0, %s401
      %s416 = sphi 0, %s402
      %s420 = sphi 0, %s420
      %s422 = sphi 0, %s420
      %s423 = sphi 0, %s422
      %s437 = sphi 0, %s423
      %s441 = sphi 0, %s441
      %s443 = sphi 0, %s441
      %s444 = sphi 0, %s443
      %s458 = sphi 0, %s444
      %s462 = sphi 0, %s462
      %s464 = sphi 0, %s462
      %s465 = sphi 0, %s464
      %s479 = sphi 0, %s465
      %s483 = sphi 0, %s483
      %s485 = sphi 0, %s483
      %s486 = sphi 0, %s485
      %s500 = sphi 0, %s486
      %s504 = sphi 0, %s504
      %s506 = sphi 0, %s504
      %s507 = sphi 0, %s506
      %s521 = sphi 0, %s507
      %s525 = sphi 0, %s525
      %s527 = sphi 0, %s525
      %s528 = sphi 0, %s527
      %s542 = sphi 0, %s528
      %s546 = sphi 0, %s546
      %s548 = sphi 0, %s546
      %s549 = sphi 0, %s548
      %s563 = sphi 0, %s549
      %s567 = sphi 0, %s567
      %s569 = sphi 0, %s567
      %s570 = sphi 0, %s569
      %s584 = sphi 0, %s570
      %s588 = sphi 0, %s588
      %s590 = sphi 0, %s588
      %s591 = sphi 0, %s590
      %s605 = sphi 0, %s591
      %s609 = sphi 0, %s609
      %s611 = sphi 0, %s609
      %s612 = sphi 0, %s611
      %s626 = sphi 0, %s612
      %s630 = sphi 0, %s630
      %s632 = sphi 0, %s630
      %s633 = sphi 0, %s632
      %s647 = sphi 0, %s633
      %s651 = sphi 0, %s651
      %s653 = sphi 0, %s651
      %s654 = sphi 0, %s653
      %s668 = sphi 0, %s654
      %s672 = sphi 0, %s672
      %s674 = sphi 0, %s672
      %s675 = sphi 0, %s674
      %s689 = sphi 0, %s675
      %s693 = sphi 0, %s693
      %s695 = sphi 0, %s693
      %s696 = sphi 0, %s695
      %s710 = sphi 0, %s696
      %s714 = sphi 0, %s714
      %s716 = sphi 0, %s714
      %s717 = sphi 0, %s716
      %s731 = sphi 0, %s717
      %s735 = sphi 0, %s735
      %s737 = sphi 0, %s735
      %s738 = sphi 0, %s737
      %s752 = sphi 0, %s738
      %s758 = sphi 0, %s760
      %s761 = sphi 0, %s758
      %s762 = sphi 0, %s761
      %s778 = sphi 0, %s762
    $region4: #{tpu_custom_call.1} parent=1 // loop_header_branch
      %75 = sbr.rel (%p73) target = $region8
    $region5: #{tpu_custom_call.1} parent=1 // loop_body
      %s77 = ssub.s32 %s72, 1
      %s78 = ssub.s32 %s72, 2
      %s79 = sadd.s32 %s72, 1
      %s80 = ssub.s32 %s72, %s79
      %p81 = scmp.eq.s32.totalorder %s80, 0
      %s83 = sadd.s32 %s82, 1
      %s84 = scalar_select %p81, %s82, %s83
      %p87 = pneg %p81
      %p88 = scmp.eq.s32.totalorder %s72, 1
      %p89 = por %p87, %p88
      %p90 = scmp.ne.s32.totalorder %s82, %s85
      %p91 = scmp.eq.s32.totalorder %s72, 0
      %p92 = por %p90, %p91
      %p93 = scmp.ne.s32.totalorder %s82, %s85
      %p94 = scmp.eq.s32.totalorder %s77, 1
      %p95 = por %p93, %p94
      %p96 = scmp.ne.s32.totalorder %s85, %s86
      %p97 = scmp.eq.s32.totalorder %s77, 0
      %p98 = por %p96, %p97
      %p99 = scmp.ne.s32.totalorder %s85, %s86
      %p100 = scmp.eq.s32.totalorder %s78, 1
      %p101 = por %p99, %p100
      %p103 = scmp.ne.s32.totalorder %s86, %s102
      %p104 = scmp.eq.s32.totalorder %s78, 0
      %p105 = por %p103, %p104
      %s106 = ssub.s32 %s72, %s79
      %p107 = scmp.eq.s32.totalorder %s106, 0
      %s109 = sadd.s32 %s108, 1
      %s110 = scalar_select %p107, %s108, %s109
      %p113 = pneg %p107
      %p114 = scmp.eq.s32.totalorder %s72, 1
      %p115 = por %p113, %p114
      %p116 = scmp.ne.s32.totalorder %s108, %s111
      %p117 = scmp.eq.s32.totalorder %s72, 0
      %p118 = por %p116, %p117
      %p119 = scmp.ne.s32.totalorder %s108, %s111
      %p120 = scmp.eq.s32.totalorder %s77, 1
      %p121 = por %p119, %p120
      %p122 = scmp.ne.s32.totalorder %s111, %s112
      %p123 = scmp.eq.s32.totalorder %s77, 0
      %p124 = por %p122, %p123
      %p125 = scmp.ne.s32.totalorder %s111, %s112
      %p126 = scmp.eq.s32.totalorder %s78, 1
      %p127 = por %p125, %p126
      %p129 = scmp.ne.s32.totalorder %s112, %s128
      %p130 = scmp.eq.s32.totalorder %s78, 0
      %p131 = por %p129, %p130
      %s132 = ssub.s32 %s72, %s79
      %p133 = scmp.eq.s32.totalorder %s132, 0
      %s135 = sadd.s32 %s134, 1
      %s136 = scalar_select %p133, %s134, %s135
      %p139 = pneg %p133
      %p140 = scmp.eq.s32.totalorder %s72, 1
      %p141 = por %p139, %p140
      %p142 = scmp.ne.s32.totalorder %s134, %s137
      %p143 = scmp.eq.s32.totalorder %s72, 0
      %p144 = por %p142, %p143
      %p145 = scmp.ne.s32.totalorder %s134, %s137
      %p146 = scmp.eq.s32.totalorder %s77, 1
      %p147 = por %p145, %p146
      %p148 = scmp.ne.s32.totalorder %s137, %s138
      %p149 = scmp.eq.s32.totalorder %s77, 0
      %p150 = por %p148, %p149
      %p151 = scmp.ne.s32.totalorder %s137, %s138
      %p152 = scmp.eq.s32.totalorder %s78, 1
      %p153 = por %p151, %p152
      %p155 = scmp.ne.s32.totalorder %s138, %s154
      %p156 = scmp.eq.s32.totalorder %s78, 0
      %p157 = por %p155, %p156
      %s158 = ssub.s32 %s72, %s79
      %p159 = scmp.eq.s32.totalorder %s158, 0
      %s161 = sadd.s32 %s160, 1
      %s162 = scalar_select %p159, %s160, %s161
      %p165 = pneg %p159
      %p166 = scmp.eq.s32.totalorder %s72, 1
      %p167 = por %p165, %p166
      %p168 = scmp.ne.s32.totalorder %s160, %s163
      %p169 = scmp.eq.s32.totalorder %s72, 0
      %p170 = por %p168, %p169
      %p171 = scmp.ne.s32.totalorder %s160, %s163
      %p172 = scmp.eq.s32.totalorder %s77, 1
      %p173 = por %p171, %p172
      %p174 = scmp.ne.s32.totalorder %s163, %s164
      %p175 = scmp.eq.s32.totalorder %s77, 0
      %p176 = por %p174, %p175
      %p177 = scmp.ne.s32.totalorder %s163, %s164
      %p178 = scmp.eq.s32.totalorder %s78, 1
      %p179 = por %p177, %p178
      %p181 = scmp.ne.s32.totalorder %s164, %s180
      %p182 = scmp.eq.s32.totalorder %s78, 0
      %p183 = por %p181, %p182
      %s184 = ssub.s32 %s72, %s79
      %p185 = scmp.eq.s32.totalorder %s184, 0
      %s187 = sadd.s32 %s186, 1
      %s188 = scalar_select %p185, %s186, %s187
      %p191 = pneg %p185
      %p192 = scmp.eq.s32.totalorder %s72, 1
      %p193 = por %p191, %p192
      %p194 = scmp.ne.s32.totalorder %s186, %s189
      %p195 = scmp.eq.s32.totalorder %s72, 0
      %p196 = por %p194, %p195
      %p197 = scmp.ne.s32.totalorder %s186, %s189
      %p198 = scmp.eq.s32.totalorder %s77, 1
      %p199 = por %p197, %p198
      %p200 = scmp.ne.s32.totalorder %s189, %s190
      %p201 = scmp.eq.s32.totalorder %s77, 0
      %p202 = por %p200, %p201
      %p203 = scmp.ne.s32.totalorder %s189, %s190
      %p204 = scmp.eq.s32.totalorder %s78, 1
      %p205 = por %p203, %p204
      %p207 = scmp.ne.s32.totalorder %s190, %s206
      %p208 = scmp.eq.s32.totalorder %s78, 0
      %p209 = por %p207, %p208
      %s211 = sadd.s32 %s210, 1
      %p214 = scmp.eq.s32.totalorder %s72, 1
      %p215 = scmp.ne.s32.totalorder %s210, %s212
      %p216 = scmp.eq.s32.totalorder %s72, 0
      %p217 = por %p215, %p216
      %p218 = scmp.ne.s32.totalorder %s210, %s212
      %p219 = scmp.eq.s32.totalorder %s77, 1
      %p220 = por %p218, %p219
      %p221 = scmp.ne.s32.totalorder %s212, %s213
      %p222 = scmp.eq.s32.totalorder %s77, 0
      %p223 = por %p221, %p222
      %p224 = scmp.ne.s32.totalorder %s212, %s213
      %p225 = scmp.eq.s32.totalorder %s78, 1
      %p226 = por %p224, %p225
      %p228 = scmp.ne.s32.totalorder %s213, %s227
      %p229 = scmp.eq.s32.totalorder %s78, 0
      %p230 = por %p228, %p229
      %s232 = sadd.s32 %s231, 1
      %p235 = scmp.eq.s32.totalorder %s72, 1
      %p236 = scmp.ne.s32.totalorder %s231, %s233
      %p237 = scmp.eq.s32.totalorder %s72, 0
      %p238 = por %p236, %p237
      %p239 = scmp.ne.s32.totalorder %s231, %s233
      %p240 = scmp.eq.s32.totalorder %s77, 1
      %p241 = por %p239, %p240
      %p242 = scmp.ne.s32.totalorder %s233, %s234
      %p243 = scmp.eq.s32.totalorder %s77, 0
      %p244 = por %p242, %p243
      %p245 = scmp.ne.s32.totalorder %s233, %s234
      %p246 = scmp.eq.s32.totalorder %s78, 1
      %p247 = por %p245, %p246
      %p249 = scmp.ne.s32.totalorder %s234, %s248
      %p250 = scmp.eq.s32.totalorder %s78, 0
      %p251 = por %p249, %p250
      %s253 = sadd.s32 %s252, 1
      %p256 = scmp.eq.s32.totalorder %s72, 1
      %p257 = scmp.ne.s32.totalorder %s252, %s254
      %p258 = scmp.eq.s32.totalorder %s72, 0
      %p259 = por %p257, %p258
      %p260 = scmp.ne.s32.totalorder %s252, %s254
      %p261 = scmp.eq.s32.totalorder %s77, 1
      %p262 = por %p260, %p261
      %p263 = scmp.ne.s32.totalorder %s254, %s255
      %p264 = scmp.eq.s32.totalorder %s77, 0
      %p265 = por %p263, %p264
      %p266 = scmp.ne.s32.totalorder %s254, %s255
      %p267 = scmp.eq.s32.totalorder %s78, 1
      %p268 = por %p266, %p267
      %p270 = scmp.ne.s32.totalorder %s255, %s269
      %p271 = scmp.eq.s32.totalorder %s78, 0
      %p272 = por %p270, %p271
      %s274 = sadd.s32 %s273, 1
      %p277 = scmp.eq.s32.totalorder %s72, 1
      %p278 = scmp.ne.s32.totalorder %s273, %s275
      %p279 = scmp.eq.s32.totalorder %s72, 0
      %p280 = por %p278, %p279
      %p281 = scmp.ne.s32.totalorder %s273, %s275
      %p282 = scmp.eq.s32.totalorder %s77, 1
      %p283 = por %p281, %p282
      %p284 = scmp.ne.s32.totalorder %s275, %s276
      %p285 = scmp.eq.s32.totalorder %s77, 0
      %p286 = por %p284, %p285
      %p287 = scmp.ne.s32.totalorder %s275, %s276
      %p288 = scmp.eq.s32.totalorder %s78, 1
      %p289 = por %p287, %p288
      %p291 = scmp.ne.s32.totalorder %s276, %s290
      %p292 = scmp.eq.s32.totalorder %s78, 0
      %p293 = por %p291, %p292
      %s295 = sadd.s32 %s294, 1
      %p298 = scmp.eq.s32.totalorder %s72, 1
      %p299 = scmp.ne.s32.totalorder %s294, %s296
      %p300 = scmp.eq.s32.totalorder %s72, 0
      %p301 = por %p299, %p300
      %p302 = scmp.ne.s32.totalorder %s294, %s296
      %p303 = scmp.eq.s32.totalorder %s77, 1
      %p304 = por %p302, %p303
      %p305 = scmp.ne.s32.totalorder %s296, %s297
      %p306 = scmp.eq.s32.totalorder %s77, 0
      %p307 = por %p305, %p306
      %p308 = scmp.ne.s32.totalorder %s296, %s297
      %p309 = scmp.eq.s32.totalorder %s78, 1
      %p310 = por %p308, %p309
      %p312 = scmp.ne.s32.totalorder %s297, %s311
      %p313 = scmp.eq.s32.totalorder %s78, 0
      %p314 = por %p312, %p313
      %s316 = sadd.s32 %s315, 1
      %p319 = scmp.eq.s32.totalorder %s72, 1
      %p320 = scmp.ne.s32.totalorder %s315, %s317
      %p321 = scmp.eq.s32.totalorder %s72, 0
      %p322 = por %p320, %p321
      %p323 = scmp.ne.s32.totalorder %s315, %s317
      %p324 = scmp.eq.s32.totalorder %s77, 1
      %p325 = por %p323, %p324
      %p326 = scmp.ne.s32.totalorder %s317, %s318
      %p327 = scmp.eq.s32.totalorder %s77, 0
      %p328 = por %p326, %p327
      %p329 = scmp.ne.s32.totalorder %s317, %s318
      %p330 = scmp.eq.s32.totalorder %s78, 1
      %p331 = por %p329, %p330
      %p333 = scmp.ne.s32.totalorder %s318, %s332
      %p334 = scmp.eq.s32.totalorder %s78, 0
      %p335 = por %p333, %p334
      %s337 = sadd.s32 %s336, 1
      %p340 = scmp.eq.s32.totalorder %s72, 1
      %p341 = scmp.ne.s32.totalorder %s336, %s338
      %p342 = scmp.eq.s32.totalorder %s72, 0
      %p343 = por %p341, %p342
      %p344 = scmp.ne.s32.totalorder %s336, %s338
      %p345 = scmp.eq.s32.totalorder %s77, 1
      %p346 = por %p344, %p345
      %p347 = scmp.ne.s32.totalorder %s338, %s339
      %p348 = scmp.eq.s32.totalorder %s77, 0
      %p349 = por %p347, %p348
      %p350 = scmp.ne.s32.totalorder %s338, %s339
      %p351 = scmp.eq.s32.totalorder %s78, 1
      %p352 = por %p350, %p351
      %p354 = scmp.ne.s32.totalorder %s339, %s353
      %p355 = scmp.eq.s32.totalorder %s78, 0
      %p356 = por %p354, %p355
      %s358 = sadd.s32 %s357, 1
      %p361 = scmp.eq.s32.totalorder %s72, 1
      %p362 = scmp.ne.s32.totalorder %s357, %s359
      %p363 = scmp.eq.s32.totalorder %s72, 0
      %p364 = por %p362, %p363
      %p365 = scmp.ne.s32.totalorder %s357, %s359
      %p366 = scmp.eq.s32.totalorder %s77, 1
      %p367 = por %p365, %p366
      %p368 = scmp.ne.s32.totalorder %s359, %s360
      %p369 = scmp.eq.s32.totalorder %s77, 0
      %p370 = por %p368, %p369
      %p371 = scmp.ne.s32.totalorder %s359, %s360
      %p372 = scmp.eq.s32.totalorder %s78, 1
      %p373 = por %p371, %p372
      %p375 = scmp.ne.s32.totalorder %s360, %s374
      %p376 = scmp.eq.s32.totalorder %s78, 0
      %p377 = por %p375, %p376
      %s379 = sadd.s32 %s378, 1
      %p382 = scmp.eq.s32.totalorder %s72, 1
      %p383 = scmp.ne.s32.totalorder %s378, %s380
      %p384 = scmp.eq.s32.totalorder %s72, 0
      %p385 = por %p383, %p384
      %p386 = scmp.ne.s32.totalorder %s378, %s380
      %p387 = scmp.eq.s32.totalorder %s77, 1
      %p388 = por %p386, %p387
      %p389 = scmp.ne.s32.totalorder %s380, %s381
      %p390 = scmp.eq.s32.totalorder %s77, 0
      %p391 = por %p389, %p390
      %p392 = scmp.ne.s32.totalorder %s380, %s381
      %p393 = scmp.eq.s32.totalorder %s78, 1
      %p394 = por %p392, %p393
      %p396 = scmp.ne.s32.totalorder %s381, %s395
      %p397 = scmp.eq.s32.totalorder %s78, 0
      %p398 = por %p396, %p397
      %s400 = sadd.s32 %s399, 1
      %p403 = scmp.eq.s32.totalorder %s72, 1
      %p404 = scmp.ne.s32.totalorder %s399, %s401
      %p405 = scmp.eq.s32.totalorder %s72, 0
      %p406 = por %p404, %p405
      %p407 = scmp.ne.s32.totalorder %s399, %s401
      %p408 = scmp.eq.s32.totalorder %s77, 1
      %p409 = por %p407, %p408
      %p410 = scmp.ne.s32.totalorder %s401, %s402
      %p411 = scmp.eq.s32.totalorder %s77, 0
      %p412 = por %p410, %p411
      %p413 = scmp.ne.s32.totalorder %s401, %s402
      %p414 = scmp.eq.s32.totalorder %s78, 1
      %p415 = por %p413, %p414
      %p417 = scmp.ne.s32.totalorder %s402, %s416
      %p418 = scmp.eq.s32.totalorder %s78, 0
      %p419 = por %p417, %p418
      %s421 = sadd.s32 %s420, 1
      %p424 = scmp.eq.s32.totalorder %s72, 1
      %p425 = scmp.ne.s32.totalorder %s420, %s422
      %p426 = scmp.eq.s32.totalorder %s72, 0
      %p427 = por %p425, %p426
      %p428 = scmp.ne.s32.totalorder %s420, %s422
      %p429 = scmp.eq.s32.totalorder %s77, 1
      %p430 = por %p428, %p429
      %p431 = scmp.ne.s32.totalorder %s422, %s423
      %p432 = scmp.eq.s32.totalorder %s77, 0
      %p433 = por %p431, %p432
      %p434 = scmp.ne.s32.totalorder %s422, %s423
      %p435 = scmp.eq.s32.totalorder %s78, 1
      %p436 = por %p434, %p435
      %p438 = scmp.ne.s32.totalorder %s423, %s437
      %p439 = scmp.eq.s32.totalorder %s78, 0
      %p440 = por %p438, %p439
      %s442 = sadd.s32 %s441, 1
      %p445 = scmp.eq.s32.totalorder %s72, 1
      %p446 = scmp.ne.s32.totalorder %s441, %s443
      %p447 = scmp.eq.s32.totalorder %s72, 0
      %p448 = por %p446, %p447
      %p449 = scmp.ne.s32.totalorder %s441, %s443
      %p450 = scmp.eq.s32.totalorder %s77, 1
      %p451 = por %p449, %p450
      %p452 = scmp.ne.s32.totalorder %s443, %s444
      %p453 = scmp.eq.s32.totalorder %s77, 0
      %p454 = por %p452, %p453
      %p455 = scmp.ne.s32.totalorder %s443, %s444
      %p456 = scmp.eq.s32.totalorder %s78, 1
      %p457 = por %p455, %p456
      %p459 = scmp.ne.s32.totalorder %s444, %s458
      %p460 = scmp.eq.s32.totalorder %s78, 0
      %p461 = por %p459, %p460
      %s463 = sadd.s32 %s462, 1
      %p466 = scmp.eq.s32.totalorder %s72, 1
      %p467 = scmp.ne.s32.totalorder %s462, %s464
      %p468 = scmp.eq.s32.totalorder %s72, 0
      %p469 = por %p467, %p468
      %p470 = scmp.ne.s32.totalorder %s462, %s464
      %p471 = scmp.eq.s32.totalorder %s77, 1
      %p472 = por %p470, %p471
      %p473 = scmp.ne.s32.totalorder %s464, %s465
      %p474 = scmp.eq.s32.totalorder %s77, 0
      %p475 = por %p473, %p474
      %p476 = scmp.ne.s32.totalorder %s464, %s465
      %p477 = scmp.eq.s32.totalorder %s78, 1
      %p478 = por %p476, %p477
      %p480 = scmp.ne.s32.totalorder %s465, %s479
      %p481 = scmp.eq.s32.totalorder %s78, 0
      %p482 = por %p480, %p481
      %s484 = sadd.s32 %s483, 1
      %p487 = scmp.eq.s32.totalorder %s72, 1
      %p488 = scmp.ne.s32.totalorder %s483, %s485
      %p489 = scmp.eq.s32.totalorder %s72, 0
      %p490 = por %p488, %p489
      %p491 = scmp.ne.s32.totalorder %s483, %s485
      %p492 = scmp.eq.s32.totalorder %s77, 1
      %p493 = por %p491, %p492
      %p494 = scmp.ne.s32.totalorder %s485, %s486
      %p495 = scmp.eq.s32.totalorder %s77, 0
      %p496 = por %p494, %p495
      %p497 = scmp.ne.s32.totalorder %s485, %s486
      %p498 = scmp.eq.s32.totalorder %s78, 1
      %p499 = por %p497, %p498
      %p501 = scmp.ne.s32.totalorder %s486, %s500
      %p502 = scmp.eq.s32.totalorder %s78, 0
      %p503 = por %p501, %p502
      %s505 = sadd.s32 %s504, 1
      %p508 = scmp.eq.s32.totalorder %s72, 1
      %p509 = scmp.ne.s32.totalorder %s504, %s506
      %p510 = scmp.eq.s32.totalorder %s72, 0
      %p511 = por %p509, %p510
      %p512 = scmp.ne.s32.totalorder %s504, %s506
      %p513 = scmp.eq.s32.totalorder %s77, 1
      %p514 = por %p512, %p513
      %p515 = scmp.ne.s32.totalorder %s506, %s507
      %p516 = scmp.eq.s32.totalorder %s77, 0
      %p517 = por %p515, %p516
      %p518 = scmp.ne.s32.totalorder %s506, %s507
      %p519 = scmp.eq.s32.totalorder %s78, 1
      %p520 = por %p518, %p519
      %p522 = scmp.ne.s32.totalorder %s507, %s521
      %p523 = scmp.eq.s32.totalorder %s78, 0
      %p524 = por %p522, %p523
      %s526 = sadd.s32 %s525, 1
      %p529 = scmp.eq.s32.totalorder %s72, 1
      %p530 = scmp.ne.s32.totalorder %s525, %s527
      %p531 = scmp.eq.s32.totalorder %s72, 0
      %p532 = por %p530, %p531
      %p533 = scmp.ne.s32.totalorder %s525, %s527
      %p534 = scmp.eq.s32.totalorder %s77, 1
      %p535 = por %p533, %p534
      %p536 = scmp.ne.s32.totalorder %s527, %s528
      %p537 = scmp.eq.s32.totalorder %s77, 0
      %p538 = por %p536, %p537
      %p539 = scmp.ne.s32.totalorder %s527, %s528
      %p540 = scmp.eq.s32.totalorder %s78, 1
      %p541 = por %p539, %p540
      %p543 = scmp.ne.s32.totalorder %s528, %s542
      %p544 = scmp.eq.s32.totalorder %s78, 0
      %p545 = por %p543, %p544
      %s547 = sadd.s32 %s546, 1
      %p550 = scmp.eq.s32.totalorder %s72, 1
      %p551 = scmp.ne.s32.totalorder %s546, %s548
      %p552 = scmp.eq.s32.totalorder %s72, 0
      %p553 = por %p551, %p552
      %p554 = scmp.ne.s32.totalorder %s546, %s548
      %p555 = scmp.eq.s32.totalorder %s77, 1
      %p556 = por %p554, %p555
      %p557 = scmp.ne.s32.totalorder %s548, %s549
      %p558 = scmp.eq.s32.totalorder %s77, 0
      %p559 = por %p557, %p558
      %p560 = scmp.ne.s32.totalorder %s548, %s549
      %p561 = scmp.eq.s32.totalorder %s78, 1
      %p562 = por %p560, %p561
      %p564 = scmp.ne.s32.totalorder %s549, %s563
      %p565 = scmp.eq.s32.totalorder %s78, 0
      %p566 = por %p564, %p565
      %s568 = sadd.s32 %s567, 1
      %p571 = scmp.eq.s32.totalorder %s72, 1
      %p572 = scmp.ne.s32.totalorder %s567, %s569
      %p573 = scmp.eq.s32.totalorder %s72, 0
      %p574 = por %p572, %p573
      %p575 = scmp.ne.s32.totalorder %s567, %s569
      %p576 = scmp.eq.s32.totalorder %s77, 1
      %p577 = por %p575, %p576
      %p578 = scmp.ne.s32.totalorder %s569, %s570
      %p579 = scmp.eq.s32.totalorder %s77, 0
      %p580 = por %p578, %p579
      %p581 = scmp.ne.s32.totalorder %s569, %s570
      %p582 = scmp.eq.s32.totalorder %s78, 1
      %p583 = por %p581, %p582
      %p585 = scmp.ne.s32.totalorder %s570, %s584
      %p586 = scmp.eq.s32.totalorder %s78, 0
      %p587 = por %p585, %p586
      %s589 = sadd.s32 %s588, 1
      %p592 = scmp.eq.s32.totalorder %s72, 1
      %p593 = scmp.ne.s32.totalorder %s588, %s590
      %p594 = scmp.eq.s32.totalorder %s72, 0
      %p595 = por %p593, %p594
      %p596 = scmp.ne.s32.totalorder %s588, %s590
      %p597 = scmp.eq.s32.totalorder %s77, 1
      %p598 = por %p596, %p597
      %p599 = scmp.ne.s32.totalorder %s590, %s591
      %p600 = scmp.eq.s32.totalorder %s77, 0
      %p601 = por %p599, %p600
      %p602 = scmp.ne.s32.totalorder %s590, %s591
      %p603 = scmp.eq.s32.totalorder %s78, 1
      %p604 = por %p602, %p603
      %p606 = scmp.ne.s32.totalorder %s591, %s605
      %p607 = scmp.eq.s32.totalorder %s78, 0
      %p608 = por %p606, %p607
      %s610 = sadd.s32 %s609, 1
      %p613 = scmp.eq.s32.totalorder %s72, 1
      %p614 = scmp.ne.s32.totalorder %s609, %s611
      %p615 = scmp.eq.s32.totalorder %s72, 0
      %p616 = por %p614, %p615
      %p617 = scmp.ne.s32.totalorder %s609, %s611
      %p618 = scmp.eq.s32.totalorder %s77, 1
      %p619 = por %p617, %p618
      %p620 = scmp.ne.s32.totalorder %s611, %s612
      %p621 = scmp.eq.s32.totalorder %s77, 0
      %p622 = por %p620, %p621
      %p623 = scmp.ne.s32.totalorder %s611, %s612
      %p624 = scmp.eq.s32.totalorder %s78, 1
      %p625 = por %p623, %p624
      %p627 = scmp.ne.s32.totalorder %s612, %s626
      %p628 = scmp.eq.s32.totalorder %s78, 0
      %p629 = por %p627, %p628
      %s631 = sadd.s32 %s630, 1
      %p634 = scmp.eq.s32.totalorder %s72, 1
      %p635 = scmp.ne.s32.totalorder %s630, %s632
      %p636 = scmp.eq.s32.totalorder %s72, 0
      %p637 = por %p635, %p636
      %p638 = scmp.ne.s32.totalorder %s630, %s632
      %p639 = scmp.eq.s32.totalorder %s77, 1
      %p640 = por %p638, %p639
      %p641 = scmp.ne.s32.totalorder %s632, %s633
      %p642 = scmp.eq.s32.totalorder %s77, 0
      %p643 = por %p641, %p642
      %p644 = scmp.ne.s32.totalorder %s632, %s633
      %p645 = scmp.eq.s32.totalorder %s78, 1
      %p646 = por %p644, %p645
      %p648 = scmp.ne.s32.totalorder %s633, %s647
      %p649 = scmp.eq.s32.totalorder %s78, 0
      %p650 = por %p648, %p649
      %s652 = sadd.s32 %s651, 1
      %p655 = scmp.eq.s32.totalorder %s72, 1
      %p656 = scmp.ne.s32.totalorder %s651, %s653
      %p657 = scmp.eq.s32.totalorder %s72, 0
      %p658 = por %p656, %p657
      %p659 = scmp.ne.s32.totalorder %s651, %s653
      %p660 = scmp.eq.s32.totalorder %s77, 1
      %p661 = por %p659, %p660
      %p662 = scmp.ne.s32.totalorder %s653, %s654
      %p663 = scmp.eq.s32.totalorder %s77, 0
      %p664 = por %p662, %p663
      %p665 = scmp.ne.s32.totalorder %s653, %s654
      %p666 = scmp.eq.s32.totalorder %s78, 1
      %p667 = por %p665, %p666
      %p669 = scmp.ne.s32.totalorder %s654, %s668
      %p670 = scmp.eq.s32.totalorder %s78, 0
      %p671 = por %p669, %p670
      %s673 = sadd.s32 %s672, 1
      %p676 = scmp.eq.s32.totalorder %s72, 1
      %p677 = scmp.ne.s32.totalorder %s672, %s674
      %p678 = scmp.eq.s32.totalorder %s72, 0
      %p679 = por %p677, %p678
      %p680 = scmp.ne.s32.totalorder %s672, %s674
      %p681 = scmp.eq.s32.totalorder %s77, 1
      %p682 = por %p680, %p681
      %p683 = scmp.ne.s32.totalorder %s674, %s675
      %p684 = scmp.eq.s32.totalorder %s77, 0
      %p685 = por %p683, %p684
      %p686 = scmp.ne.s32.totalorder %s674, %s675
      %p687 = scmp.eq.s32.totalorder %s78, 1
      %p688 = por %p686, %p687
      %p690 = scmp.ne.s32.totalorder %s675, %s689
      %p691 = scmp.eq.s32.totalorder %s78, 0
      %p692 = por %p690, %p691
      %s694 = sadd.s32 %s693, 1
      %p697 = scmp.eq.s32.totalorder %s72, 1
      %p698 = scmp.ne.s32.totalorder %s693, %s695
      %p699 = scmp.eq.s32.totalorder %s72, 0
      %p700 = por %p698, %p699
      %p701 = scmp.ne.s32.totalorder %s693, %s695
      %p702 = scmp.eq.s32.totalorder %s77, 1
      %p703 = por %p701, %p702
      %p704 = scmp.ne.s32.totalorder %s695, %s696
      %p705 = scmp.eq.s32.totalorder %s77, 0
      %p706 = por %p704, %p705
      %p707 = scmp.ne.s32.totalorder %s695, %s696
      %p708 = scmp.eq.s32.totalorder %s78, 1
      %p709 = por %p707, %p708
      %p711 = scmp.ne.s32.totalorder %s696, %s710
      %p712 = scmp.eq.s32.totalorder %s78, 0
      %p713 = por %p711, %p712
      %s715 = sadd.s32 %s714, 1
      %p718 = scmp.eq.s32.totalorder %s72, 1
      %p719 = scmp.ne.s32.totalorder %s714, %s716
      %p720 = scmp.eq.s32.totalorder %s72, 0
      %p721 = por %p719, %p720
      %p722 = scmp.ne.s32.totalorder %s714, %s716
      %p723 = scmp.eq.s32.totalorder %s77, 1
      %p724 = por %p722, %p723
      %p725 = scmp.ne.s32.totalorder %s716, %s717
      %p726 = scmp.eq.s32.totalorder %s77, 0
      %p727 = por %p725, %p726
      %p728 = scmp.ne.s32.totalorder %s716, %s717
      %p729 = scmp.eq.s32.totalorder %s78, 1
      %p730 = por %p728, %p729
      %p732 = scmp.ne.s32.totalorder %s717, %s731
      %p733 = scmp.eq.s32.totalorder %s78, 0
      %p734 = por %p732, %p733
      %s736 = sadd.s32 %s735, 1
      %p739 = scmp.eq.s32.totalorder %s72, 1
      %p740 = scmp.ne.s32.totalorder %s735, %s737
      %p741 = scmp.eq.s32.totalorder %s72, 0
      %p742 = por %p740, %p741
      %p743 = scmp.ne.s32.totalorder %s735, %s737
      %p744 = scmp.eq.s32.totalorder %s77, 1
      %p745 = por %p743, %p744
      %p746 = scmp.ne.s32.totalorder %s737, %s738
      %p747 = scmp.eq.s32.totalorder %s77, 0
      %p748 = por %p746, %p747
      %p749 = scmp.ne.s32.totalorder %s737, %s738
      %p750 = scmp.eq.s32.totalorder %s78, 1
      %p751 = por %p749, %p750
      %p753 = scmp.ne.s32.totalorder %s738, %s752
      %p754 = scmp.eq.s32.totalorder %s78, 0
      %p755 = por %p753, %p754
      %s756 = ssub.s32 %s72, %s79
      %p757 = scmp.eq.s32.totalorder %s756, 0
      %s759 = sadd.s32 %s758, 1
      %s760 = scalar_select %p757, %s758, %s759
      %p763 = pneg %p757
      %p764 = scmp.eq.s32.totalorder %s72, 1
      %p765 = por %p763, %p764
      %p766 = scmp.ne.s32.totalorder %s758, %s761
      %p767 = scmp.eq.s32.totalorder %s72, 0
      %p768 = por %p766, %p767
      %p769 = scmp.ne.s32.totalorder %s758, %s761
      %p770 = scmp.eq.s32.totalorder %s77, 1
      %p771 = por %p769, %p770
      %p772 = scmp.ne.s32.totalorder %s761, %s762
      %p773 = scmp.eq.s32.totalorder %s77, 0
      %p774 = por %p772, %p773
      %p775 = scmp.ne.s32.totalorder %s761, %s762
      %p776 = scmp.eq.s32.totalorder %s78, 1
      %p777 = por %p775, %p776
      %p779 = scmp.ne.s32.totalorder %s762, %s778
      %p780 = scmp.eq.s32.totalorder %s78, 0
      %p781 = por %p779, %p780
      %p782 = scmp.le.s32.totalorder 1, %s72
      %p783 = scmp.lt.s32.totalorder %s72, 3
      %p784 = pnand %p782, %p783
      %p785 = pneg %p784
      // Predicated region
      $region9: #{tpu_custom_call.1} parent=5 // pred_check
        _
      $region10: #{tpu_custom_call.1} parent=5 // pred_check_branch
        %787 = sbr.rel (%p784) target = $region12
      $region11: #{tpu_custom_call.1} parent=5 // pred_region
        %s788 = ssub.s32 %s72, 1
        // Predicated region
        $region13: #{tpu_custom_call.1} parent=11 // pred_check
          %p789 = pneg %p223
        $region14: #{tpu_custom_call.1} parent=11 // pred_check_branch
          %791 = sbr.rel (%p789) target = $region16
        $region15: #{tpu_custom_call.1} parent=11 // pred_region
          _
        $region16: #{tpu_custom_call.1} parent=11 // pred_fallthru
          _
        // Predicated region
        $region17: #{tpu_custom_call.1} parent=11 // pred_check
          %p792 = pneg %p244
        $region18: #{tpu_custom_call.1} parent=11 // pred_check_branch
          %794 = sbr.rel (%p792) target = $region20
        $region19: #{tpu_custom_call.1} parent=11 // pred_region
          _
        $region20: #{tpu_custom_call.1} parent=11 // pred_fallthru
          _
        // Predicated region
        $region21: #{tpu_custom_call.1} parent=11 // pred_check
          %p795 = pneg %p265
        $region22: #{tpu_custom_call.1} parent=11 // pred_check_branch
          %797 = sbr.rel (%p795) target = $region24
        $region23: #{tpu_custom_call.1} parent=11 // pred_region
          _
        $region24: #{tpu_custom_call.1} parent=11 // pred_fallthru
          _
        // Predicated region
        $region25: #{tpu_custom_call.1} parent=11 // pred_check
          %p798 = pneg %p286
        $region26: #{tpu_custom_call.1} parent=11 // pred_check_branch
          %800 = sbr.rel (%p798) target = $region28
        $region27: #{tpu_custom_call.1} parent=11 // pred_region
          _
        $region28: #{tpu_custom_call.1} parent=11 // pred_fallthru
          _
        // Predicated region
        $region29: #{tpu_custom_call.1} parent=11 // pred_check
          %p801 = pneg %p307
        $region30: #{tpu_custom_call.1} parent=11 // pred_check_branch
          %803 = sbr.rel (%p801) target = $region32
        $region31: #{tpu_custom_call.1} parent=11 // pred_region
          _
        $region32: #{tpu_custom_call.1} parent=11 // pred_fallthru
          _
        // Predicated region
        $region33: #{tpu_custom_call.1} parent=11 // pred_check
          %p804 = pneg %p328
        $region34: #{tpu_custom_call.1} parent=11 // pred_check_branch
          %806 = sbr.rel (%p804) target = $region36
        $region35: #{tpu_custom_call.1} parent=11 // pred_region
          _
        $region36: #{tpu_custom_call.1} parent=11 // pred_fallthru
          _
        // Predicated region
        $region37: #{tpu_custom_call.1} parent=11 // pred_check
          %p807 = pneg %p349
        $region38: #{tpu_custom_call.1} parent=11 // pred_check_branch
          %809 = sbr.rel (%p807) target = $region40
        $region39: #{tpu_custom_call.1} parent=11 // pred_region
          _
        $region40: #{tpu_custom_call.1} parent=11 // pred_fallthru
          _
        // Predicated region
        $region41: #{tpu_custom_call.1} parent=11 // pred_check
          %p810 = pneg %p370
        $region42: #{tpu_custom_call.1} parent=11 // pred_check_branch
          %812 = sbr.rel (%p810) target = $region44
        $region43: #{tpu_custom_call.1} parent=11 // pred_region
          _
        $region44: #{tpu_custom_call.1} parent=11 // pred_fallthru
          _
        // Predicated region
        $region45: #{tpu_custom_call.1} parent=11 // pred_check
          %p813 = pneg %p391
        $region46: #{tpu_custom_call.1} parent=11 // pred_check_branch
          %815 = sbr.rel (%p813) target = $region48
        $region47: #{tpu_custom_call.1} parent=11 // pred_region
          _
        $region48: #{tpu_custom_call.1} parent=11 // pred_fallthru
          _
        // Predicated region
        $region49: #{tpu_custom_call.1} parent=11 // pred_check
          %p816 = pneg %p412
        $region50: #{tpu_custom_call.1} parent=11 // pred_check_branch
          %818 = sbr.rel (%p816) target = $region52
        $region51: #{tpu_custom_call.1} parent=11 // pred_region
          _
        $region52: #{tpu_custom_call.1} parent=11 // pred_fallthru
          _
        // Predicated region
        $region53: #{tpu_custom_call.1} parent=11 // pred_check
          %p819 = pneg %p433
        $region54: #{tpu_custom_call.1} parent=11 // pred_check_branch
          %821 = sbr.rel (%p819) target = $region56
        $region55: #{tpu_custom_call.1} parent=11 // pred_region
          _
        $region56: #{tpu_custom_call.1} parent=11 // pred_fallthru
          _
        // Predicated region
        $region57: #{tpu_custom_call.1} parent=11 // pred_check
          %p822 = pneg %p454
        $region58: #{tpu_custom_call.1} parent=11 // pred_check_branch
          %824 = sbr.rel (%p822) target = $region60
        $region59: #{tpu_custom_call.1} parent=11 // pred_region
          _
        $region60: #{tpu_custom_call.1} parent=11 // pred_fallthru
          _
        // Predicated region
        $region61: #{tpu_custom_call.1} parent=11 // pred_check
          %p825 = pneg %p475
        $region62: #{tpu_custom_call.1} parent=11 // pred_check_branch
          %827 = sbr.rel (%p825) target = $region64
        $region63: #{tpu_custom_call.1} parent=11 // pred_region
          _
        $region64: #{tpu_custom_call.1} parent=11 // pred_fallthru
          _
        // Predicated region
        $region65: #{tpu_custom_call.1} parent=11 // pred_check
          %p828 = pneg %p496
        $region66: #{tpu_custom_call.1} parent=11 // pred_check_branch
          %830 = sbr.rel (%p828) target = $region68
        $region67: #{tpu_custom_call.1} parent=11 // pred_region
          _
        $region68: #{tpu_custom_call.1} parent=11 // pred_fallthru
          _
        // Predicated region
        $region69: #{tpu_custom_call.1} parent=11 // pred_check
          %p831 = pneg %p517
        $region70: #{tpu_custom_call.1} parent=11 // pred_check_branch
          %833 = sbr.rel (%p831) target = $region72
        $region71: #{tpu_custom_call.1} parent=11 // pred_region
          _
        $region72: #{tpu_custom_call.1} parent=11 // pred_fallthru
          _
        // Predicated region
        $region73: #{tpu_custom_call.1} parent=11 // pred_check
          %p834 = pneg %p538
        $region74: #{tpu_custom_call.1} parent=11 // pred_check_branch
          %836 = sbr.rel (%p834) target = $region76
        $region75: #{tpu_custom_call.1} parent=11 // pred_region
          _
        $region76: #{tpu_custom_call.1} parent=11 // pred_fallthru
          _
        // Predicated region
        $region77: #{tpu_custom_call.1} parent=11 // pred_check
          %p837 = pneg %p559
        $region78: #{tpu_custom_call.1} parent=11 // pred_check_branch
          %839 = sbr.rel (%p837) target = $region80
        $region79: #{tpu_custom_call.1} parent=11 // pred_region
          _
        $region80: #{tpu_custom_call.1} parent=11 // pred_fallthru
          _
        // Predicated region
        $region81: #{tpu_custom_call.1} parent=11 // pred_check
          %p840 = pneg %p580
        $region82: #{tpu_custom_call.1} parent=11 // pred_check_branch
          %842 = sbr.rel (%p840) target = $region84
        $region83: #{tpu_custom_call.1} parent=11 // pred_region
          _
        $region84: #{tpu_custom_call.1} parent=11 // pred_fallthru
          _
        // Predicated region
        $region85: #{tpu_custom_call.1} parent=11 // pred_check
          %p843 = pneg %p601
        $region86: #{tpu_custom_call.1} parent=11 // pred_check_branch
          %845 = sbr.rel (%p843) target = $region88
        $region87: #{tpu_custom_call.1} parent=11 // pred_region
          _
        $region88: #{tpu_custom_call.1} parent=11 // pred_fallthru
          _
        // Predicated region
        $region89: #{tpu_custom_call.1} parent=11 // pred_check
          %p846 = pneg %p622
        $region90: #{tpu_custom_call.1} parent=11 // pred_check_branch
          %848 = sbr.rel (%p846) target = $region92
        $region91: #{tpu_custom_call.1} parent=11 // pred_region
          _
        $region92: #{tpu_custom_call.1} parent=11 // pred_fallthru
          _
        // Predicated region
        $region93: #{tpu_custom_call.1} parent=11 // pred_check
          %p849 = pneg %p643
        $region94: #{tpu_custom_call.1} parent=11 // pred_check_branch
          %851 = sbr.rel (%p849) target = $region96
        $region95: #{tpu_custom_call.1} parent=11 // pred_region
          _
        $region96: #{tpu_custom_call.1} parent=11 // pred_fallthru
          _
        // Predicated region
        $region97: #{tpu_custom_call.1} parent=11 // pred_check
          %p852 = pneg %p664
        $region98: #{tpu_custom_call.1} parent=11 // pred_check_branch
          %854 = sbr.rel (%p852) target = $region100
        $region99: #{tpu_custom_call.1} parent=11 // pred_region
          _
        $region100: #{tpu_custom_call.1} parent=11 // pred_fallthru
          _
        // Predicated region
        $region101: #{tpu_custom_call.1} parent=11 // pred_check
          %p855 = pneg %p685
        $region102: #{tpu_custom_call.1} parent=11 // pred_check_branch
          %857 = sbr.rel (%p855) target = $region104
        $region103: #{tpu_custom_call.1} parent=11 // pred_region
          _
        $region104: #{tpu_custom_call.1} parent=11 // pred_fallthru
          _
        // Predicated region
        $region105: #{tpu_custom_call.1} parent=11 // pred_check
          %p858 = pneg %p706
        $region106: #{tpu_custom_call.1} parent=11 // pred_check_branch
          %860 = sbr.rel (%p858) target = $region108
        $region107: #{tpu_custom_call.1} parent=11 // pred_region
          _
        $region108: #{tpu_custom_call.1} parent=11 // pred_fallthru
          _
        // Predicated region
        $region109: #{tpu_custom_call.1} parent=11 // pred_check
          %p861 = pneg %p727
        $region110: #{tpu_custom_call.1} parent=11 // pred_check_branch
          %863 = sbr.rel (%p861) target = $region112
        $region111: #{tpu_custom_call.1} parent=11 // pred_region
          _
        $region112: #{tpu_custom_call.1} parent=11 // pred_fallthru
          _
        // Predicated region
        $region113: #{tpu_custom_call.1} parent=11 // pred_check
          %p864 = pneg %p748
        $region114: #{tpu_custom_call.1} parent=11 // pred_check_branch
          %866 = sbr.rel (%p864) target = $region116
        $region115: #{tpu_custom_call.1} parent=11 // pred_region
          _
        $region116: #{tpu_custom_call.1} parent=11 // pred_fallthru
          _
      $region12: #{tpu_custom_call.1} parent=5 // pred_fallthru
        _
      %p867 = scmp.lt.s32.totalorder %s72, 2
      // Predicated region
      $region117: #{tpu_custom_call.1} parent=5 // pred_check
        %p868 = pneg %p867
      $region118: #{tpu_custom_call.1} parent=5 // pred_check_branch
        %870 = sbr.rel (%p868) target = $region120
      $region119: #{tpu_custom_call.1} parent=5 // pred_region
        // Predicated region
        $region121: #{tpu_custom_call.1} parent=119 // pred_check
          %p871 = pneg %p92
        $region122: #{tpu_custom_call.1} parent=119 // pred_check_branch
          %873 = sbr.rel (%p871) target = $region124
        $region123: #{tpu_custom_call.1} parent=119 // pred_region
          %p874 = scmp.lt.s32.totalorder %s72, 1
          %s875 = scalar_select %p874, %s72, 1
          %s876 = smul.addr %s875, 8
          %s877 = scalar_lea.vmem %s1, %s876
        $region124: #{tpu_custom_call.1} parent=119 // pred_fallthru
          _
        // Predicated region
        $region125: #{tpu_custom_call.1} parent=119 // pred_check
          %p878 = pneg %p118
        $region126: #{tpu_custom_call.1} parent=119 // pred_check_branch
          %880 = sbr.rel (%p878) target = $region128
        $region127: #{tpu_custom_call.1} parent=119 // pred_region
          %p881 = scmp.lt.s32.totalorder %s72, 1
          %s882 = scalar_select %p881, %s72, 1
          %s883 = smul.addr %s882, 8
          %s884 = scalar_lea.vmem %s3, %s883
        $region128: #{tpu_custom_call.1} parent=119 // pred_fallthru
          _
        // Predicated region
        $region129: #{tpu_custom_call.1} parent=119 // pred_check
          %p885 = pneg %p144
        $region130: #{tpu_custom_call.1} parent=119 // pred_check_branch
          %887 = sbr.rel (%p885) target = $region132
        $region131: #{tpu_custom_call.1} parent=119 // pred_region
          %p888 = scmp.lt.s32.totalorder %s72, 1
          %s889 = scalar_select %p888, %s72, 1
          %s890 = smul.addr %s889, 16
          %s891 = smul.addr %s890, 8
          %s892 = scalar_lea.vmem %s5, %s891
        $region132: #{tpu_custom_call.1} parent=119 // pred_fallthru
          _
        // Predicated region
        $region133: #{tpu_custom_call.1} parent=119 // pred_check
          %p893 = pneg %p170
        $region134: #{tpu_custom_call.1} parent=119 // pred_check_branch
          %895 = sbr.rel (%p893) target = $region136
        $region135: #{tpu_custom_call.1} parent=119 // pred_region
          %p896 = scmp.lt.s32.totalorder %s72, 1
          %s897 = scalar_select %p896, %s72, 1
          %s898 = scalar_lea.vmem %s7, %s897
        $region136: #{tpu_custom_call.1} parent=119 // pred_fallthru
          _
        // Predicated region
        $region137: #{tpu_custom_call.1} parent=119 // pred_check
          %p899 = pneg %p196
        $region138: #{tpu_custom_call.1} parent=119 // pred_check_branch
          %901 = sbr.rel (%p899) target = $region140
        $region139: #{tpu_custom_call.1} parent=119 // pred_region
          %p902 = scmp.lt.s32.totalorder %s72, 1
          %s903 = scalar_select %p902, %s72, 1
          %s904 = smul.addr %s903, 8
          %s905 = scalar_lea.vmem %s9, %s904
        $region140: #{tpu_custom_call.1} parent=119 // pred_fallthru
          _
      $region120: #{tpu_custom_call.1} parent=5 // pred_fallthru
        _
      %p906 = scmp.le.s32.totalorder 1, %s72
      %p907 = scmp.lt.s32.totalorder %s72, 3
      %p908 = pnand %p906, %p907
      %p909 = pneg %p908
      // Predicated region
      $region141: #{tpu_custom_call.1} parent=5 // pred_check
        _
      $region142: #{tpu_custom_call.1} parent=5 // pred_check_branch
        %911 = sbr.rel (%p908) target = $region144
      $region143: #{tpu_custom_call.1} parent=5 // pred_region
        %s912 = ssub.s32 %s72, 1
        %p913 = scmp.lt.s32.totalorder %s77, 1
        %s914 = scalar_select %p913, %s77, 1
        %s915 = smul.addr %s914, 8
        %s916 = scalar_lea.vmem %s1, %s915
        %p917 = pneg %p98
        %p918 = pneg %p95
        %p919 = scmp.lt.s32.totalorder %s77, 1
        %s920 = scalar_select %p919, %s77, 1
        %s921 = smul.addr %s920, 8
        %s922 = scalar_lea.vmem %s3, %s921
        %p923 = pneg %p124
        %p924 = pneg %p121
        %p925 = scmp.lt.s32.totalorder %s77, 1
        %s926 = scalar_select %p925, %s77, 1
        %s927 = smul.addr %s926, 16
        %s928 = smul.addr %s927, 8
        %s929 = scalar_lea.vmem %s5, %s928
        %p930 = pneg %p150
        %p931 = pneg %p147
        %p932 = scmp.lt.s32.totalorder %s77, 1
        %s933 = scalar_select %p932, %s77, 1
        %s934 = scalar_lea.vmem %s7, %s933
        %p935 = pneg %p176
        %p936 = pneg %p173
        %p937 = scmp.lt.s32.totalorder %s77, 1
        %s938 = scalar_select %p937, %s77, 1
        %s939 = smul.addr %s938, 8
        %s940 = scalar_lea.vmem %s9, %s939
        %p941 = pneg %p202
        %p942 = pneg %p199
        %p943 = pneg %p223
        %p944 = pneg %p220
        %p945 = pneg %p244
        %p946 = pneg %p241
        %p947 = pneg %p265
        %p948 = pneg %p262
        %p949 = pneg %p286
        %p950 = pneg %p283
        %p951 = pneg %p307
        %p952 = pneg %p304
        %p953 = pneg %p328
        %p954 = pneg %p325
        %p955 = pneg %p349
        %p956 = pneg %p346
        %p957 = pneg %p370
        %p958 = pneg %p367
        %p959 = pneg %p391
        %p960 = pneg %p388
        %p961 = pneg %p412
        %p962 = pneg %p409
        %p963 = pneg %p433
        %p964 = pneg %p430
        %p965 = pneg %p454
        %p966 = pneg %p451
        %p967 = pneg %p475
        %p968 = pneg %p472
        %p969 = pneg %p496
        %p970 = pneg %p493
        %p971 = pneg %p517
        %p972 = pneg %p514
        %p973 = pneg %p538
        %p974 = pneg %p535
        %p975 = pneg %p559
        %p976 = pneg %p556
        %p977 = pneg %p580
        %p978 = pneg %p577
        %p979 = pneg %p601
        %p980 = pneg %p598
        %p981 = pneg %p622
        %p982 = pneg %p619
        %p983 = pneg %p643
        %p984 = pneg %p640
        %p985 = pneg %p664
        %p986 = pneg %p661
        %p987 = pneg %p685
        %p988 = pneg %p682
        %p989 = pneg %p706
        %p990 = pneg %p703
        %p991 = pneg %p727
        %p992 = pneg %p724
        %p993 = pneg %p748
        %p994 = pneg %p745
        %p995 = pneg %p774
        %p996 = pneg %p771
        %s997 = sand.u32 %s761, 1
        %s998 = scalar_lea.sflag [#allocation4], %s997
        %s999 = sand.u32 %s761, 1
        %s1000 = smul.addr %s999, 8
        %s1001 = scalar_lea.vmem [#allocation3], %s1000
        %p1002 = scmp.lt.s32.totalorder %s77, 1
        %s1003 = scalar_select %p1002, %s77, 1
        %s1004 = smul.addr %s1003, 8
        %s1005 = scalar_lea.vmem %s1, %s1004
        %p1006 = scmp.lt.s32.totalorder %s77, 1
        %s1007 = scalar_select %p1006, %s77, 1
        %s1008 = smul.addr %s1007, 8
        %s1009 = scalar_lea.vmem %s3, %s1008
        %p1010 = scmp.lt.s32.totalorder %s77, 1
        %s1011 = scalar_select %p1010, %s77, 1
        %s1012 = smul.addr %s1011, 16
        %s1013 = smul.addr %s1012, 8
        %s1014 = scalar_lea.vmem %s5, %s1013
        %p1015 = scmp.lt.s32.totalorder %s77, 1
        %s1016 = scalar_select %p1015, %s77, 1
        %s1017 = scalar_lea.vmem %s7, %s1016
        %p1018 = scmp.lt.s32.totalorder %s77, 1
        %s1019 = scalar_select %p1018, %s77, 1
        %s1020 = smul.addr %s1019, 8
        %s1021 = scalar_lea.vmem %s9, %s1020
        %v1022 = vld [vmem:[%s1005] sm:$0xff]
        %v1023 = vld [vmem:[%s1009] sm:$0xff]
        %v1024 = vadd.f32 %v1022, %v1023
        %v1025 = vld [vmem:[%s19] sm:$0xff]
        %v1026 = vld [vmem:[%s19 + $0x8] sm:$0xff]
        %v1027 = vld [vmem:[%s19 + $0x10] sm:$0xff]
        %v1028 = vld [vmem:[%s19 + $0x18] sm:$0xff]
        %v1029 = vld [vmem:[%s21] sm:$0x1]
        %v1031 = vperm.slane %v1029, 0
        %vm1033 = vcmask 261120
        %v1035 = vsel %vm1033, %v1024, 0
        %1037 = vmatpush.msra.mxu0 0.0
        %1038 = vmatpush.msra.mxu0 0.0
        %1039 = vmatpush.msra.mxu0 0.0
        %1040 = vmatpush.msra.mxu0 0.0
        %1041 = vmatpush.msra.mxu0 0.0
        %1042 = vmatpush.msra.mxu0 0.0
        %1043 = vmatpush.msra.mxu0 0.0
        %1044 = vmatpush.msra.mxu0 0.0
        %1045 = vmatpush.msra.mxu0 0.0
        %1046 = vmatpush.msra.mxu0 0.0
        %1047 = vmatpush.msra.mxu0 0.0
        %1048 = vmatpush.msra.mxu0 0.0
        %1049 = vmatpush.msra.mxu0 %v1028
        %1050 = vmatpush.msra.mxu0 %v1027
        %1051 = vmatpush.msra.mxu0 %v1026
        %1052 = vmatpush.msra.mxu0 %v1025
        %1053 = vmatmul.f32.gmra.mxu0 %v1035
        %v1054 = vpop.f32.mrf.mxu0
        %v1055 = vadd.f32 %v1031, %v1054
        %1056 = vdwg.mxu0
        %v1057 = vmul.f32 %v1055, 0.35355338
        %v1058 = vld [vmem:[%s23] sm:$0xff]
        %v1059 = vld [vmem:[%s23 + $0x8] sm:$0xff]
        %v1060 = vld [vmem:[%s23 + $0x10] sm:$0xff]
        %v1061 = vld [vmem:[%s23 + $0x18] sm:$0xff]
        %v1062 = vld [vmem:[%s25] sm:$0x1]
        %v1064 = vperm.slane %v1062, 0
        %v1067 = vsel %vm1033, %v1022, 0
        %1069 = vmatpush.msra.mxu0 0.0
        %1070 = vmatpush.msra.mxu0 0.0
        %1071 = vmatpush.msra.mxu0 0.0
        %1072 = vmatpush.msra.mxu0 0.0
        %1073 = vmatpush.msra.mxu0 0.0
        %1074 = vmatpush.msra.mxu0 0.0
        %1075 = vmatpush.msra.mxu0 0.0
        %1076 = vmatpush.msra.mxu0 0.0
        %1077 = vmatpush.msra.mxu0 0.0
        %1078 = vmatpush.msra.mxu0 0.0
        %1079 = vmatpush.msra.mxu0 0.0
        %1080 = vmatpush.msra.mxu0 0.0
        %1081 = vmatpush.msra.mxu0 %v1061
        %1082 = vmatpush.msra.mxu0 %v1060
        %1083 = vmatpush.msra.mxu0 %v1059
        %1084 = vmatpush.msra.mxu0 %v1058
        %1085 = vmatmul.f32.gmra.mxu0 %v1067
        %v1086 = vpop.f32.mrf.mxu0
        %v1087 = vadd.f32 %v1064, %v1086
        %1088 = vdwg.mxu0
        %1090 = vrot.lane.b32.xlu0 %v1055, 96
        %v1091 = vpop.permute.xlu0 %1090
        %vm1092 = vcmask 64512
        %v1094 = vsel %vm1092, %v1057, 0
        %v1096 = vsel %vm1092, %v1091, 0
        %1098 = vmatpush.xpose.msra.mxu0 0.0
        %1099 = vmatpush.xpose.msra.mxu0 0.0
        %1100 = vmatpush.xpose.msra.mxu0 0.0
        %1101 = vmatpush.xpose.msra.mxu0 0.0
        %1102 = vmatpush.xpose.msra.mxu0 0.0
        %1103 = vmatpush.xpose.msra.mxu0 0.0
        %1104 = vmatpush.xpose.msra.mxu0 0.0
        %1105 = vmatpush.xpose.msra.mxu0 0.0
        %1106 = vmatpush.xpose.msra.mxu0 0.0
        %1107 = vmatpush.xpose.msra.mxu0 0.0
        %1108 = vmatpush.xpose.msra.mxu0 0.0
        %1109 = vmatpush.xpose.msra.mxu0 0.0
        %1110 = vmatpush.xpose.msra.mxu0 0.0
        %1111 = vmatpush.xpose.msra.mxu0 0.0
        %1112 = vmatpush.xpose.msra.mxu0 0.0
        %1113 = vmatpush.xpose.msra.mxu0 %v1096
        %1114 = vmatmul.f32.gmra.mxu0 %v1094
        %v1115 = vpop.f32.mrf.mxu0
        %v1116 = vadd.f32 0.0, %v1115
        %1117 = vdwg.mxu0
        %v1118 = vsel %vm1092, %v1116, -inf
        %1119 = vmax.xlane.f32.xlu0 %v1118
        %v1120 = vpop.xlane.xlu0 %1119
        %v1121 = vsub.f32 %v1116, %v1120
        %v1122 = vmul.f32 %v1121, 1.442695
        %v1123 = vpow.pop %v1122
        %v1124 = vsel %vm1092, %v1123, 0.0
        %1125 = vadd.xlane.f32.xlu0 %v1124
        %v1126 = vpop.xlane.xlu0 %1125
        %v1127 = vrcp.pop %v1126
        %v1128 = vmul.f32 %v1123, %v1127
        %v1130 = vsel %vm1092, %v1128, 0
        %1132 = vmatpush.msra.mxu0 0.0
        %1133 = vmatpush.msra.mxu0 0.0
        %1134 = vmatpush.msra.mxu0 0.0
        %1135 = vmatpush.msra.mxu0 0.0
        %1136 = vmatpush.msra.mxu0 0.0
        %1137 = vmatpush.msra.mxu0 0.0
        %1138 = vmatpush.msra.mxu0 0.0
        %1139 = vmatpush.msra.mxu0 0.0
        %1140 = vmatpush.msra.mxu0 0.0
        %1141 = vmatpush.msra.mxu0 0.0
        %1142 = vmatpush.msra.mxu0 0.0
        %1143 = vmatpush.msra.mxu0 0.0
        %1144 = vmatpush.msra.mxu0 0.0
        %1145 = vmatpush.msra.mxu0 0.0
        %1146 = vmatpush.msra.mxu0 0.0
        %1147 = vmatpush.msra.mxu0 %v1087
        %1148 = vmatmul.f32.gmra.mxu0 %v1130
        %v1149 = vpop.f32.mrf.mxu0
        %v1150 = vadd.f32 0.0, %v1149
        %1151 = vdwg.mxu0
        %1152 = vst.msk [vmem:[#allocation2] sm:$0xff] %vm1092, %v1150
        %1153 = vrot.lane.b32.xlu0 %v1057, 120
        %v1154 = vpop.permute.xlu0 %1153
        %1155 = vrot.lane.b32.xlu0 %v1055, 88
        %v1156 = vpop.permute.xlu0 %1155
        %v1157 = vsel %vm1092, %v1154, 0
        %v1159 = vsel %vm1092, %v1156, 0
        %1161 = vmatpush.xpose.msra.mxu0 0.0
        %1162 = vmatpush.xpose.msra.mxu0 0.0
        %1163 = vmatpush.xpose.msra.mxu0 0.0
        %1164 = vmatpush.xpose.msra.mxu0 0.0
        %1165 = vmatpush.xpose.msra.mxu0 0.0
        %1166 = vmatpush.xpose.msra.mxu0 0.0
        %1167 = vmatpush.xpose.msra.mxu0 0.0
        %1168 = vmatpush.xpose.msra.mxu0 0.0
        %1169 = vmatpush.xpose.msra.mxu0 0.0
        %1170 = vmatpush.xpose.msra.mxu0 0.0
        %1171 = vmatpush.xpose.msra.mxu0 0.0
        %1172 = vmatpush.xpose.msra.mxu0 0.0
        %1173 = vmatpush.xpose.msra.mxu0 0.0
        %1174 = vmatpush.xpose.msra.mxu0 0.0
        %1175 = vmatpush.xpose.msra.mxu0 0.0
        %1176 = vmatpush.xpose.msra.mxu0 %v1159
        %1177 = vmatmul.f32.gmra.mxu0 %v1157
        %v1178 = vpop.f32.mrf.mxu0
        %v1179 = vadd.f32 0.0, %v1178
        %1180 = vdwg.mxu0
        %v1181 = vsel %vm1092, %v1179, -inf
        %1182 = vmax.xlane.f32.xlu0 %v1181
        %v1183 = vpop.xlane.xlu0 %1182
        %v1184 = vsub.f32 %v1179, %v1183
        %v1185 = vmul.f32 %v1184, 1.442695
        %v1186 = vpow.pop %v1185
        %v1187 = vsel %vm1092, %v1186, 0.0
        %1188 = vadd.xlane.f32.xlu0 %v1187
        %v1189 = vpop.xlane.xlu0 %1188
        %v1190 = vrcp.pop %v1189
        %v1191 = vmul.f32 %v1186, %v1190
        %1193 = vrot.lane.b32.xlu0 %v1087, 120
        %v1194 = vpop.permute.xlu0 %1193
        %v1197 = vsel %vm1092, %v1191, 0
        %1199 = vmatpush.msra.mxu0 0.0
        %1200 = vmatpush.msra.mxu0 0.0
        %1201 = vmatpush.msra.mxu0 0.0
        %1202 = vmatpush.msra.mxu0 0.0
        %1203 = vmatpush.msra.mxu0 0.0
        %1204 = vmatpush.msra.mxu0 0.0
        %1205 = vmatpush.msra.mxu0 0.0
        %1206 = vmatpush.msra.mxu0 0.0
        %1207 = vmatpush.msra.mxu0 0.0
        %1208 = vmatpush.msra.mxu0 0.0
        %1209 = vmatpush.msra.mxu0 0.0
        %1210 = vmatpush.msra.mxu0 0.0
        %1211 = vmatpush.msra.mxu0 0.0
        %1212 = vmatpush.msra.mxu0 0.0
        %1213 = vmatpush.msra.mxu0 0.0
        %1214 = vmatpush.msra.mxu0 %v1194
        %1215 = vmatmul.f32.gmra.mxu0 %v1197
        %v1216 = vpop.f32.mrf.mxu0
        %v1217 = vadd.f32 0.0, %v1216
        %1218 = vdwg.mxu0
        %1220 = vrot.lane.b32.xlu0 %v1217, 8
        %v1221 = vpop.permute.xlu0 %1220
        %vm1223 = vcmask 130112
        %1224 = vst.msk [vmem:[#allocation2] sm:$0xff] %vm1223, %v1221
        %1225 = vrot.lane.b32.xlu0 %v1057, 112
        %v1226 = vpop.permute.xlu0 %1225
        %1227 = vrot.lane.b32.xlu0 %v1055, 80
        %v1228 = vpop.permute.xlu0 %1227
        %v1229 = vsel %vm1092, %v1226, 0
        %v1231 = vsel %vm1092, %v1228, 0
        %1233 = vmatpush.xpose.msra.mxu0 0.0
        %1234 = vmatpush.xpose.msra.mxu0 0.0
        %1235 = vmatpush.xpose.msra.mxu0 0.0
        %1236 = vmatpush.xpose.msra.mxu0 0.0
        %1237 = vmatpush.xpose.msra.mxu0 0.0
        %1238 = vmatpush.xpose.msra.mxu0 0.0
        %1239 = vmatpush.xpose.msra.mxu0 0.0
        %1240 = vmatpush.xpose.msra.mxu0 0.0
        %1241 = vmatpush.xpose.msra.mxu0 0.0
        %1242 = vmatpush.xpose.msra.mxu0 0.0
        %1243 = vmatpush.xpose.msra.mxu0 0.0
        %1244 = vmatpush.xpose.msra.mxu0 0.0
        %1245 = vmatpush.xpose.msra.mxu0 0.0
        %1246 = vmatpush.xpose.msra.mxu0 0.0
        %1247 = vmatpush.xpose.msra.mxu0 0.0
        %1248 = vmatpush.xpose.msra.mxu0 %v1231
        %1249 = vmatmul.f32.gmra.mxu0 %v1229
        %v1250 = vpop.f32.mrf.mxu0
        %v1251 = vadd.f32 0.0, %v1250
        %1252 = vdwg.mxu0
        %v1253 = vsel %vm1092, %v1251, -inf
        %1254 = vmax.xlane.f32.xlu0 %v1253
        %v1255 = vpop.xlane.xlu0 %1254
        %v1256 = vsub.f32 %v1251, %v1255
        %v1257 = vmul.f32 %v1256, 1.442695
        %v1258 = vpow.pop %v1257
        %v1259 = vsel %vm1092, %v1258, 0.0
        %1260 = vadd.xlane.f32.xlu0 %v1259
        %v1261 = vpop.xlane.xlu0 %1260
        %v1262 = vrcp.pop %v1261
        %v1263 = vmul.f32 %v1258, %v1262
        %1264 = vrot.lane.b32.xlu0 %v1087, 112
        %v1265 = vpop.permute.xlu0 %1264
        %v1268 = vsel %vm1092, %v1263, 0
        %1270 = vmatpush.msra.mxu0 0.0
        %1271 = vmatpush.msra.mxu0 0.0
        %1272 = vmatpush.msra.mxu0 0.0
        %1273 = vmatpush.msra.mxu0 0.0
        %1274 = vmatpush.msra.mxu0 0.0
        %1275 = vmatpush.msra.mxu0 0.0
        %1276 = vmatpush.msra.mxu0 0.0
        %1277 = vmatpush.msra.mxu0 0.0
        %1278 = vmatpush.msra.mxu0 0.0
        %1279 = vmatpush.msra.mxu0 0.0
        %1280 = vmatpush.msra.mxu0 0.0
        %1281 = vmatpush.msra.mxu0 0.0
        %1282 = vmatpush.msra.mxu0 0.0
        %1283 = vmatpush.msra.mxu0 0.0
        %1284 = vmatpush.msra.mxu0 0.0
        %1285 = vmatpush.msra.mxu0 %v1265
        %1286 = vmatmul.f32.gmra.mxu0 %v1268
        %v1287 = vpop.f32.mrf.mxu0
        %v1288 = vadd.f32 0.0, %v1287
        %1289 = vdwg.mxu0
        %1291 = vrot.lane.b32.xlu0 %v1288, 16
        %v1292 = vpop.permute.xlu0 %1291
        %vm1294 = vcmask 195712
        %1295 = vst.msk [vmem:[#allocation2] sm:$0xff] %vm1294, %v1292
        %1296 = vrot.lane.b32.xlu0 %v1057, 104
        %v1297 = vpop.permute.xlu0 %1296
        %1298 = vrot.lane.b32.xlu0 %v1055, 72
        %v1299 = vpop.permute.xlu0 %1298
        %v1300 = vsel %vm1092, %v1297, 0
        %v1302 = vsel %vm1092, %v1299, 0
        %1304 = vmatpush.xpose.msra.mxu0 0.0
        %1305 = vmatpush.xpose.msra.mxu0 0.0
        %1306 = vmatpush.xpose.msra.mxu0 0.0
        %1307 = vmatpush.xpose.msra.mxu0 0.0
        %1308 = vmatpush.xpose.msra.mxu0 0.0
        %1309 = vmatpush.xpose.msra.mxu0 0.0
        %1310 = vmatpush.xpose.msra.mxu0 0.0
        %1311 = vmatpush.xpose.msra.mxu0 0.0
        %1312 = vmatpush.xpose.msra.mxu0 0.0
        %1313 = vmatpush.xpose.msra.mxu0 0.0
        %1314 = vmatpush.xpose.msra.mxu0 0.0
        %1315 = vmatpush.xpose.msra.mxu0 0.0
        %1316 = vmatpush.xpose.msra.mxu0 0.0
        %1317 = vmatpush.xpose.msra.mxu0 0.0
        %1318 = vmatpush.xpose.msra.mxu0 0.0
        %1319 = vmatpush.xpose.msra.mxu0 %v1302
        %1320 = vmatmul.f32.gmra.mxu0 %v1300
        %v1321 = vpop.f32.mrf.mxu0
        %v1322 = vadd.f32 0.0, %v1321
        %1323 = vdwg.mxu0
        %v1324 = vsel %vm1092, %v1322, -inf
        %1325 = vmax.xlane.f32.xlu0 %v1324
        %v1326 = vpop.xlane.xlu0 %1325
        %v1327 = vsub.f32 %v1322, %v1326
        %v1328 = vmul.f32 %v1327, 1.442695
        %v1329 = vpow.pop %v1328
        %v1330 = vsel %vm1092, %v1329, 0.0
        %1331 = vadd.xlane.f32.xlu0 %v1330
        %v1332 = vpop.xlane.xlu0 %1331
        %v1333 = vrcp.pop %v1332
        %v1334 = vmul.f32 %v1329, %v1333
        %1335 = vrot.lane.b32.xlu0 %v1087, 104
        %v1336 = vpop.permute.xlu0 %1335
        %v1339 = vsel %vm1092, %v1334, 0
        %1341 = vmatpush.msra.mxu0 0.0
        %1342 = vmatpush.msra.mxu0 0.0
        %1343 = vmatpush.msra.mxu0 0.0
        %1344 = vmatpush.msra.mxu0 0.0
        %1345 = vmatpush.msra.mxu0 0.0
        %1346 = vmatpush.msra.mxu0 0.0
        %1347 = vmatpush.msra.mxu0 0.0
        %1348 = vmatpush.msra.mxu0 0.0
        %1349 = vmatpush.msra.mxu0 0.0
        %1350 = vmatpush.msra.mxu0 0.0
        %1351 = vmatpush.msra.mxu0 0.0
        %1352 = vmatpush.msra.mxu0 0.0
        %1353 = vmatpush.msra.mxu0 0.0
        %1354 = vmatpush.msra.mxu0 0.0
        %1355 = vmatpush.msra.mxu0 0.0
        %1356 = vmatpush.msra.mxu0 %v1336
        %1357 = vmatmul.f32.gmra.mxu0 %v1339
        %v1358 = vpop.f32.mrf.mxu0
        %v1359 = vadd.f32 0.0, %v1358
        %1360 = vdwg.mxu0
        %1362 = vrot.lane.b32.xlu0 %v1359, 24
        %v1363 = vpop.permute.xlu0 %1362
        %vm1365 = vcmask 261312
        %1366 = vst.msk [vmem:[#allocation2] sm:$0xff] %vm1365, %v1363
        %v1367 = vld [vmem:[#allocation2] sm:$0xff]
        %v1368 = vld [vmem:[%s27] sm:$0xff]
        %v1369 = vld [vmem:[%s27 + $0x8] sm:$0xff]
        %v1370 = vld [vmem:[%s27 + $0x10] sm:$0xff]
        %v1371 = vld [vmem:[%s27 + $0x18] sm:$0xff]
        %v1372 = vld [vmem:[%s29] sm:$0x1]
        %v1374 = vperm.slane %v1372, 0
        %v1377 = vsel %vm1033, %v1367, 0
        %1379 = vmatpush.msra.mxu0 0.0
        %1380 = vmatpush.msra.mxu0 0.0
        %1381 = vmatpush.msra.mxu0 0.0
        %1382 = vmatpush.msra.mxu0 0.0
        %1383 = vmatpush.msra.mxu0 0.0
        %1384 = vmatpush.msra.mxu0 0.0
        %1385 = vmatpush.msra.mxu0 0.0
        %1386 = vmatpush.msra.mxu0 0.0
        %1387 = vmatpush.msra.mxu0 0.0
        %1388 = vmatpush.msra.mxu0 0.0
        %1389 = vmatpush.msra.mxu0 0.0
        %1390 = vmatpush.msra.mxu0 0.0
        %1391 = vmatpush.msra.mxu0 %v1371
        %1392 = vmatpush.msra.mxu0 %v1370
        %1393 = vmatpush.msra.mxu0 %v1369
        %1394 = vmatpush.msra.mxu0 %v1368
        %1395 = vmatmul.f32.gmra.mxu0 %v1377
        %v1396 = vpop.f32.mrf.mxu0
        %v1397 = vadd.f32 %v1374, %v1396
        %1398 = vdwg.mxu0
        %v1399 = vadd.f32 %v1022, %v1397
        %v1400 = vld [vmem:[%s31] sm:$0x1]
        %v1401 = vld [vmem:[%s33] sm:$0x1]
        %v1402 = vsel %vm1033, %v1399, 0.0
        %1403 = vadd.xlane.f32.xlu0 %v1402
        %v1404 = vpop.xlane.xlu0 %1403
        %v1405 = vrcp.pop 32.0
        %v1406 = vmul.f32 32.0, %v1405
        %v1407 = vsub.f32 1.0, %v1406
        %v1408 = vmul.f32 %v1405, %v1407
        %v1409 = vadd.f32 %v1405, %v1408
        %vm1410 = vweird.f32 %v1405
        %v1411 = vsel %vm1410, %v1405, %v1409
        %v1412 = vmul.f32 %v1404, %v1411
        %v1413 = vsub.f32 %v1399, %v1412
        %v1414 = vmul.f32 %v1413, %v1413
        %v1415 = vsel %vm1033, %v1414, 0.0
        %1416 = vadd.xlane.f32.xlu0 %v1415
        %v1417 = vpop.xlane.xlu0 %1416
        %v1418 = vmul.f32 %v1417, %v1411
        %v1419 = vadd.f32 %v1418, 1e-05
        %v1420 = vrsqrt.pop %v1419
        %v1421 = vmul.f32 %v1420, %v1419
        %v1422 = vmul.f32 %v1421, %v1420
        %v1423 = vmul.f32 0.5, %v1422
        %v1424 = vsub.f32 1.5, %v1423
        %v1425 = vmul.f32 %v1420, %v1424
        %vm1426 = vweird.f32 %v1419
        %vm1427 = vweird.f32 %v1420
        %vm1428 = vmor %vm1426, %vm1427
        %v1429 = vsel %vm1428, %v1420, %v1425
        %v1430 = vmul.f32 %v1413, %v1429
        %v1432 = vperm.slane %v1400, 0
        %v1434 = vmul.f32 %v1430, %v1432
        %v1436 = vperm.slane %v1401, 0
        %v1438 = vadd.f32 %v1434, %v1436
        %v1439 = vadd.f32 %v1438, %v1023
        %v1440 = vld [vmem:[%s1014] sm:$0xff]
        %v1441 = vld [vmem:[%s1014 + $0x8] sm:$0xff]
        %v1442 = vld [vmem:[%s1014 + $0x10] sm:$0xff]
        %v1443 = vld [vmem:[%s1014 + $0x18] sm:$0xff]
        %v1444 = vld [vmem:[%s1014 + $0x20] sm:$0xff]
        %v1445 = vld [vmem:[%s1014 + $0x28] sm:$0xff]
        %v1446 = vld [vmem:[%s1014 + $0x30] sm:$0xff]
        %v1447 = vld [vmem:[%s1014 + $0x38] sm:$0xff]
        %v1448 = vld [vmem:[%s1014 + $0x40] sm:$0xff]
        %v1449 = vld [vmem:[%s1014 + $0x48] sm:$0xff]
        %v1450 = vld [vmem:[%s1014 + $0x50] sm:$0xff]
        %v1451 = vld [vmem:[%s1014 + $0x58] sm:$0xff]
        %v1452 = vld [vmem:[%s1014 + $0x60] sm:$0xff]
        %v1453 = vld [vmem:[%s1014 + $0x68] sm:$0xff]
        %v1454 = vld [vmem:[%s1014 + $0x70] sm:$0xff]
        %v1455 = vld [vmem:[%s1014 + $0x78] sm:$0xff]
        %v1456 = vld [vmem:[%s1017] sm:$0x1]
        %v1457 = vld [vmem:[%s1021] sm:$0xff]
        %v1458 = vld [vmem:[%s39] sm:$0xff]
        %v1459 = vld [vmem:[%s39 + $0x8] sm:$0xff]
        %v1460 = vld [vmem:[%s39 + $0x10] sm:$0xff]
        %v1461 = vld [vmem:[%s39 + $0x18] sm:$0xff]
        %v1462 = vld [vmem:[%s41] sm:$0x1]
        %v1464 = vperm.slane %v1462, 0
        %v1467 = vsel %vm1033, %v1440, 0
        %v1470 = vsel %vm1033, %v1441, 0
        %v1473 = vsel %vm1033, %v1442, 0
        %v1476 = vsel %vm1033, %v1443, 0
        %v1479 = vsel %vm1033, %v1444, 0
        %v1482 = vsel %vm1033, %v1445, 0
        %v1485 = vsel %vm1033, %v1446, 0
        %v1488 = vsel %vm1033, %v1447, 0
        %v1491 = vsel %vm1033, %v1448, 0
        %v1494 = vsel %vm1033, %v1449, 0
        %v1497 = vsel %vm1033, %v1450, 0
        %v1500 = vsel %vm1033, %v1451, 0
        %v1503 = vsel %vm1033, %v1452, 0
        %v1506 = vsel %vm1033, %v1453, 0
        %v1509 = vsel %vm1033, %v1454, 0
        %v1512 = vsel %vm1033, %v1455, 0
        %1514 = vmatpush.msra.mxu0 0.0
        %1515 = vmatpush.msra.mxu0 0.0
        %1516 = vmatpush.msra.mxu0 0.0
        %1517 = vmatpush.msra.mxu0 0.0
        %1518 = vmatpush.msra.mxu0 0.0
        %1519 = vmatpush.msra.mxu0 0.0
        %1520 = vmatpush.msra.mxu0 0.0
        %1521 = vmatpush.msra.mxu0 0.0
        %1522 = vmatpush.msra.mxu0 0.0
        %1523 = vmatpush.msra.mxu0 0.0
        %1524 = vmatpush.msra.mxu0 0.0
        %1525 = vmatpush.msra.mxu0 0.0
        %1526 = vmatpush.msra.mxu0 %v1461
        %1527 = vmatpush.msra.mxu0 %v1460
        %1528 = vmatpush.msra.mxu0 %v1459
        %1529 = vmatpush.msra.mxu0 %v1458
        %1530 = vmatmul.f32.gmra.mxu0 %v1467
        %v1531 = vpop.f32.mrf.mxu0
        %v1532 = vadd.f32 %v1464, %v1531
        %1533 = vmatmul.f32.gmra.mxu0 %v1470
        %v1534 = vpop.f32.mrf.mxu0
        %v1535 = vadd.f32 %v1464, %v1534
        %1536 = vmatmul.f32.gmra.mxu0 %v1473
        %v1537 = vpop.f32.mrf.mxu0
        %v1538 = vadd.f32 %v1464, %v1537
        %1539 = vmatmul.f32.gmra.mxu0 %v1476
        %v1540 = vpop.f32.mrf.mxu0
        %v1541 = vadd.f32 %v1464, %v1540
        %1542 = vmatmul.f32.gmra.mxu0 %v1479
        %v1543 = vpop.f32.mrf.mxu0
        %v1544 = vadd.f32 %v1464, %v1543
        %1545 = vmatmul.f32.gmra.mxu0 %v1482
        %v1546 = vpop.f32.mrf.mxu0
        %v1547 = vadd.f32 %v1464, %v1546
        %1548 = vmatmul.f32.gmra.mxu0 %v1485
        %v1549 = vpop.f32.mrf.mxu0
        %v1550 = vadd.f32 %v1464, %v1549
        %1551 = vmatmul.f32.gmra.mxu0 %v1488
        %v1552 = vpop.f32.mrf.mxu0
        %v1553 = vadd.f32 %v1464, %v1552
        %1554 = vmatmul.f32.gmra.mxu0 %v1491
        %v1555 = vpop.f32.mrf.mxu0
        %v1556 = vadd.f32 %v1464, %v1555
        %1557 = vmatmul.f32.gmra.mxu0 %v1494
        %v1558 = vpop.f32.mrf.mxu0
        %v1559 = vadd.f32 %v1464, %v1558
        %1560 = vmatmul.f32.gmra.mxu0 %v1497
        %v1561 = vpop.f32.mrf.mxu0
        %v1562 = vadd.f32 %v1464, %v1561
        %1563 = vmatmul.f32.gmra.mxu0 %v1500
        %v1564 = vpop.f32.mrf.mxu0
        %v1565 = vadd.f32 %v1464, %v1564
        %1566 = vmatmul.f32.gmra.mxu0 %v1503
        %v1567 = vpop.f32.mrf.mxu0
        %v1568 = vadd.f32 %v1464, %v1567
        %1569 = vmatmul.f32.gmra.mxu0 %v1506
        %v1570 = vpop.f32.mrf.mxu0
        %v1571 = vadd.f32 %v1464, %v1570
        %1572 = vmatmul.f32.gmra.mxu0 %v1509
        %v1573 = vpop.f32.mrf.mxu0
        %v1574 = vadd.f32 %v1464, %v1573
        %1575 = vmatmul.f32.gmra.mxu0 %v1512
        %v1576 = vpop.f32.mrf.mxu0
        %v1577 = vadd.f32 %v1464, %v1576
        %1578 = vdwg.mxu0
        %v1579 = vld [vmem:[%s35] sm:$0xff]
        %v1580 = vld [vmem:[%s35 + $0x8] sm:$0xff]
        %v1581 = vld [vmem:[%s35 + $0x10] sm:$0xff]
        %v1582 = vld [vmem:[%s35 + $0x18] sm:$0xff]
        %v1583 = vld [vmem:[%s37] sm:$0x1]
        %v1585 = vperm.slane %v1583, 0
        %v1588 = vsel %vm1033, %v1439, 0
        %1590 = vmatpush.msra.mxu0 0.0
        %1591 = vmatpush.msra.mxu0 0.0
        %1592 = vmatpush.msra.mxu0 0.0
        %1593 = vmatpush.msra.mxu0 0.0
        %1594 = vmatpush.msra.mxu0 0.0
        %1595 = vmatpush.msra.mxu0 0.0
        %1596 = vmatpush.msra.mxu0 0.0
        %1597 = vmatpush.msra.mxu0 0.0
        %1598 = vmatpush.msra.mxu0 0.0
        %1599 = vmatpush.msra.mxu0 0.0
        %1600 = vmatpush.msra.mxu0 0.0
        %1601 = vmatpush.msra.mxu0 0.0
        %1602 = vmatpush.msra.mxu0 %v1582
        %1603 = vmatpush.msra.mxu0 %v1581
        %1604 = vmatpush.msra.mxu0 %v1580
        %1605 = vmatpush.msra.mxu0 %v1579
        %1606 = vmatmul.f32.gmra.mxu0 %v1588
        %v1607 = vpop.f32.mrf.mxu0
        %v1608 = vadd.f32 %v1585, %v1607
        %1609 = vdwg.mxu0
        %vm1610 = vcmask 392448
        %v1611 = vsel %vm1610, %v1608, -inf
        %1612 = vmax.xlane.f32.xlu0 %v1611
        %v1613 = vpop.xlane.xlu0 %1612
        %v1614 = vsub.f32 %v1608, %v1613
        %v1615 = vmul.f32 %v1614, 1.442695
        %v1616 = vpow.pop %v1615
        %v1617 = vld [vmem:[%s13] sm:$0xff]
        %v1618 = vld [vmem:[%s13 + $0x8] sm:$0xff]
        %1620 = vrot.lane.b32.xlu0 %v1616, 96
        %v1621 = vpop.permute.xlu0 %1620
        %vm1622 = vcmask 130048
        %v1623 = vsel %vm1622, %v1621, 0
        %1625 = vmatpush.msra.mxu0 0.0
        %1626 = vmatpush.msra.mxu0 0.0
        %1627 = vmatpush.msra.mxu0 0.0
        %1628 = vmatpush.msra.mxu0 0.0
        %1629 = vmatpush.msra.mxu0 0.0
        %1630 = vmatpush.msra.mxu0 0.0
        %1631 = vmatpush.msra.mxu0 0.0
        %1632 = vmatpush.msra.mxu0 0.0
        %1633 = vmatpush.msra.mxu0 0.0
        %1634 = vmatpush.msra.mxu0 0.0
        %1635 = vmatpush.msra.mxu0 0.0
        %1636 = vmatpush.msra.mxu0 0.0
        %1637 = vmatpush.msra.mxu0 0.0
        %1638 = vmatpush.msra.mxu0 0.0
        %1639 = vmatpush.msra.mxu0 %v1618
        %1640 = vmatpush.msra.mxu0 %v1617
        %1641 = vmatmul.f32.gmra.mxu0 %v1623
        %v1642 = vpop.f32.mrf.mxu0
        %v1643 = vadd.f32 0.0, %v1642
        %1644 = vdwg.mxu0
        %v1645 = vrcp.pop %v1643
        %1647 = vrot.lane.b32.xlu0 %v1645, 32
        %v1648 = vpop.permute.xlu0 %1647
        %v1650 = vmul.f32 %v1616, %v1648
        %v1651 = vld [vmem:[%s11] sm:$0xf]
        %vm1652 = vcmask 31744
        %v1654 = vsel %vm1652, %v1457, 0
        %vm1656 = vcmask 1043456
        %v1658 = vsel %vm1656, %v1651, 0
        %1660 = vmatpush.msra.mxu0 0.0
        %1661 = vmatpush.msra.mxu0 0.0
        %1662 = vmatpush.msra.mxu0 0.0
        %1663 = vmatpush.msra.mxu0 0.0
        %1664 = vmatpush.msra.mxu0 0.0
        %1665 = vmatpush.msra.mxu0 0.0
        %1666 = vmatpush.msra.mxu0 0.0
        %1667 = vmatpush.msra.mxu0 0.0
        %1668 = vmatpush.msra.mxu0 0.0
        %1669 = vmatpush.msra.mxu0 0.0
        %1670 = vmatpush.msra.mxu0 0.0
        %1671 = vmatpush.msra.mxu0 0.0
        %1672 = vmatpush.msra.mxu0 0.0
        %1673 = vmatpush.msra.mxu0 0.0
        %1674 = vmatpush.msra.mxu0 0.0
        %1675 = vmatpush.msra.mxu0 %v1658
        %1676 = vmatmul.f32.gmra.mxu0 %v1654
        %v1677 = vpop.f32.mrf.mxu0
        %v1678 = vadd.f32 %v1608, %v1677
        %1679 = vdwg.mxu0
        %v1680 = vsub.f32 %v1678, 0.5
        %v1681 = vld [vmem:[%s15] sm:$0x3]
        %v1682 = vld [vmem:[%s17] sm:$0x3]
        %1684 = vset.pattern.permute.xlu0 0
        %1685 = vperm.xlu0 %1684, %v1680
        %v1686 = vpop.permute.xlu0 %1685
        %v1688 = vperm.slane %v1681, 0
        %v1689 = vsub.f32 %v1686, %v1688
        %v1690 = vand.u32 2147483647, %v1689
        %v1691 = vsub.f32 1.0, %v1690
        %v1692 = vmax.f32 %v1691, 0.0
        %1693 = vset.pattern.permute.xlu0 1
        %1694 = vperm.xlu0 %1693, %v1680
        %v1695 = vpop.permute.xlu0 %1694
        %v1697 = vperm.slane %v1682, 0
        %v1698 = vsub.f32 %v1695, %v1697
        %v1699 = vand.u32 2147483647, %v1698
        %v1700 = vsub.f32 1.0, %v1699
        %v1701 = vmax.f32 %v1700, 0.0
        %1703 = vset.pattern.permute.xlu0 32
        %1704 = vperm.xlu0 %1703, %v1650
        %v1705 = vpop.permute.xlu0 %1704
        %v1707 = vmul.f32 %v1705, %v1692
        %v1708 = vmul.f32 %v1707, %v1701
        %v1709 = vadd.f32 %v1708, 0.0
        %1710 = vset.pattern.permute.xlu0 2
        %1711 = vperm.xlu0 %1710, %v1680
        %v1712 = vpop.permute.xlu0 %1711
        %v1714 = vsub.f32 %v1712, %v1688
        %v1715 = vand.u32 2147483647, %v1714
        %v1716 = vsub.f32 1.0, %v1715
        %v1717 = vmax.f32 %v1716, 0.0
        %1718 = vset.pattern.permute.xlu0 3
        %1719 = vperm.xlu0 %1718, %v1680
        %v1720 = vpop.permute.xlu0 %1719
        %v1722 = vsub.f32 %v1720, %v1697
        %v1723 = vand.u32 2147483647, %v1722
        %v1724 = vsub.f32 1.0, %v1723
        %v1725 = vmax.f32 %v1724, 0.0
        %1726 = vset.pattern.permute.xlu0 33
        %1727 = vperm.xlu0 %1726, %v1650
        %v1728 = vpop.permute.xlu0 %1727
        %v1730 = vmul.f32 %v1728, %v1717
        %v1731 = vmul.f32 %v1730, %v1725
        %v1732 = vadd.f32 %v1709, %v1731
        %1733 = vset.pattern.permute.xlu0 4
        %1734 = vperm.xlu0 %1733, %v1680
        %v1735 = vpop.permute.xlu0 %1734
        %v1737 = vperm.slane %v1681, 1
        %v1738 = vsub.f32 %v1735, %v1737
        %v1739 = vand.u32 2147483647, %v1738
        %v1740 = vsub.f32 1.0, %v1739
        %v1741 = vmax.f32 %v1740, 0.0
        %1742 = vset.pattern.permute.xlu0 5
        %1743 = vperm.xlu0 %1742, %v1680
        %v1744 = vpop.permute.xlu0 %1743
        %v1746 = vperm.slane %v1682, 1
        %v1747 = vsub.f32 %v1744, %v1746
        %v1748 = vand.u32 2147483647, %v1747
        %v1749 = vsub.f32 1.0, %v1748
        %v1750 = vmax.f32 %v1749, 0.0
        %1751 = vset.pattern.permute.xlu0 34
        %1752 = vperm.xlu0 %1751, %v1650
        %v1753 = vpop.permute.xlu0 %1752
        %v1755 = vmul.f32 %v1753, %v1741
        %v1756 = vmul.f32 %v1755, %v1750
        %v1757 = vadd.f32 %v1732, %v1756
        %1758 = vset.pattern.permute.xlu0 6
        %1759 = vperm.xlu0 %1758, %v1680
        %v1760 = vpop.permute.xlu0 %1759
        %v1762 = vsub.f32 %v1760, %v1737
        %v1763 = vand.u32 2147483647, %v1762
        %v1764 = vsub.f32 1.0, %v1763
        %v1765 = vmax.f32 %v1764, 0.0
        %1766 = vset.pattern.permute.xlu0 7
        %1767 = vperm.xlu0 %1766, %v1680
        %v1768 = vpop.permute.xlu0 %1767
        %v1770 = vsub.f32 %v1768, %v1746
        %v1771 = vand.u32 2147483647, %v1770
        %v1772 = vsub.f32 1.0, %v1771
        %v1773 = vmax.f32 %v1772, 0.0
        %1774 = vset.pattern.permute.xlu0 35
        %1775 = vperm.xlu0 %1774, %v1650
        %v1776 = vpop.permute.xlu0 %1775
        %v1778 = vmul.f32 %v1776, %v1765
        %v1779 = vmul.f32 %v1778, %v1773
        %v1780 = vadd.f32 %v1757, %v1779
        %v1782 = vperm.slane %v1456, 0
        %v1784 = vmul.f32 %v1780, %v1782
        %1785 = vmatpush.msra.mxu0 %v1577
        %1786 = vmatpush.msra.mxu0 %v1574
        %1787 = vmatpush.msra.mxu0 %v1571
        %1788 = vmatpush.msra.mxu0 %v1568
        %1789 = vmatpush.msra.mxu0 %v1565
        %1790 = vmatpush.msra.mxu0 %v1562
        %1791 = vmatpush.msra.mxu0 %v1559
        %1792 = vmatpush.msra.mxu0 %v1556
        %1793 = vmatpush.msra.mxu0 %v1553
        %1794 = vmatpush.msra.mxu0 %v1550
        %1795 = vmatpush.msra.mxu0 %v1547
        %1796 = vmatpush.msra.mxu0 %v1544
        %1797 = vmatpush.msra.mxu0 %v1541
        %1798 = vmatpush.msra.mxu0 %v1538
        %1799 = vmatpush.msra.mxu0 %v1535
        %1800 = vmatpush.msra.mxu0 %v1532
        %1801 = vmatmul.f32.gmra.mxu0 %v1784
        %v1802 = vpop.f32.mrf.mxu0
        %v1803 = vadd.f32 0.0, %v1802
        %1804 = vdwg.mxu0
        %1805 = vst.msk [vmem:[#allocation2] sm:$0xff] %vm1092, %v1803
        %1806 = vset.pattern.permute.xlu0 8
        %1807 = vperm.xlu0 %1806, %v1680
        %v1808 = vpop.permute.xlu0 %1807
        %v1810 = vsub.f32 %v1808, %v1688
        %v1811 = vand.u32 2147483647, %v1810
        %v1812 = vsub.f32 1.0, %v1811
        %v1813 = vmax.f32 %v1812, 0.0
        %1814 = vset.pattern.permute.xlu0 9
        %1815 = vperm.xlu0 %1814, %v1680
        %v1816 = vpop.permute.xlu0 %1815
        %v1818 = vsub.f32 %v1816, %v1697
        %v1819 = vand.u32 2147483647, %v1818
        %v1820 = vsub.f32 1.0, %v1819
        %v1821 = vmax.f32 %v1820, 0.0
        %1822 = vset.pattern.permute.xlu0 36
        %1823 = vperm.xlu0 %1822, %v1650
        %v1824 = vpop.permute.xlu0 %1823
        %v1826 = vmul.f32 %v1824, %v1813
        %v1827 = vmul.f32 %v1826, %v1821
        %v1828 = vadd.f32 %v1827, 0.0
        %1829 = vset.pattern.permute.xlu0 10
        %1830 = vperm.xlu0 %1829, %v1680
        %v1831 = vpop.permute.xlu0 %1830
        %v1833 = vsub.f32 %v1831, %v1688
        %v1834 = vand.u32 2147483647, %v1833
        %v1835 = vsub.f32 1.0, %v1834
        %v1836 = vmax.f32 %v1835, 0.0
        %1837 = vset.pattern.permute.xlu0 11
        %1838 = vperm.xlu0 %1837, %v1680
        %v1839 = vpop.permute.xlu0 %1838
        %v1841 = vsub.f32 %v1839, %v1697
        %v1842 = vand.u32 2147483647, %v1841
        %v1843 = vsub.f32 1.0, %v1842
        %v1844 = vmax.f32 %v1843, 0.0
        %1845 = vset.pattern.permute.xlu0 37
        %1846 = vperm.xlu0 %1845, %v1650
        %v1847 = vpop.permute.xlu0 %1846
        %v1849 = vmul.f32 %v1847, %v1836
        %v1850 = vmul.f32 %v1849, %v1844
        %v1851 = vadd.f32 %v1828, %v1850
        %1852 = vset.pattern.permute.xlu0 12
        %1853 = vperm.xlu0 %1852, %v1680
        %v1854 = vpop.permute.xlu0 %1853
        %v1856 = vsub.f32 %v1854, %v1737
        %v1857 = vand.u32 2147483647, %v1856
        %v1858 = vsub.f32 1.0, %v1857
        %v1859 = vmax.f32 %v1858, 0.0
        %1860 = vset.pattern.permute.xlu0 13
        %1861 = vperm.xlu0 %1860, %v1680
        %v1862 = vpop.permute.xlu0 %1861
        %v1864 = vsub.f32 %v1862, %v1746
        %v1865 = vand.u32 2147483647, %v1864
        %v1866 = vsub.f32 1.0, %v1865
        %v1867 = vmax.f32 %v1866, 0.0
        %1868 = vset.pattern.permute.xlu0 38
        %1869 = vperm.xlu0 %1868, %v1650
        %v1870 = vpop.permute.xlu0 %1869
        %v1872 = vmul.f32 %v1870, %v1859
        %v1873 = vmul.f32 %v1872, %v1867
        %v1874 = vadd.f32 %v1851, %v1873
        %1875 = vset.pattern.permute.xlu0 14
        %1876 = vperm.xlu0 %1875, %v1680
        %v1877 = vpop.permute.xlu0 %1876
        %v1879 = vsub.f32 %v1877, %v1737
        %v1880 = vand.u32 2147483647, %v1879
        %v1881 = vsub.f32 1.0, %v1880
        %v1882 = vmax.f32 %v1881, 0.0
        %1883 = vset.pattern.permute.xlu0 15
        %1884 = vperm.xlu0 %1883, %v1680
        %v1885 = vpop.permute.xlu0 %1884
        %v1887 = vsub.f32 %v1885, %v1746
        %v1888 = vand.u32 2147483647, %v1887
        %v1889 = vsub.f32 1.0, %v1888
        %v1890 = vmax.f32 %v1889, 0.0
        %1891 = vset.pattern.permute.xlu0 39
        %1892 = vperm.xlu0 %1891, %v1650
        %v1893 = vpop.permute.xlu0 %1892
        %v1895 = vmul.f32 %v1893, %v1882
        %v1896 = vmul.f32 %v1895, %v1890
        %v1897 = vadd.f32 %v1874, %v1896
        %v1898 = vmul.f32 %v1897, %v1782
        %1915 = vrot.lane.b32.xlu0 %v1532, 120
        %v1916 = vpop.permute.xlu0 %1915
        %1917 = vrot.lane.b32.xlu0 %v1535, 120
        %v1918 = vpop.permute.xlu0 %1917
        %1919 = vrot.lane.b32.xlu0 %v1538, 120
        %v1920 = vpop.permute.xlu0 %1919
        %1921 = vrot.lane.b32.xlu0 %v1541, 120
        %v1922 = vpop.permute.xlu0 %1921
        %1923 = vrot.lane.b32.xlu0 %v1544, 120
        %v1924 = vpop.permute.xlu0 %1923
        %1925 = vrot.lane.b32.xlu0 %v1547, 120
        %v1926 = vpop.permute.xlu0 %1925
        %1927 = vrot.lane.b32.xlu0 %v1550, 120
        %v1928 = vpop.permute.xlu0 %1927
        %1929 = vrot.lane.b32.xlu0 %v1553, 120
        %v1930 = vpop.permute.xlu0 %1929
        %1931 = vrot.lane.b32.xlu0 %v1556, 120
        %v1932 = vpop.permute.xlu0 %1931
        %1933 = vrot.lane.b32.xlu0 %v1559, 120
        %v1934 = vpop.permute.xlu0 %1933
        %1935 = vrot.lane.b32.xlu0 %v1562, 120
        %v1936 = vpop.permute.xlu0 %1935
        %1937 = vrot.lane.b32.xlu0 %v1565, 120
        %v1938 = vpop.permute.xlu0 %1937
        %1939 = vrot.lane.b32.xlu0 %v1568, 120
        %v1940 = vpop.permute.xlu0 %1939
        %1941 = vrot.lane.b32.xlu0 %v1571, 120
        %v1942 = vpop.permute.xlu0 %1941
        %1943 = vrot.lane.b32.xlu0 %v1574, 120
        %v1944 = vpop.permute.xlu0 %1943
        %1945 = vrot.lane.b32.xlu0 %v1577, 120
        %v1946 = vpop.permute.xlu0 %1945
        %1963 = vmatpush.msra.mxu0 %v1946
        %1964 = vmatpush.msra.mxu0 %v1944
        %1965 = vmatpush.msra.mxu0 %v1942
        %1966 = vmatpush.msra.mxu0 %v1940
        %1967 = vmatpush.msra.mxu0 %v1938
        %1968 = vmatpush.msra.mxu0 %v1936
        %1969 = vmatpush.msra.mxu0 %v1934
        %1970 = vmatpush.msra.mxu0 %v1932
        %1971 = vmatpush.msra.mxu0 %v1930
        %1972 = vmatpush.msra.mxu0 %v1928
        %1973 = vmatpush.msra.mxu0 %v1926
        %1974 = vmatpush.msra.mxu0 %v1924
        %1975 = vmatpush.msra.mxu0 %v1922
        %1976 = vmatpush.msra.mxu0 %v1920
        %1977 = vmatpush.msra.mxu0 %v1918
        %1978 = vmatpush.msra.mxu0 %v1916
        %1979 = vmatmul.f32.gmra.mxu0 %v1898
        %v1980 = vpop.f32.mrf.mxu0
        %v1981 = vadd.f32 0.0, %v1980
        %1982 = vdwg.mxu0
        %1984 = vrot.lane.b32.xlu0 %v1981, 8
        %v1985 = vpop.permute.xlu0 %1984
        %1987 = vst.msk [vmem:[#allocation2] sm:$0xff] %vm1223, %v1985
        %1988 = vset.pattern.permute.xlu0 16
        %1989 = vperm.xlu0 %1988, %v1680
        %v1990 = vpop.permute.xlu0 %1989
        %v1992 = vsub.f32 %v1990, %v1688
        %v1993 = vand.u32 2147483647, %v1992
        %v1994 = vsub.f32 1.0, %v1993
        %v1995 = vmax.f32 %v1994, 0.0
        %1996 = vset.pattern.permute.xlu0 17
        %1997 = vperm.xlu0 %1996, %v1680
        %v1998 = vpop.permute.xlu0 %1997
        %v2000 = vsub.f32 %v1998, %v1697
        %v2001 = vand.u32 2147483647, %v2000
        %v2002 = vsub.f32 1.0, %v2001
        %v2003 = vmax.f32 %v2002, 0.0
        %2004 = vset.pattern.permute.xlu0 40
        %2005 = vperm.xlu0 %2004, %v1650
        %v2006 = vpop.permute.xlu0 %2005
        %v2008 = vmul.f32 %v2006, %v1995
        %v2009 = vmul.f32 %v2008, %v2003
        %v2010 = vadd.f32 %v2009, 0.0
        %2011 = vset.pattern.permute.xlu0 18
        %2012 = vperm.xlu0 %2011, %v1680
        %v2013 = vpop.permute.xlu0 %2012
        %v2015 = vsub.f32 %v2013, %v1688
        %v2016 = vand.u32 2147483647, %v2015
        %v2017 = vsub.f32 1.0, %v2016
        %v2018 = vmax.f32 %v2017, 0.0
        %2019 = vset.pattern.permute.xlu0 19
        %2020 = vperm.xlu0 %2019, %v1680
        %v2021 = vpop.permute.xlu0 %2020
        %v2023 = vsub.f32 %v2021, %v1697
        %v2024 = vand.u32 2147483647, %v2023
        %v2025 = vsub.f32 1.0, %v2024
        %v2026 = vmax.f32 %v2025, 0.0
        %2027 = vset.pattern.permute.xlu0 41
        %2028 = vperm.xlu0 %2027, %v1650
        %v2029 = vpop.permute.xlu0 %2028
        %v2031 = vmul.f32 %v2029, %v2018
        %v2032 = vmul.f32 %v2031, %v2026
        %v2033 = vadd.f32 %v2010, %v2032
        %2034 = vset.pattern.permute.xlu0 20
        %2035 = vperm.xlu0 %2034, %v1680
        %v2036 = vpop.permute.xlu0 %2035
        %v2038 = vsub.f32 %v2036, %v1737
        %v2039 = vand.u32 2147483647, %v2038
        %v2040 = vsub.f32 1.0, %v2039
        %v2041 = vmax.f32 %v2040, 0.0
        %2042 = vset.pattern.permute.xlu0 21
        %2043 = vperm.xlu0 %2042, %v1680
        %v2044 = vpop.permute.xlu0 %2043
        %v2046 = vsub.f32 %v2044, %v1746
        %v2047 = vand.u32 2147483647, %v2046
        %v2048 = vsub.f32 1.0, %v2047
        %v2049 = vmax.f32 %v2048, 0.0
        %2050 = vset.pattern.permute.xlu0 42
        %2051 = vperm.xlu0 %2050, %v1650
        %v2052 = vpop.permute.xlu0 %2051
        %v2054 = vmul.f32 %v2052, %v2041
        %v2055 = vmul.f32 %v2054, %v2049
        %v2056 = vadd.f32 %v2033, %v2055
        %2057 = vset.pattern.permute.xlu0 22
        %2058 = vperm.xlu0 %2057, %v1680
        %v2059 = vpop.permute.xlu0 %2058
        %v2061 = vsub.f32 %v2059, %v1737
        %v2062 = vand.u32 2147483647, %v2061
        %v2063 = vsub.f32 1.0, %v2062
        %v2064 = vmax.f32 %v2063, 0.0
        %2065 = vset.pattern.permute.xlu0 23
        %2066 = vperm.xlu0 %2065, %v1680
        %v2067 = vpop.permute.xlu0 %2066
        %v2069 = vsub.f32 %v2067, %v1746
        %v2070 = vand.u32 2147483647, %v2069
        %v2071 = vsub.f32 1.0, %v2070
        %v2072 = vmax.f32 %v2071, 0.0
        %2073 = vset.pattern.permute.xlu0 43
        %2074 = vperm.xlu0 %2073, %v1650
        %v2075 = vpop.permute.xlu0 %2074
        %v2077 = vmul.f32 %v2075, %v2064
        %v2078 = vmul.f32 %v2077, %v2072
        %v2079 = vadd.f32 %v2056, %v2078
        %v2080 = vmul.f32 %v2079, %v1782
        %2081 = vrot.lane.b32.xlu0 %v1532, 112
        %v2082 = vpop.permute.xlu0 %2081
        %2083 = vrot.lane.b32.xlu0 %v1535, 112
        %v2084 = vpop.permute.xlu0 %2083
        %2085 = vrot.lane.b32.xlu0 %v1538, 112
        %v2086 = vpop.permute.xlu0 %2085
        %2087 = vrot.lane.b32.xlu0 %v1541, 112
        %v2088 = vpop.permute.xlu0 %2087
        %2089 = vrot.lane.b32.xlu0 %v1544, 112
        %v2090 = vpop.permute.xlu0 %2089
        %2091 = vrot.lane.b32.xlu0 %v1547, 112
        %v2092 = vpop.permute.xlu0 %2091
        %2093 = vrot.lane.b32.xlu0 %v1550, 112
        %v2094 = vpop.permute.xlu0 %2093
        %2095 = vrot.lane.b32.xlu0 %v1553, 112
        %v2096 = vpop.permute.xlu0 %2095
        %2097 = vrot.lane.b32.xlu0 %v1556, 112
        %v2098 = vpop.permute.xlu0 %2097
        %2099 = vrot.lane.b32.xlu0 %v1559, 112
        %v2100 = vpop.permute.xlu0 %2099
        %2101 = vrot.lane.b32.xlu0 %v1562, 112
        %v2102 = vpop.permute.xlu0 %2101
        %2103 = vrot.lane.b32.xlu0 %v1565, 112
        %v2104 = vpop.permute.xlu0 %2103
        %2105 = vrot.lane.b32.xlu0 %v1568, 112
        %v2106 = vpop.permute.xlu0 %2105
        %2107 = vrot.lane.b32.xlu0 %v1571, 112
        %v2108 = vpop.permute.xlu0 %2107
        %2109 = vrot.lane.b32.xlu0 %v1574, 112
        %v2110 = vpop.permute.xlu0 %2109
        %2111 = vrot.lane.b32.xlu0 %v1577, 112
        %v2112 = vpop.permute.xlu0 %2111
        %2129 = vmatpush.msra.mxu0 %v2112
        %2130 = vmatpush.msra.mxu0 %v2110
        %2131 = vmatpush.msra.mxu0 %v2108
        %2132 = vmatpush.msra.mxu0 %v2106
        %2133 = vmatpush.msra.mxu0 %v2104
        %2134 = vmatpush.msra.mxu0 %v2102
        %2135 = vmatpush.msra.mxu0 %v2100
        %2136 = vmatpush.msra.mxu0 %v2098
        %2137 = vmatpush.msra.mxu0 %v2096
        %2138 = vmatpush.msra.mxu0 %v2094
        %2139 = vmatpush.msra.mxu0 %v2092
        %2140 = vmatpush.msra.mxu0 %v2090
        %2141 = vmatpush.msra.mxu0 %v2088
        %2142 = vmatpush.msra.mxu0 %v2086
        %2143 = vmatpush.msra.mxu0 %v2084
        %2144 = vmatpush.msra.mxu0 %v2082
        %2145 = vmatmul.f32.gmra.mxu0 %v2080
        %v2146 = vpop.f32.mrf.mxu0
        %v2147 = vadd.f32 0.0, %v2146
        %2148 = vdwg.mxu0
        %2150 = vrot.lane.b32.xlu0 %v2147, 16
        %v2151 = vpop.permute.xlu0 %2150
        %2153 = vst.msk [vmem:[#allocation2] sm:$0xff] %vm1294, %v2151
        %2154 = vset.pattern.permute.xlu0 24
        %2155 = vperm.xlu0 %2154, %v1680
        %v2156 = vpop.permute.xlu0 %2155
        %v2158 = vsub.f32 %v2156, %v1688
        %v2159 = vand.u32 2147483647, %v2158
        %v2160 = vsub.f32 1.0, %v2159
        %v2161 = vmax.f32 %v2160, 0.0
        %2162 = vset.pattern.permute.xlu0 25
        %2163 = vperm.xlu0 %2162, %v1680
        %v2164 = vpop.permute.xlu0 %2163
        %v2166 = vsub.f32 %v2164, %v1697
        %v2167 = vand.u32 2147483647, %v2166
        %v2168 = vsub.f32 1.0, %v2167
        %v2169 = vmax.f32 %v2168, 0.0
        %2170 = vset.pattern.permute.xlu0 44
        %2171 = vperm.xlu0 %2170, %v1650
        %v2172 = vpop.permute.xlu0 %2171
        %v2174 = vmul.f32 %v2172, %v2161
        %v2175 = vmul.f32 %v2174, %v2169
        %v2176 = vadd.f32 %v2175, 0.0
        %2177 = vset.pattern.permute.xlu0 26
        %2178 = vperm.xlu0 %2177, %v1680
        %v2179 = vpop.permute.xlu0 %2178
        %v2181 = vsub.f32 %v2179, %v1688
        %v2182 = vand.u32 2147483647, %v2181
        %v2183 = vsub.f32 1.0, %v2182
        %v2184 = vmax.f32 %v2183, 0.0
        %2185 = vset.pattern.permute.xlu0 27
        %2186 = vperm.xlu0 %2185, %v1680
        %v2187 = vpop.permute.xlu0 %2186
        %v2189 = vsub.f32 %v2187, %v1697
        %v2190 = vand.u32 2147483647, %v2189
        %v2191 = vsub.f32 1.0, %v2190
        %v2192 = vmax.f32 %v2191, 0.0
        %2193 = vset.pattern.permute.xlu0 45
        %2194 = vperm.xlu0 %2193, %v1650
        %v2195 = vpop.permute.xlu0 %2194
        %v2197 = vmul.f32 %v2195, %v2184
        %v2198 = vmul.f32 %v2197, %v2192
        %v2199 = vadd.f32 %v2176, %v2198
        %2200 = vset.pattern.permute.xlu0 28
        %2201 = vperm.xlu0 %2200, %v1680
        %v2202 = vpop.permute.xlu0 %2201
        %v2204 = vsub.f32 %v2202, %v1737
        %v2205 = vand.u32 2147483647, %v2204
        %v2206 = vsub.f32 1.0, %v2205
        %v2207 = vmax.f32 %v2206, 0.0
        %2208 = vset.pattern.permute.xlu0 29
        %2209 = vperm.xlu0 %2208, %v1680
        %v2210 = vpop.permute.xlu0 %2209
        %v2212 = vsub.f32 %v2210, %v1746
        %v2213 = vand.u32 2147483647, %v2212
        %v2214 = vsub.f32 1.0, %v2213
        %v2215 = vmax.f32 %v2214, 0.0
        %2216 = vset.pattern.permute.xlu0 46
        %2217 = vperm.xlu0 %2216, %v1650
        %v2218 = vpop.permute.xlu0 %2217
        %v2220 = vmul.f32 %v2218, %v2207
        %v2221 = vmul.f32 %v2220, %v2215
        %v2222 = vadd.f32 %v2199, %v2221
        %2223 = vset.pattern.permute.xlu0 30
        %2224 = vperm.xlu0 %2223, %v1680
        %v2225 = vpop.permute.xlu0 %2224
        %v2227 = vsub.f32 %v2225, %v1737
        %v2228 = vand.u32 2147483647, %v2227
        %v2229 = vsub.f32 1.0, %v2228
        %v2230 = vmax.f32 %v2229, 0.0
        %2231 = vset.pattern.permute.xlu0 31
        %2232 = vperm.xlu0 %2231, %v1680
        %v2233 = vpop.permute.xlu0 %2232
        %v2235 = vsub.f32 %v2233, %v1746
        %v2236 = vand.u32 2147483647, %v2235
        %v2237 = vsub.f32 1.0, %v2236
        %v2238 = vmax.f32 %v2237, 0.0
        %2239 = vset.pattern.permute.xlu0 47
        %2240 = vperm.xlu0 %2239, %v1650
        %v2241 = vpop.permute.xlu0 %2240
        %v2243 = vmul.f32 %v2241, %v2230
        %v2244 = vmul.f32 %v2243, %v2238
        %v2245 = vadd.f32 %v2222, %v2244
        %v2246 = vmul.f32 %v2245, %v1782
        %2247 = vrot.lane.b32.xlu0 %v1532, 104
        %v2248 = vpop.permute.xlu0 %2247
        %2249 = vrot.lane.b32.xlu0 %v1535, 104
        %v2250 = vpop.permute.xlu0 %2249
        %2251 = vrot.lane.b32.xlu0 %v1538, 104
        %v2252 = vpop.permute.xlu0 %2251
        %2253 = vrot.lane.b32.xlu0 %v1541, 104
        %v2254 = vpop.permute.xlu0 %2253
        %2255 = vrot.lane.b32.xlu0 %v1544, 104
        %v2256 = vpop.permute.xlu0 %2255
        %2257 = vrot.lane.b32.xlu0 %v1547, 104
        %v2258 = vpop.permute.xlu0 %2257
        %2259 = vrot.lane.b32.xlu0 %v1550, 104
        %v2260 = vpop.permute.xlu0 %2259
        %2261 = vrot.lane.b32.xlu0 %v1553, 104
        %v2262 = vpop.permute.xlu0 %2261
        %2263 = vrot.lane.b32.xlu0 %v1556, 104
        %v2264 = vpop.permute.xlu0 %2263
        %2265 = vrot.lane.b32.xlu0 %v1559, 104
        %v2266 = vpop.permute.xlu0 %2265
        %2267 = vrot.lane.b32.xlu0 %v1562, 104
        %v2268 = vpop.permute.xlu0 %2267
        %2269 = vrot.lane.b32.xlu0 %v1565, 104
        %v2270 = vpop.permute.xlu0 %2269
        %2271 = vrot.lane.b32.xlu0 %v1568, 104
        %v2272 = vpop.permute.xlu0 %2271
        %2273 = vrot.lane.b32.xlu0 %v1571, 104
        %v2274 = vpop.permute.xlu0 %2273
        %2275 = vrot.lane.b32.xlu0 %v1574, 104
        %v2276 = vpop.permute.xlu0 %2275
        %2277 = vrot.lane.b32.xlu0 %v1577, 104
        %v2278 = vpop.permute.xlu0 %2277
        %2295 = vmatpush.msra.mxu0 %v2278
        %2296 = vmatpush.msra.mxu0 %v2276
        %2297 = vmatpush.msra.mxu0 %v2274
        %2298 = vmatpush.msra.mxu0 %v2272
        %2299 = vmatpush.msra.mxu0 %v2270
        %2300 = vmatpush.msra.mxu0 %v2268
        %2301 = vmatpush.msra.mxu0 %v2266
        %2302 = vmatpush.msra.mxu0 %v2264
        %2303 = vmatpush.msra.mxu0 %v2262
        %2304 = vmatpush.msra.mxu0 %v2260
        %2305 = vmatpush.msra.mxu0 %v2258
        %2306 = vmatpush.msra.mxu0 %v2256
        %2307 = vmatpush.msra.mxu0 %v2254
        %2308 = vmatpush.msra.mxu0 %v2252
        %2309 = vmatpush.msra.mxu0 %v2250
        %2310 = vmatpush.msra.mxu0 %v2248
        %2311 = vmatmul.f32.gmra.mxu0 %v2246
        %v2312 = vpop.f32.mrf.mxu0
        %v2313 = vadd.f32 0.0, %v2312
        %2314 = vdwg.mxu0
        %2316 = vrot.lane.b32.xlu0 %v2313, 24
        %v2317 = vpop.permute.xlu0 %2316
        %2319 = vst.msk [vmem:[#allocation2] sm:$0xff] %vm1365, %v2317
        %v2320 = vld [vmem:[#allocation2] sm:$0xff]
        %v2321 = vld [vmem:[%s43] sm:$0xff]
        %v2322 = vld [vmem:[%s43 + $0x8] sm:$0xff]
        %v2323 = vld [vmem:[%s43 + $0x10] sm:$0xff]
        %v2324 = vld [vmem:[%s43 + $0x18] sm:$0xff]
        %v2325 = vld [vmem:[%s45] sm:$0x1]
        %v2327 = vperm.slane %v2325, 0
        %v2330 = vsel %vm1033, %v2320, 0
        %2332 = vmatpush.msra.mxu0 0.0
        %2333 = vmatpush.msra.mxu0 0.0
        %2334 = vmatpush.msra.mxu0 0.0
        %2335 = vmatpush.msra.mxu0 0.0
        %2336 = vmatpush.msra.mxu0 0.0
        %2337 = vmatpush.msra.mxu0 0.0
        %2338 = vmatpush.msra.mxu0 0.0
        %2339 = vmatpush.msra.mxu0 0.0
        %2340 = vmatpush.msra.mxu0 0.0
        %2341 = vmatpush.msra.mxu0 0.0
        %2342 = vmatpush.msra.mxu0 0.0
        %2343 = vmatpush.msra.mxu0 0.0
        %2344 = vmatpush.msra.mxu0 %v2324
        %2345 = vmatpush.msra.mxu0 %v2323
        %2346 = vmatpush.msra.mxu0 %v2322
        %2347 = vmatpush.msra.mxu0 %v2321
        %2348 = vmatmul.f32.gmra.mxu0 %v2330
        %v2349 = vpop.f32.mrf.mxu0
        %v2350 = vadd.f32 %v2327, %v2349
        %2351 = vdwg.mxu0
        %v2352 = vadd.f32 %v1438, %v2350
        %v2353 = vld [vmem:[%s47] sm:$0x1]
        %v2354 = vld [vmem:[%s49] sm:$0x1]
        %v2355 = vsel %vm1033, %v2352, 0.0
        %2356 = vadd.xlane.f32.xlu0 %v2355
        %v2357 = vpop.xlane.xlu0 %2356
        %v2358 = vmul.f32 %v2357, %v1411
        %v2359 = vsub.f32 %v2352, %v2358
        %v2360 = vmul.f32 %v2359, %v2359
        %v2361 = vsel %vm1033, %v2360, 0.0
        %2362 = vadd.xlane.f32.xlu0 %v2361
        %v2363 = vpop.xlane.xlu0 %2362
        %v2364 = vmul.f32 %v2363, %v1411
        %v2365 = vadd.f32 %v2364, 1e-05
        %v2366 = vrsqrt.pop %v2365
        %v2367 = vmul.f32 %v2366, %v2365
        %v2368 = vmul.f32 %v2367, %v2366
        %v2369 = vmul.f32 0.5, %v2368
        %v2370 = vsub.f32 1.5, %v2369
        %v2371 = vmul.f32 %v2366, %v2370
        %vm2372 = vweird.f32 %v2365
        %vm2373 = vweird.f32 %v2366
        %vm2374 = vmor %vm2372, %vm2373
        %v2375 = vsel %vm2374, %v2366, %v2371
        %v2376 = vmul.f32 %v2359, %v2375
        %v2378 = vperm.slane %v2353, 0
        %v2380 = vmul.f32 %v2376, %v2378
        %v2382 = vperm.slane %v2354, 0
        %v2384 = vadd.f32 %v2380, %v2382
        %v2385 = vld [vmem:[%s51] sm:$0xff]
        %v2386 = vld [vmem:[%s51 + $0x8] sm:$0xff]
        %v2387 = vld [vmem:[%s51 + $0x10] sm:$0xff]
        %v2388 = vld [vmem:[%s51 + $0x18] sm:$0xff]
        %v2389 = vld [vmem:[%s53] sm:$0x1]
        %v2391 = vperm.slane %v2389, 0
        %v2394 = vsel %vm1033, %v2384, 0
        %2396 = vmatpush.msra.mxu0 0.0
        %2397 = vmatpush.msra.mxu0 0.0
        %2398 = vmatpush.msra.mxu0 0.0
        %2399 = vmatpush.msra.mxu0 0.0
        %2400 = vmatpush.msra.mxu0 0.0
        %2401 = vmatpush.msra.mxu0 0.0
        %2402 = vmatpush.msra.mxu0 0.0
        %2403 = vmatpush.msra.mxu0 0.0
        %2404 = vmatpush.msra.mxu0 0.0
        %2405 = vmatpush.msra.mxu0 0.0
        %2406 = vmatpush.msra.mxu0 0.0
        %2407 = vmatpush.msra.mxu0 0.0
        %2408 = vmatpush.msra.mxu0 %v2388
        %2409 = vmatpush.msra.mxu0 %v2387
        %2410 = vmatpush.msra.mxu0 %v2386
        %2411 = vmatpush.msra.mxu0 %v2385
        %2412 = vmatmul.f32.gmra.mxu0 %v2394
        %v2413 = vpop.f32.mrf.mxu0
        %v2414 = vadd.f32 %v2391, %v2413
        %2415 = vdwg.mxu0
        %v2416 = vmax.f32 %v2414, 0.0
        %v2417 = vld [vmem:[%s55] sm:$0xff]
        %v2418 = vld [vmem:[%s55 + $0x8] sm:$0xff]
        %v2419 = vld [vmem:[%s55 + $0x10] sm:$0xff]
        %v2420 = vld [vmem:[%s55 + $0x18] sm:$0xff]
        %v2421 = vld [vmem:[%s55 + $0x20] sm:$0xff]
        %v2422 = vld [vmem:[%s55 + $0x28] sm:$0xff]
        %v2423 = vld [vmem:[%s55 + $0x30] sm:$0xff]
        %v2424 = vld [vmem:[%s55 + $0x38] sm:$0xff]
        %v2425 = vld [vmem:[%s57] sm:$0x1]
        %v2427 = vperm.slane %v2425, 0
        %vm2429 = vcmask 523264
        %v2431 = vsel %vm2429, %v2416, 0
        %2433 = vmatpush.msra.mxu0 0.0
        %2434 = vmatpush.msra.mxu0 0.0
        %2435 = vmatpush.msra.mxu0 0.0
        %2436 = vmatpush.msra.mxu0 0.0
        %2437 = vmatpush.msra.mxu0 0.0
        %2438 = vmatpush.msra.mxu0 0.0
        %2439 = vmatpush.msra.mxu0 0.0
        %2440 = vmatpush.msra.mxu0 0.0
        %2441 = vmatpush.msra.mxu0 %v2424
        %2442 = vmatpush.msra.mxu0 %v2423
        %2443 = vmatpush.msra.mxu0 %v2422
        %2444 = vmatpush.msra.mxu0 %v2421
        %2445 = vmatpush.msra.mxu0 %v2420
        %2446 = vmatpush.msra.mxu0 %v2419
        %2447 = vmatpush.msra.mxu0 %v2418
        %2448 = vmatpush.msra.mxu0 %v2417
        %2449 = vmatmul.f32.gmra.mxu0 %v2431
        %v2450 = vpop.f32.mrf.mxu0
        %v2451 = vadd.f32 %v2427, %v2450
        %2452 = vdwg.mxu0
        %v2453 = vadd.f32 %v2384, %v2451
        %v2454 = vld [vmem:[%s59] sm:$0x1]
        %v2455 = vld [vmem:[%s61] sm:$0x1]
        %v2456 = vsel %vm1033, %v2453, 0.0
        %2457 = vadd.xlane.f32.xlu0 %v2456
        %v2458 = vpop.xlane.xlu0 %2457
        %v2459 = vmul.f32 %v2458, %v1411
        %v2460 = vsub.f32 %v2453, %v2459
        %v2461 = vmul.f32 %v2460, %v2460
        %v2462 = vsel %vm1033, %v2461, 0.0
        %2463 = vadd.xlane.f32.xlu0 %v2462
        %v2464 = vpop.xlane.xlu0 %2463
        %v2465 = vmul.f32 %v2464, %v1411
        %v2466 = vadd.f32 %v2465, 1e-05
        %v2467 = vrsqrt.pop %v2466
        %v2468 = vmul.f32 %v2467, %v2466
        %v2469 = vmul.f32 %v2468, %v2467
        %v2470 = vmul.f32 0.5, %v2469
        %v2471 = vsub.f32 1.5, %v2470
        %v2472 = vmul.f32 %v2467, %v2471
        %vm2473 = vweird.f32 %v2466
        %vm2474 = vweird.f32 %v2467
        %vm2475 = vmor %vm2473, %vm2474
        %v2476 = vsel %vm2475, %v2467, %v2472
        %v2477 = vmul.f32 %v2460, %v2476
        %v2479 = vperm.slane %v2454, 0
        %v2481 = vmul.f32 %v2477, %v2479
        %v2483 = vperm.slane %v2455, 0
        %v2485 = vadd.f32 %v2481, %v2483
        %2486 = vst.msk [vmem:[%s1001] sm:$0xff] %vm1033, %v2485
        %s2487 = sand.u32 %s761, 1
        %s2488 = scalar_lea.sflag [#allocation4], %s2487
        %s2489 = sand.u32 %s761, 1
        %s2490 = smul.addr %s2489, 8
        %s2491 = scalar_lea.vmem [#allocation3], %s2490
        // Predicated region
        $region145: #{tpu_custom_call.1} parent=143 // pred_check
          %p2492 = pneg %p771
        $region146: #{tpu_custom_call.1} parent=143 // pred_check_branch
          %2494 = sbr.rel (%p2492) target = $region148
        $region147: #{tpu_custom_call.1} parent=143 // pred_region
          %2496 = vsyncadd %s2488, 0
          %s2497 = smul.addr %s77, 8
          %s2498 = scalar_lea.hbm %s63, %s2497
          %s2500 = sshll.u32 %s2491, 4
          %s2501 = int_to_ptr.vmem [resolvable:$true] %s2500
          %s2502 = sshll.u32 %s2498, 4
          %s2503 = int_to_ptr.hbm [resolvable:$true] %s2502
          %2505 = dma.vmem_to_hbm [thread:$0]  %s2501, 128, %s2503, %s2488
        $region148: #{tpu_custom_call.1} parent=143 // pred_fallthru
          _
      $region144: #{tpu_custom_call.1} parent=5 // pred_fallthru
        _
      %p2506 = scmp.le.s32.totalorder 2, %s72
      // Predicated region
      $region149: #{tpu_custom_call.1} parent=5 // pred_check
        %p2507 = pneg %p2506
      $region150: #{tpu_custom_call.1} parent=5 // pred_check_branch
        %2509 = sbr.rel (%p2507) target = $region152
      $region151: #{tpu_custom_call.1} parent=5 // pred_region
        %s2510 = ssub.s32 %s72, 2
        // Predicated region
        $region153: #{tpu_custom_call.1} parent=151 // pred_check
          %p2511 = pneg %p777
        $region154: #{tpu_custom_call.1} parent=151 // pred_check_branch
          %2513 = sbr.rel (%p2511) target = $region156
        $region155: #{tpu_custom_call.1} parent=151 // pred_region
          %s2514 = sand.u32 %s762, 1
          %s2515 = scalar_lea.sflag [#allocation4], %s2514
          %s2516 = sand.u32 %s762, 1
          %s2517 = smul.addr %s2516, 8
          %s2518 = scalar_lea.vmem [#allocation3], %s2517
          %2520 = dma.done %s2515, 128
        $region156: #{tpu_custom_call.1} parent=151 // pred_fallthru
          _
      $region152: #{tpu_custom_call.1} parent=5 // pred_fallthru
        _
    $region6: #{tpu_custom_call.1} parent=1 // loop_footer
      %s76 = sadd.s32 1, %s72
    $region7: #{tpu_custom_call.1} parent=1 // loop_footer_branch
      %71 = sbr.rel target = $region3
    $region8: #{tpu_custom_call.1} parent=1 // loop_exit
      _
    %2521 = vsyncpa [#allocation4], 1
    %s2522 = scalar_lea.sflag [#allocation4], 1
    %2523 = vsyncpa %s2522, 1

</llo_original>
